<compile_context>
chip_gen: v6e
topology: v6e:2x2x1
jax: 0.10.0
libtpu: 0.0.40
codegen_flags: <defaults>
</compile_context>

<pallas_src>
import functools

import jax
import jax.numpy as jnp
from jax.experimental import pallas as pl
from jax.experimental.pallas import tpu as pltpu


def fused_model_kernel(tok_ref, embed_hbm, w1s_ref, b1s_ref, w2s_ref, b2s_ref,
                       gs_ref, wh_ref, bh_ref, logits_ref, act_ref, sem):
    """Whole model (embedding gather + all layers + lm_head) for one M tile.

    tok_ref:    (M,)        int32 token ids in SMEM (scalar prefetch)
    embed_hbm:  (V, H)      f32 embedding table, left in HBM (pl.ANY)
    w1s_ref:    (L, H, F)   bf16 stacked ffn1 weights (F = 4H)
    b1s_ref:    (L, 1, F)   f32 ffn1 biases
    w2s_ref:    (L, F, H)   bf16 stacked ffn2 weights
    b2s_ref:    (L, 1, H)   f32 ffn2 biases
    gs_ref:     (L, 1, H)   f32 RMSNorm scales
    wh_ref:     (H, Vp)     bf16 lm_head weight (vocab lane-padded to Vp)
    bh_ref:     (1, Vp)     f32 lm_head bias
    logits_ref: (TM, Vp)    f32 output logits tile
    act_ref:    (TM, H)     f32 VMEM scratch: resident activation
    sem:        (TM,)       DMA semaphores for the embedding row gather
    """
    tm = act_ref.shape[0]
    base = pl.program_id(0) * tm

    # --- Fused embedding gather: DMA TM rows HBM -> VMEM scratch ---------
    # Start all row copies, then wait on all of them (overlapped DMAs).
    for r in range(tm):                                   # static unroll (TM small)
        pltpu.make_async_copy(embed_hbm.at[tok_ref[base + r]],
                              act_ref.at[r], sem.at[r]).start()
    for r in range(tm):
        pltpu.make_async_copy(embed_hbm.at[tok_ref[base + r]],
                              act_ref.at[r], sem.at[r]).wait()

    x = act_ref[...]                                      # (TM, H) f32

    # --- All TestModelLayer blocks, statically unrolled ------------------
    num_layers = w1s_ref.shape[0]
    for l in range(num_layers):                           # static unroll (L small)
        # ffn1 + SiLU (bf16 into MXU, f32 accumulate, f32 elementwise)
        h = jnp.dot(x.astype(jnp.bfloat16), w1s_ref[l],
                    preferred_element_type=jnp.float32) + b1s_ref[l]
        h = h * jax.nn.sigmoid(h)
        # ffn2
        y = jnp.dot(h.astype(jnp.bfloat16), w2s_ref[l],
                    preferred_element_type=jnp.float32) + b2s_ref[l]
        # residual + RMSNorm (eps = 1e-6), all in f32
        y = y + x
        ms = jnp.mean(y * y, axis=-1, keepdims=True)
        x = gs_ref[l] * (y * jax.lax.rsqrt(ms + 1e-6))
        # TODO(synk): dropout(p=0.1) omitted (eval/inference identity).

    # --- lm_head projection -> lane-dense padded logits ------------------
    logits_ref[...] = (
        jnp.dot(x.astype(jnp.bfloat16), wh_ref[...],
                preferred_element_type=jnp.float32) + bh_ref[...])


def _choose_tile_m(m):
    for t in (256, 128, 64, 32, 16, 8):
        if m % t == 0:
            return t
    return m


@functools.partial(jax.jit, static_argnames=("vocab_size",))
def causal_lm_forward(token_ids, embed, w1s, b1s, w2s, b2s, gs, wh, bh,
                      *, vocab_size):
    """token_ids: (B, S) int32 -> logits (B, S, vocab_size) float32."""
    B, S = token_ids.shape
    V, H = embed.shape
    M = B * S
    L, _, F = w1s.shape
    Vp = wh.shape[1]

    TM = _choose_tile_m(M)
    grid = (M // TM,)

    cost = pl.CostEstimate(
        flops=2 * M * H * F * 2 * L + 2 * M * H * Vp,
        transcendentals=M * F * L,
        bytes_accessed=(M * H * 4 + w1s.size * 2 + b1s.size * 4
                        + w2s.size * 2 + b2s.size * 4 + gs.size * 4
                        + wh.size * 2 + bh.size * 4 + M * Vp * 4),
    )

    tok_flat = token_ids.reshape(-1).astype(jnp.int32)     # (M,) scalar prefetch

    logits = pl.pallas_call(
        fused_model_kernel,
        out_shape=jax.ShapeDtypeStruct((M, Vp), jnp.float32),
        grid_spec=pltpu.PrefetchScalarGridSpec(
            num_scalar_prefetch=1,
            grid=grid,
            in_specs=[
                pl.BlockSpec(memory_space=pl.ANY),                    # embed (HBM)
                pl.BlockSpec((L, H, F), lambda i, tok: (0, 0, 0)),    # w1 stacked
                pl.BlockSpec((L, 1, F), lambda i, tok: (0, 0, 0)),    # b1
                pl.BlockSpec((L, F, H), lambda i, tok: (0, 0, 0)),    # w2
                pl.BlockSpec((L, 1, H), lambda i, tok: (0, 0, 0)),    # b2
                pl.BlockSpec((L, 1, H), lambda i, tok: (0, 0, 0)),    # rmsnorm scale
                pl.BlockSpec((H, Vp), lambda i, tok: (0, 0)),         # lm_head w
                pl.BlockSpec((1, Vp), lambda i, tok: (0, 0)),         # lm_head b
            ],
            out_specs=pl.BlockSpec((TM, Vp), lambda i, tok: (i, 0)),
            scratch_shapes=[
                pltpu.VMEM((TM, H), jnp.float32),    # resident activation
                pltpu.SemaphoreType.DMA((TM,)),      # row-gather semaphores
            ],
        ),
        compiler_params=pltpu.CompilerParams(
            dimension_semantics=("parallel",)),
        cost_estimate=cost,
    )(tok_flat, embed, w1s, b1s, w2s, b2s, gs, wh, bh)

    # (M, Vp) -> (B, S, Vp) reshape is free; one small slice to real vocab.
    return logits.reshape(B, S, Vp)[..., :vocab_size]


def forward_reference(token_ids, embed, w1s, b1s, w2s, b2s, gs, wh, bh,
                      vocab_size):
    """Pure-JAX reference with the same numerics (bf16 matmuls, f32 accum)."""
    B, S = token_ids.shape
    x = jnp.take(embed, token_ids.reshape(-1), axis=0)
    for l in range(w1s.shape[0]):
        h = jnp.dot(x.astype(jnp.bfloat16), w1s[l],
                    preferred_element_type=jnp.float32) + b1s[l]
        h = h * jax.nn.sigmoid(h)
        y = jnp.dot(h.astype(jnp.bfloat16), w2s[l],
                    preferred_element_type=jnp.float32) + b2s[l]
        y = y + x
        ms = jnp.mean(y * y, axis=-1, keepdims=True)
        x = gs[l] * (y * jax.lax.rsqrt(ms + 1e-6))
    logits = jnp.dot(x.astype(jnp.bfloat16), wh,
                     preferred_element_type=jnp.float32) + bh
    return logits[:, :vocab_size].reshape(B, S, vocab_size)


def init_params(key, vocab_size, hidden_size, num_layers, std=0.02):
    """normal(std=0.02) weights, zero biases, ones RMSNorm scale (matches the
    module's _init_weights).  Matmul weights stored in bf16 (f32 accumulate).
    NOTE: when loading real PyTorch nn.Linear weights, transpose (out,in) ->
    (in,out) for w1/w2/wh."""
    F = 4 * hidden_size
    Vp = ((vocab_size + 127) // 128) * 128      # lane-pad vocab for the kernel
    k_embed, k_w1, k_w2, k_head = jax.random.split(key, 4)

    embed = std * jax.random.normal(k_embed, (vocab_size, hidden_size),
                                    dtype=jnp.float32)
    w1s = (std * jax.random.normal(k_w1, (num_layers, hidden_size, F),
                                   dtype=jnp.float32)).astype(jnp.bfloat16)
    b1s = jnp.zeros((num_layers, 1, F), jnp.float32)
    w2s = (std * jax.random.normal(k_w2, (num_layers, F, hidden_size),
                                   dtype=jnp.float32)).astype(jnp.bfloat16)
    b2s = jnp.zeros((num_layers, 1, hidden_size), jnp.float32)
    gs = jnp.ones((num_layers, 1, hidden_size), jnp.float32)

    wh_real = std * jax.random.normal(k_head, (hidden_size, vocab_size),
                                      dtype=jnp.float32)
    wh = jnp.zeros((hidden_size, Vp), jnp.float32).at[:, :vocab_size].set(
        wh_real).astype(jnp.bfloat16)
    bh = jnp.zeros((1, Vp), jnp.float32)
    return embed, w1s, b1s, w2s, b2s, gs, wh, bh


if __name__ == "__main__":
    # Small shapes consistent with the module: batch=2, seq=8, hidden=128.
    VOCAB = 300
    HIDDEN = 128
    NUM_LAYERS = 2
    BATCH, SEQ = 2, 8

    key = jax.random.PRNGKey(0)
    k_tok, k_param = jax.random.split(key)

    params = init_params(k_param, VOCAB, HIDDEN, NUM_LAYERS)
    token_ids = jax.random.randint(k_tok, (BATCH, SEQ), 0, VOCAB,
                                   dtype=jnp.int32)

    logits = causal_lm_forward(token_ids, *params, vocab_size=VOCAB)
    logits = jax.block_until_ready(logits)
    assert logits.shape == (BATCH, SEQ, VOCAB)
    assert bool(jnp.all(jnp.isfinite(logits)))

    ref = forward_reference(token_ids, *params, VOCAB)
    assert bool(jnp.allclose(logits, ref, rtol=1e-2, atol=1e-2))

    print("KERNEL_OK")
</pallas_src>

<mosaic_0001>
module attributes {stable_mosaic.version = 11 : i64} {
  func.func @fused_model_kernel(%arg0: i32, %arg1: memref<16xi32, #tpu.memory_space<smem>>, %arg2: memref<300x128xf32, #tpu.memory_space<any>>, %arg3: memref<2x128x512xbf16, #tpu.memory_space<vmem>>, %arg4: memref<2x1x512xf32, #tpu.memory_space<vmem>>, %arg5: memref<2x512x128xbf16, #tpu.memory_space<vmem>>, %arg6: memref<2x1x128xf32, #tpu.memory_space<vmem>>, %arg7: memref<2x1x128xf32, #tpu.memory_space<vmem>>, %arg8: memref<128x384xbf16, #tpu.memory_space<vmem>>, %arg9: memref<1x384xf32, #tpu.memory_space<vmem>>, %arg10: memref<16x384xf32, #tpu.memory_space<vmem>>, %arg11: memref<16x128xf32, #tpu.memory_space<vmem>>, %arg12: memref<16x!tpu.dma_semaphore, #tpu.memory_space<semaphore_mem>>) attributes {dimension_semantics = [#tpu.dimension_semantics<parallel>], iteration_bounds = array<i64: 1>, scalar_prefetch = 1 : i64, scratch_operands = 2 : i64, tpu.core_type = #tpu.core_type<tc>, window_params = [{}, {pipeline_mode = #tpu.pipeline_mode<synchronous>, transform_indices = @transform_1, window_bounds = array<i64: 2, 128, 512>}, {pipeline_mode = #tpu.pipeline_mode<synchronous>, transform_indices = @transform_2, window_bounds = array<i64: 2, 1, 512>}, {pipeline_mode = #tpu.pipeline_mode<synchronous>, transform_indices = @transform_3, window_bounds = array<i64: 2, 512, 128>}, {pipeline_mode = #tpu.pipeline_mode<synchronous>, transform_indices = @transform_4, window_bounds = array<i64: 2, 1, 128>}, {pipeline_mode = #tpu.pipeline_mode<synchronous>, transform_indices = @transform_5, window_bounds = array<i64: 2, 1, 128>}, {pipeline_mode = #tpu.pipeline_mode<synchronous>, transform_indices = @transform_6, window_bounds = array<i64: 128, 384>}, {pipeline_mode = #tpu.pipeline_mode<synchronous>, transform_indices = @transform_7, window_bounds = array<i64: 1, 384>}, {transform_indices = @transform_8, window_bounds = array<i64: 16, 384>}]} {
    %c16_i32 = arith.constant 16 : i32
    %0 = arith.muli %arg0, %c16_i32 : i32
    %c0_i32 = arith.constant 0 : i32
    %1 = arith.addi %0, %c0_i32 : i32
    %2 = arith.index_cast %1 : i32 to index
    %3 = memref.load %arg1[%2] : memref<16xi32, #tpu.memory_space<smem>>
    %c0_i32_0 = arith.constant 0 : i32
    %c0_i32_1 = arith.constant 0 : i32
    %c0_i32_2 = arith.constant 0 : i32
    %4 = tpu.memref_slice %arg2[%3, %c0_i32_2] : memref<300x128xf32, #tpu.memory_space<any>> -> memref<1x128xf32, #tpu.memory_space<any>>
    %5 = tpu.memref_squeeze %4 : memref<1x128xf32, #tpu.memory_space<any>> -> memref<128xf32, #tpu.memory_space<any>>
    %c0_i32_3 = arith.constant 0 : i32
    %6 = tpu.memref_slice %arg11[%c0_i32_0, %c0_i32_3] : memref<16x128xf32, #tpu.memory_space<vmem>> -> memref<1x128xf32, #tpu.memory_space<vmem>>
    %7 = tpu.memref_squeeze %6 : memref<1x128xf32, #tpu.memory_space<vmem>> -> memref<128xf32, #tpu.memory_space<vmem>>
    %8 = tpu.memref_slice %arg12[%c0_i32_1] : memref<16x!tpu.dma_semaphore, #tpu.memory_space<semaphore_mem>> -> memref<1x!tpu.dma_semaphore, #tpu.memory_space<semaphore_mem>>
    %9 = tpu.memref_squeeze %8 : memref<1x!tpu.dma_semaphore, #tpu.memory_space<semaphore_mem>> -> memref<!tpu.dma_semaphore, #tpu.memory_space<semaphore_mem>>
    tpu.enqueue_dma source(%5 : memref<128xf32, #tpu.memory_space<any>>) target(%7 : memref<128xf32, #tpu.memory_space<vmem>>) target_semaphore(%9 : memref<!tpu.dma_semaphore, #tpu.memory_space<semaphore_mem>>)
    %c1_i32 = arith.constant 1 : i32
    %10 = arith.addi %0, %c1_i32 : i32
    %11 = arith.index_cast %10 : i32 to index
    %12 = memref.load %arg1[%11] : memref<16xi32, #tpu.memory_space<smem>>
    %c1_i32_4 = arith.constant 1 : i32
    %c1_i32_5 = arith.constant 1 : i32
    %c0_i32_6 = arith.constant 0 : i32
    %13 = tpu.memref_slice %arg2[%12, %c0_i32_6] : memref<300x128xf32, #tpu.memory_space<any>> -> memref<1x128xf32, #tpu.memory_space<any>>
    %14 = tpu.memref_squeeze %13 : memref<1x128xf32, #tpu.memory_space<any>> -> memref<128xf32, #tpu.memory_space<any>>
    %c0_i32_7 = arith.constant 0 : i32
    %15 = tpu.memref_slice %arg11[%c1_i32_4, %c0_i32_7] : memref<16x128xf32, #tpu.memory_space<vmem>> -> memref<1x128xf32, #tpu.memory_space<vmem>>
    %16 = tpu.memref_squeeze %15 : memref<1x128xf32, #tpu.memory_space<vmem>> -> memref<128xf32, #tpu.memory_space<vmem>>
    %17 = tpu.memref_slice %arg12[%c1_i32_5] : memref<16x!tpu.dma_semaphore, #tpu.memory_space<semaphore_mem>> -> memref<1x!tpu.dma_semaphore, #tpu.memory_space<semaphore_mem>>
    %18 = tpu.memref_squeeze %17 : memref<1x!tpu.dma_semaphore, #tpu.memory_space<semaphore_mem>> -> memref<!tpu.dma_semaphore, #tpu.memory_space<semaphore_mem>>
    tpu.enqueue_dma source(%14 : memref<128xf32, #tpu.memory_space<any>>) target(%16 : memref<128xf32, #tpu.memory_space<vmem>>) target_semaphore(%18 : memref<!tpu.dma_semaphore, #tpu.memory_space<semaphore_mem>>)
    %c2_i32 = arith.constant 2 : i32
    %19 = arith.addi %0, %c2_i32 : i32
    %20 = arith.index_cast %19 : i32 to index
    %21 = memref.load %arg1[%20] : memref<16xi32, #tpu.memory_space<smem>>
    %c2_i32_8 = arith.constant 2 : i32
    %c2_i32_9 = arith.constant 2 : i32
    %c0_i32_10 = arith.constant 0 : i32
    %22 = tpu.memref_slice %arg2[%21, %c0_i32_10] : memref<300x128xf32, #tpu.memory_space<any>> -> memref<1x128xf32, #tpu.memory_space<any>>
    %23 = tpu.memref_squeeze %22 : memref<1x128xf32, #tpu.memory_space<any>> -> memref<128xf32, #tpu.memory_space<any>>
    %c0_i32_11 = arith.constant 0 : i32
    %24 = tpu.memref_slice %arg11[%c2_i32_8, %c0_i32_11] : memref<16x128xf32, #tpu.memory_space<vmem>> -> memref<1x128xf32, #tpu.memory_space<vmem>>
    %25 = tpu.memref_squeeze %24 : memref<1x128xf32, #tpu.memory_space<vmem>> -> memref<128xf32, #tpu.memory_space<vmem>>
    %26 = tpu.memref_slice %arg12[%c2_i32_9] : memref<16x!tpu.dma_semaphore, #tpu.memory_space<semaphore_mem>> -> memref<1x!tpu.dma_semaphore, #tpu.memory_space<semaphore_mem>>
    %27 = tpu.memref_squeeze %26 : memref<1x!tpu.dma_semaphore, #tpu.memory_space<semaphore_mem>> -> memref<!tpu.dma_semaphore, #tpu.memory_space<semaphore_mem>>
    tpu.enqueue_dma source(%23 : memref<128xf32, #tpu.memory_space<any>>) target(%25 : memref<128xf32, #tpu.memory_space<vmem>>) target_semaphore(%27 : memref<!tpu.dma_semaphore, #tpu.memory_space<semaphore_mem>>)
    %c3_i32 = arith.constant 3 : i32
    %28 = arith.addi %0, %c3_i32 : i32
    %29 = arith.index_cast %28 : i32 to index
    %30 = memref.load %arg1[%29] : memref<16xi32, #tpu.memory_space<smem>>
    %c3_i32_12 = arith.constant 3 : i32
    %c3_i32_13 = arith.constant 3 : i32
    %c0_i32_14 = arith.constant 0 : i32
    %31 = tpu.memref_slice %arg2[%30, %c0_i32_14] : memref<300x128xf32, #tpu.memory_space<any>> -> memref<1x128xf32, #tpu.memory_space<any>>
    %32 = tpu.memref_squeeze %31 : memref<1x128xf32, #tpu.memory_space<any>> -> memref<128xf32, #tpu.memory_space<any>>
    %c0_i32_15 = arith.constant 0 : i32
    %33 = tpu.memref_slice %arg11[%c3_i32_12, %c0_i32_15] : memref<16x128xf32, #tpu.memory_space<vmem>> -> memref<1x128xf32, #tpu.memory_space<vmem>>
    %34 = tpu.memref_squeeze %33 : memref<1x128xf32, #tpu.memory_space<vmem>> -> memref<128xf32, #tpu.memory_space<vmem>>
    %35 = tpu.memref_slice %arg12[%c3_i32_13] : memref<16x!tpu.dma_semaphore, #tpu.memory_space<semaphore_mem>> -> memref<1x!tpu.dma_semaphore, #tpu.memory_space<semaphore_mem>>
    %36 = tpu.memref_squeeze %35 : memref<1x!tpu.dma_semaphore, #tpu.memory_space<semaphore_mem>> -> memref<!tpu.dma_semaphore, #tpu.memory_space<semaphore_mem>>
    tpu.enqueue_dma source(%32 : memref<128xf32, #tpu.memory_space<any>>) target(%34 : memref<128xf32, #tpu.memory_space<vmem>>) target_semaphore(%36 : memref<!tpu.dma_semaphore, #tpu.memory_space<semaphore_mem>>)
    %c4_i32 = arith.constant 4 : i32
    %37 = arith.addi %0, %c4_i32 : i32
    %38 = arith.index_cast %37 : i32 to index
    %39 = memref.load %arg1[%38] : memref<16xi32, #tpu.memory_space<smem>>
    %c4_i32_16 = arith.constant 4 : i32
    %c4_i32_17 = arith.constant 4 : i32
    %c0_i32_18 = arith.constant 0 : i32
    %40 = tpu.memref_slice %arg2[%39, %c0_i32_18] : memref<300x128xf32, #tpu.memory_space<any>> -> memref<1x128xf32, #tpu.memory_space<any>>
    %41 = tpu.memref_squeeze %40 : memref<1x128xf32, #tpu.memory_space<any>> -> memref<128xf32, #tpu.memory_space<any>>
    %c0_i32_19 = arith.constant 0 : i32
    %42 = tpu.memref_slice %arg11[%c4_i32_16, %c0_i32_19] : memref<16x128xf32, #tpu.memory_space<vmem>> -> memref<1x128xf32, #tpu.memory_space<vmem>>
    %43 = tpu.memref_squeeze %42 : memref<1x128xf32, #tpu.memory_space<vmem>> -> memref<128xf32, #tpu.memory_space<vmem>>
    %44 = tpu.memref_slice %arg12[%c4_i32_17] : memref<16x!tpu.dma_semaphore, #tpu.memory_space<semaphore_mem>> -> memref<1x!tpu.dma_semaphore, #tpu.memory_space<semaphore_mem>>
    %45 = tpu.memref_squeeze %44 : memref<1x!tpu.dma_semaphore, #tpu.memory_space<semaphore_mem>> -> memref<!tpu.dma_semaphore, #tpu.memory_space<semaphore_mem>>
    tpu.enqueue_dma source(%41 : memref<128xf32, #tpu.memory_space<any>>) target(%43 : memref<128xf32, #tpu.memory_space<vmem>>) target_semaphore(%45 : memref<!tpu.dma_semaphore, #tpu.memory_space<semaphore_mem>>)
    %c5_i32 = arith.constant 5 : i32
    %46 = arith.addi %0, %c5_i32 : i32
    %47 = arith.index_cast %46 : i32 to index
    %48 = memref.load %arg1[%47] : memref<16xi32, #tpu.memory_space<smem>>
    %c5_i32_20 = arith.constant 5 : i32
    %c5_i32_21 = arith.constant 5 : i32
    %c0_i32_22 = arith.constant 0 : i32
    %49 = tpu.memref_slice %arg2[%48, %c0_i32_22] : memref<300x128xf32, #tpu.memory_space<any>> -> memref<1x128xf32, #tpu.memory_space<any>>
    %50 = tpu.memref_squeeze %49 : memref<1x128xf32, #tpu.memory_space<any>> -> memref<128xf32, #tpu.memory_space<any>>
    %c0_i32_23 = arith.constant 0 : i32
    %51 = tpu.memref_slice %arg11[%c5_i32_20, %c0_i32_23] : memref<16x128xf32, #tpu.memory_space<vmem>> -> memref<1x128xf32, #tpu.memory_space<vmem>>
    %52 = tpu.memref_squeeze %51 : memref<1x128xf32, #tpu.memory_space<vmem>> -> memref<128xf32, #tpu.memory_space<vmem>>
    %53 = tpu.memref_slice %arg12[%c5_i32_21] : memref<16x!tpu.dma_semaphore, #tpu.memory_space<semaphore_mem>> -> memref<1x!tpu.dma_semaphore, #tpu.memory_space<semaphore_mem>>
    %54 = tpu.memref_squeeze %53 : memref<1x!tpu.dma_semaphore, #tpu.memory_space<semaphore_mem>> -> memref<!tpu.dma_semaphore, #tpu.memory_space<semaphore_mem>>
    tpu.enqueue_dma source(%50 : memref<128xf32, #tpu.memory_space<any>>) target(%52 : memref<128xf32, #tpu.memory_space<vmem>>) target_semaphore(%54 : memref<!tpu.dma_semaphore, #tpu.memory_space<semaphore_mem>>)
    %c6_i32 = arith.constant 6 : i32
    %55 = arith.addi %0, %c6_i32 : i32
    %56 = arith.index_cast %55 : i32 to index
    %57 = memref.load %arg1[%56] : memref<16xi32, #tpu.memory_space<smem>>
    %c6_i32_24 = arith.constant 6 : i32
    %c6_i32_25 = arith.constant 6 : i32
    %c0_i32_26 = arith.constant 0 : i32
    %58 = tpu.memref_slice %arg2[%57, %c0_i32_26] : memref<300x128xf32, #tpu.memory_space<any>> -> memref<1x128xf32, #tpu.memory_space<any>>
    %59 = tpu.memref_squeeze %58 : memref<1x128xf32, #tpu.memory_space<any>> -> memref<128xf32, #tpu.memory_space<any>>
    %c0_i32_27 = arith.constant 0 : i32
    %60 = tpu.memref_slice %arg11[%c6_i32_24, %c0_i32_27] : memref<16x128xf32, #tpu.memory_space<vmem>> -> memref<1x128xf32, #tpu.memory_space<vmem>>
    %61 = tpu.memref_squeeze %60 : memref<1x128xf32, #tpu.memory_space<vmem>> -> memref<128xf32, #tpu.memory_space<vmem>>
    %62 = tpu.memref_slice %arg12[%c6_i32_25] : memref<16x!tpu.dma_semaphore, #tpu.memory_space<semaphore_mem>> -> memref<1x!tpu.dma_semaphore, #tpu.memory_space<semaphore_mem>>
    %63 = tpu.memref_squeeze %62 : memref<1x!tpu.dma_semaphore, #tpu.memory_space<semaphore_mem>> -> memref<!tpu.dma_semaphore, #tpu.memory_space<semaphore_mem>>
    tpu.enqueue_dma source(%59 : memref<128xf32, #tpu.memory_space<any>>) target(%61 : memref<128xf32, #tpu.memory_space<vmem>>) target_semaphore(%63 : memref<!tpu.dma_semaphore, #tpu.memory_space<semaphore_mem>>)
    %c7_i32 = arith.constant 7 : i32
    %64 = arith.addi %0, %c7_i32 : i32
    %65 = arith.index_cast %64 : i32 to index
    %66 = memref.load %arg1[%65] : memref<16xi32, #tpu.memory_space<smem>>
    %c7_i32_28 = arith.constant 7 : i32
    %c7_i32_29 = arith.constant 7 : i32
    %c0_i32_30 = arith.constant 0 : i32
    %67 = tpu.memref_slice %arg2[%66, %c0_i32_30] : memref<300x128xf32, #tpu.memory_space<any>> -> memref<1x128xf32, #tpu.memory_space<any>>
    %68 = tpu.memref_squeeze %67 : memref<1x128xf32, #tpu.memory_space<any>> -> memref<128xf32, #tpu.memory_space<any>>
    %c0_i32_31 = arith.constant 0 : i32
    %69 = tpu.memref_slice %arg11[%c7_i32_28, %c0_i32_31] : memref<16x128xf32, #tpu.memory_space<vmem>> -> memref<1x128xf32, #tpu.memory_space<vmem>>
    %70 = tpu.memref_squeeze %69 : memref<1x128xf32, #tpu.memory_space<vmem>> -> memref<128xf32, #tpu.memory_space<vmem>>
    %71 = tpu.memref_slice %arg12[%c7_i32_29] : memref<16x!tpu.dma_semaphore, #tpu.memory_space<semaphore_mem>> -> memref<1x!tpu.dma_semaphore, #tpu.memory_space<semaphore_mem>>
    %72 = tpu.memref_squeeze %71 : memref<1x!tpu.dma_semaphore, #tpu.memory_space<semaphore_mem>> -> memref<!tpu.dma_semaphore, #tpu.memory_space<semaphore_mem>>
    tpu.enqueue_dma source(%68 : memref<128xf32, #tpu.memory_space<any>>) target(%70 : memref<128xf32, #tpu.memory_space<vmem>>) target_semaphore(%72 : memref<!tpu.dma_semaphore, #tpu.memory_space<semaphore_mem>>)
    %c8_i32 = arith.constant 8 : i32
    %73 = arith.addi %0, %c8_i32 : i32
    %74 = arith.index_cast %73 : i32 to index
    %75 = memref.load %arg1[%74] : memref<16xi32, #tpu.memory_space<smem>>
    %c8_i32_32 = arith.constant 8 : i32
    %c8_i32_33 = arith.constant 8 : i32
    %c0_i32_34 = arith.constant 0 : i32
    %76 = tpu.memref_slice %arg2[%75, %c0_i32_34] : memref<300x128xf32, #tpu.memory_space<any>> -> memref<1x128xf32, #tpu.memory_space<any>>
    %77 = tpu.memref_squeeze %76 : memref<1x128xf32, #tpu.memory_space<any>> -> memref<128xf32, #tpu.memory_space<any>>
    %c0_i32_35 = arith.constant 0 : i32
    %78 = tpu.memref_slice %arg11[%c8_i32_32, %c0_i32_35] : memref<16x128xf32, #tpu.memory_space<vmem>> -> memref<1x128xf32, #tpu.memory_space<vmem>>
    %79 = tpu.memref_squeeze %78 : memref<1x128xf32, #tpu.memory_space<vmem>> -> memref<128xf32, #tpu.memory_space<vmem>>
    %80 = tpu.memref_slice %arg12[%c8_i32_33] : memref<16x!tpu.dma_semaphore, #tpu.memory_space<semaphore_mem>> -> memref<1x!tpu.dma_semaphore, #tpu.memory_space<semaphore_mem>>
    %81 = tpu.memref_squeeze %80 : memref<1x!tpu.dma_semaphore, #tpu.memory_space<semaphore_mem>> -> memref<!tpu.dma_semaphore, #tpu.memory_space<semaphore_mem>>
    tpu.enqueue_dma source(%77 : memref<128xf32, #tpu.memory_space<any>>) target(%79 : memref<128xf32, #tpu.memory_space<vmem>>) target_semaphore(%81 : memref<!tpu.dma_semaphore, #tpu.memory_space<semaphore_mem>>)
    %c9_i32 = arith.constant 9 : i32
    %82 = arith.addi %0, %c9_i32 : i32
    %83 = arith.index_cast %82 : i32 to index
    %84 = memref.load %arg1[%83] : memref<16xi32, #tpu.memory_space<smem>>
    %c9_i32_36 = arith.constant 9 : i32
    %c9_i32_37 = arith.constant 9 : i32
    %c0_i32_38 = arith.constant 0 : i32
    %85 = tpu.memref_slice %arg2[%84, %c0_i32_38] : memref<300x128xf32, #tpu.memory_space<any>> -> memref<1x128xf32, #tpu.memory_space<any>>
    %86 = tpu.memref_squeeze %85 : memref<1x128xf32, #tpu.memory_space<any>> -> memref<128xf32, #tpu.memory_space<any>>
    %c0_i32_39 = arith.constant 0 : i32
    %87 = tpu.memref_slice %arg11[%c9_i32_36, %c0_i32_39] : memref<16x128xf32, #tpu.memory_space<vmem>> -> memref<1x128xf32, #tpu.memory_space<vmem>>
    %88 = tpu.memref_squeeze %87 : memref<1x128xf32, #tpu.memory_space<vmem>> -> memref<128xf32, #tpu.memory_space<vmem>>
    %89 = tpu.memref_slice %arg12[%c9_i32_37] : memref<16x!tpu.dma_semaphore, #tpu.memory_space<semaphore_mem>> -> memref<1x!tpu.dma_semaphore, #tpu.memory_space<semaphore_mem>>
    %90 = tpu.memref_squeeze %89 : memref<1x!tpu.dma_semaphore, #tpu.memory_space<semaphore_mem>> -> memref<!tpu.dma_semaphore, #tpu.memory_space<semaphore_mem>>
    tpu.enqueue_dma source(%86 : memref<128xf32, #tpu.memory_space<any>>) target(%88 : memref<128xf32, #tpu.memory_space<vmem>>) target_semaphore(%90 : memref<!tpu.dma_semaphore, #tpu.memory_space<semaphore_mem>>)
    %c10_i32 = arith.constant 10 : i32
    %91 = arith.addi %0, %c10_i32 : i32
    %92 = arith.index_cast %91 : i32 to index
    %93 = memref.load %arg1[%92] : memref<16xi32, #tpu.memory_space<smem>>
    %c10_i32_40 = arith.constant 10 : i32
    %c10_i32_41 = arith.constant 10 : i32
    %c0_i32_42 = arith.constant 0 : i32
    %94 = tpu.memref_slice %arg2[%93, %c0_i32_42] : memref<300x128xf32, #tpu.memory_space<any>> -> memref<1x128xf32, #tpu.memory_space<any>>
    %95 = tpu.memref_squeeze %94 : memref<1x128xf32, #tpu.memory_space<any>> -> memref<128xf32, #tpu.memory_space<any>>
    %c0_i32_43 = arith.constant 0 : i32
    %96 = tpu.memref_slice %arg11[%c10_i32_40, %c0_i32_43] : memref<16x128xf32, #tpu.memory_space<vmem>> -> memref<1x128xf32, #tpu.memory_space<vmem>>
    %97 = tpu.memref_squeeze %96 : memref<1x128xf32, #tpu.memory_space<vmem>> -> memref<128xf32, #tpu.memory_space<vmem>>
    %98 = tpu.memref_slice %arg12[%c10_i32_41] : memref<16x!tpu.dma_semaphore, #tpu.memory_space<semaphore_mem>> -> memref<1x!tpu.dma_semaphore, #tpu.memory_space<semaphore_mem>>
    %99 = tpu.memref_squeeze %98 : memref<1x!tpu.dma_semaphore, #tpu.memory_space<semaphore_mem>> -> memref<!tpu.dma_semaphore, #tpu.memory_space<semaphore_mem>>
    tpu.enqueue_dma source(%95 : memref<128xf32, #tpu.memory_space<any>>) target(%97 : memref<128xf32, #tpu.memory_space<vmem>>) target_semaphore(%99 : memref<!tpu.dma_semaphore, #tpu.memory_space<semaphore_mem>>)
    %c11_i32 = arith.constant 11 : i32
    %100 = arith.addi %0, %c11_i32 : i32
    %101 = arith.index_cast %100 : i32 to index
    %102 = memref.load %arg1[%101] : memref<16xi32, #tpu.memory_space<smem>>
    %c11_i32_44 = arith.constant 11 : i32
    %c11_i32_45 = arith.constant 11 : i32
    %c0_i32_46 = arith.constant 0 : i32
    %103 = tpu.memref_slice %arg2[%102, %c0_i32_46] : memref<300x128xf32, #tpu.memory_space<any>> -> memref<1x128xf32, #tpu.memory_space<any>>
    %104 = tpu.memref_squeeze %103 : memref<1x128xf32, #tpu.memory_space<any>> -> memref<128xf32, #tpu.memory_space<any>>
    %c0_i32_47 = arith.constant 0 : i32
    %105 = tpu.memref_slice %arg11[%c11_i32_44, %c0_i32_47] : memref<16x128xf32, #tpu.memory_space<vmem>> -> memref<1x128xf32, #tpu.memory_space<vmem>>
    %106 = tpu.memref_squeeze %105 : memref<1x128xf32, #tpu.memory_space<vmem>> -> memref<128xf32, #tpu.memory_space<vmem>>
    %107 = tpu.memref_slice %arg12[%c11_i32_45] : memref<16x!tpu.dma_semaphore, #tpu.memory_space<semaphore_mem>> -> memref<1x!tpu.dma_semaphore, #tpu.memory_space<semaphore_mem>>
    %108 = tpu.memref_squeeze %107 : memref<1x!tpu.dma_semaphore, #tpu.memory_space<semaphore_mem>> -> memref<!tpu.dma_semaphore, #tpu.memory_space<semaphore_mem>>
    tpu.enqueue_dma source(%104 : memref<128xf32, #tpu.memory_space<any>>) target(%106 : memref<128xf32, #tpu.memory_space<vmem>>) target_semaphore(%108 : memref<!tpu.dma_semaphore, #tpu.memory_space<semaphore_mem>>)
    %c12_i32 = arith.constant 12 : i32
    %109 = arith.addi %0, %c12_i32 : i32
    %110 = arith.index_cast %109 : i32 to index
    %111 = memref.load %arg1[%110] : memref<16xi32, #tpu.memory_space<smem>>
    %c12_i32_48 = arith.constant 12 : i32
    %c12_i32_49 = arith.constant 12 : i32
    %c0_i32_50 = arith.constant 0 : i32
    %112 = tpu.memref_slice %arg2[%111, %c0_i32_50] : memref<300x128xf32, #tpu.memory_space<any>> -> memref<1x128xf32, #tpu.memory_space<any>>
    %113 = tpu.memref_squeeze %112 : memref<1x128xf32, #tpu.memory_space<any>> -> memref<128xf32, #tpu.memory_space<any>>
    %c0_i32_51 = arith.constant 0 : i32
    %114 = tpu.memref_slice %arg11[%c12_i32_48, %c0_i32_51] : memref<16x128xf32, #tpu.memory_space<vmem>> -> memref<1x128xf32, #tpu.memory_space<vmem>>
    %115 = tpu.memref_squeeze %114 : memref<1x128xf32, #tpu.memory_space<vmem>> -> memref<128xf32, #tpu.memory_space<vmem>>
    %116 = tpu.memref_slice %arg12[%c12_i32_49] : memref<16x!tpu.dma_semaphore, #tpu.memory_space<semaphore_mem>> -> memref<1x!tpu.dma_semaphore, #tpu.memory_space<semaphore_mem>>
    %117 = tpu.memref_squeeze %116 : memref<1x!tpu.dma_semaphore, #tpu.memory_space<semaphore_mem>> -> memref<!tpu.dma_semaphore, #tpu.memory_space<semaphore_mem>>
    tpu.enqueue_dma source(%113 : memref<128xf32, #tpu.memory_space<any>>) target(%115 : memref<128xf32, #tpu.memory_space<vmem>>) target_semaphore(%117 : memref<!tpu.dma_semaphore, #tpu.memory_space<semaphore_mem>>)
    %c13_i32 = arith.constant 13 : i32
    %118 = arith.addi %0, %c13_i32 : i32
    %119 = arith.index_cast %118 : i32 to index
    %120 = memref.load %arg1[%119] : memref<16xi32, #tpu.memory_space<smem>>
    %c13_i32_52 = arith.constant 13 : i32
    %c13_i32_53 = arith.constant 13 : i32
    %c0_i32_54 = arith.constant 0 : i32
    %121 = tpu.memref_slice %arg2[%120, %c0_i32_54] : memref<300x128xf32, #tpu.memory_space<any>> -> memref<1x128xf32, #tpu.memory_space<any>>
    %122 = tpu.memref_squeeze %121 : memref<1x128xf32, #tpu.memory_space<any>> -> memref<128xf32, #tpu.memory_space<any>>
    %c0_i32_55 = arith.constant 0 : i32
    %123 = tpu.memref_slice %arg11[%c13_i32_52, %c0_i32_55] : memref<16x128xf32, #tpu.memory_space<vmem>> -> memref<1x128xf32, #tpu.memory_space<vmem>>
    %124 = tpu.memref_squeeze %123 : memref<1x128xf32, #tpu.memory_space<vmem>> -> memref<128xf32, #tpu.memory_space<vmem>>
    %125 = tpu.memref_slice %arg12[%c13_i32_53] : memref<16x!tpu.dma_semaphore, #tpu.memory_space<semaphore_mem>> -> memref<1x!tpu.dma_semaphore, #tpu.memory_space<semaphore_mem>>
    %126 = tpu.memref_squeeze %125 : memref<1x!tpu.dma_semaphore, #tpu.memory_space<semaphore_mem>> -> memref<!tpu.dma_semaphore, #tpu.memory_space<semaphore_mem>>
    tpu.enqueue_dma source(%122 : memref<128xf32, #tpu.memory_space<any>>) target(%124 : memref<128xf32, #tpu.memory_space<vmem>>) target_semaphore(%126 : memref<!tpu.dma_semaphore, #tpu.memory_space<semaphore_mem>>)
    %c14_i32 = arith.constant 14 : i32
    %127 = arith.addi %0, %c14_i32 : i32
    %128 = arith.index_cast %127 : i32 to index
    %129 = memref.load %arg1[%128] : memref<16xi32, #tpu.memory_space<smem>>
    %c14_i32_56 = arith.constant 14 : i32
    %c14_i32_57 = arith.constant 14 : i32
    %c0_i32_58 = arith.constant 0 : i32
    %130 = tpu.memref_slice %arg2[%129, %c0_i32_58] : memref<300x128xf32, #tpu.memory_space<any>> -> memref<1x128xf32, #tpu.memory_space<any>>
    %131 = tpu.memref_squeeze %130 : memref<1x128xf32, #tpu.memory_space<any>> -> memref<128xf32, #tpu.memory_space<any>>
    %c0_i32_59 = arith.constant 0 : i32
    %132 = tpu.memref_slice %arg11[%c14_i32_56, %c0_i32_59] : memref<16x128xf32, #tpu.memory_space<vmem>> -> memref<1x128xf32, #tpu.memory_space<vmem>>
    %133 = tpu.memref_squeeze %132 : memref<1x128xf32, #tpu.memory_space<vmem>> -> memref<128xf32, #tpu.memory_space<vmem>>
    %134 = tpu.memref_slice %arg12[%c14_i32_57] : memref<16x!tpu.dma_semaphore, #tpu.memory_space<semaphore_mem>> -> memref<1x!tpu.dma_semaphore, #tpu.memory_space<semaphore_mem>>
    %135 = tpu.memref_squeeze %134 : memref<1x!tpu.dma_semaphore, #tpu.memory_space<semaphore_mem>> -> memref<!tpu.dma_semaphore, #tpu.memory_space<semaphore_mem>>
    tpu.enqueue_dma source(%131 : memref<128xf32, #tpu.memory_space<any>>) target(%133 : memref<128xf32, #tpu.memory_space<vmem>>) target_semaphore(%135 : memref<!tpu.dma_semaphore, #tpu.memory_space<semaphore_mem>>)
    %c15_i32 = arith.constant 15 : i32
    %136 = arith.addi %0, %c15_i32 : i32
    %137 = arith.index_cast %136 : i32 to index
    %138 = memref.load %arg1[%137] : memref<16xi32, #tpu.memory_space<smem>>
    %c15_i32_60 = arith.constant 15 : i32
    %c15_i32_61 = arith.constant 15 : i32
    %c0_i32_62 = arith.constant 0 : i32
    %139 = tpu.memref_slice %arg2[%138, %c0_i32_62] : memref<300x128xf32, #tpu.memory_space<any>> -> memref<1x128xf32, #tpu.memory_space<any>>
    %140 = tpu.memref_squeeze %139 : memref<1x128xf32, #tpu.memory_space<any>> -> memref<128xf32, #tpu.memory_space<any>>
    %c0_i32_63 = arith.constant 0 : i32
    %141 = tpu.memref_slice %arg11[%c15_i32_60, %c0_i32_63] : memref<16x128xf32, #tpu.memory_space<vmem>> -> memref<1x128xf32, #tpu.memory_space<vmem>>
    %142 = tpu.memref_squeeze %141 : memref<1x128xf32, #tpu.memory_space<vmem>> -> memref<128xf32, #tpu.memory_space<vmem>>
    %143 = tpu.memref_slice %arg12[%c15_i32_61] : memref<16x!tpu.dma_semaphore, #tpu.memory_space<semaphore_mem>> -> memref<1x!tpu.dma_semaphore, #tpu.memory_space<semaphore_mem>>
    %144 = tpu.memref_squeeze %143 : memref<1x!tpu.dma_semaphore, #tpu.memory_space<semaphore_mem>> -> memref<!tpu.dma_semaphore, #tpu.memory_space<semaphore_mem>>
    tpu.enqueue_dma source(%140 : memref<128xf32, #tpu.memory_space<any>>) target(%142 : memref<128xf32, #tpu.memory_space<vmem>>) target_semaphore(%144 : memref<!tpu.dma_semaphore, #tpu.memory_space<semaphore_mem>>)
    %c0_i32_64 = arith.constant 0 : i32
    %145 = arith.addi %0, %c0_i32_64 : i32
    %146 = arith.index_cast %145 : i32 to index
    %147 = memref.load %arg1[%146] : memref<16xi32, #tpu.memory_space<smem>>
    %c0_i32_65 = arith.constant 0 : i32
    %c0_i32_66 = arith.constant 0 : i32
    %c0_i32_67 = arith.constant 0 : i32
    %148 = tpu.memref_slice %arg2[%147, %c0_i32_67] : memref<300x128xf32, #tpu.memory_space<any>> -> memref<1x128xf32, #tpu.memory_space<any>>
    %149 = tpu.memref_squeeze %148 : memref<1x128xf32, #tpu.memory_space<any>> -> memref<128xf32, #tpu.memory_space<any>>
    %c0_i32_68 = arith.constant 0 : i32
    %150 = tpu.memref_slice %arg11[%c0_i32_65, %c0_i32_68] : memref<16x128xf32, #tpu.memory_space<vmem>> -> memref<1x128xf32, #tpu.memory_space<vmem>>
    %151 = tpu.memref_squeeze %150 : memref<1x128xf32, #tpu.memory_space<vmem>> -> memref<128xf32, #tpu.memory_space<vmem>>
    %152 = tpu.memref_slice %arg12[%c0_i32_66] : memref<16x!tpu.dma_semaphore, #tpu.memory_space<semaphore_mem>> -> memref<1x!tpu.dma_semaphore, #tpu.memory_space<semaphore_mem>>
    %153 = tpu.memref_squeeze %152 : memref<1x!tpu.dma_semaphore, #tpu.memory_space<semaphore_mem>> -> memref<!tpu.dma_semaphore, #tpu.memory_space<semaphore_mem>>
    tpu.wait_dma2 semaphore(%153 : memref<!tpu.dma_semaphore, #tpu.memory_space<semaphore_mem>>) src(%149 : memref<128xf32, #tpu.memory_space<any>>) dst(%151 : memref<128xf32, #tpu.memory_space<vmem>>)
    %c1_i32_69 = arith.constant 1 : i32
    %154 = arith.addi %0, %c1_i32_69 : i32
    %155 = arith.index_cast %154 : i32 to index
    %156 = memref.load %arg1[%155] : memref<16xi32, #tpu.memory_space<smem>>
    %c1_i32_70 = arith.constant 1 : i32
    %c1_i32_71 = arith.constant 1 : i32
    %c0_i32_72 = arith.constant 0 : i32
    %157 = tpu.memref_slice %arg2[%156, %c0_i32_72] : memref<300x128xf32, #tpu.memory_space<any>> -> memref<1x128xf32, #tpu.memory_space<any>>
    %158 = tpu.memref_squeeze %157 : memref<1x128xf32, #tpu.memory_space<any>> -> memref<128xf32, #tpu.memory_space<any>>
    %c0_i32_73 = arith.constant 0 : i32
    %159 = tpu.memref_slice %arg11[%c1_i32_70, %c0_i32_73] : memref<16x128xf32, #tpu.memory_space<vmem>> -> memref<1x128xf32, #tpu.memory_space<vmem>>
    %160 = tpu.memref_squeeze %159 : memref<1x128xf32, #tpu.memory_space<vmem>> -> memref<128xf32, #tpu.memory_space<vmem>>
    %161 = tpu.memref_slice %arg12[%c1_i32_71] : memref<16x!tpu.dma_semaphore, #tpu.memory_space<semaphore_mem>> -> memref<1x!tpu.dma_semaphore, #tpu.memory_space<semaphore_mem>>
    %162 = tpu.memref_squeeze %161 : memref<1x!tpu.dma_semaphore, #tpu.memory_space<semaphore_mem>> -> memref<!tpu.dma_semaphore, #tpu.memory_space<semaphore_mem>>
    tpu.wait_dma2 semaphore(%162 : memref<!tpu.dma_semaphore, #tpu.memory_space<semaphore_mem>>) src(%158 : memref<128xf32, #tpu.memory_space<any>>) dst(%160 : memref<128xf32, #tpu.memory_space<vmem>>)
    %c2_i32_74 = arith.constant 2 : i32
    %163 = arith.addi %0, %c2_i32_74 : i32
    %164 = arith.index_cast %163 : i32 to index
    %165 = memref.load %arg1[%164] : memref<16xi32, #tpu.memory_space<smem>>
    %c2_i32_75 = arith.constant 2 : i32
    %c2_i32_76 = arith.constant 2 : i32
    %c0_i32_77 = arith.constant 0 : i32
    %166 = tpu.memref_slice %arg2[%165, %c0_i32_77] : memref<300x128xf32, #tpu.memory_space<any>> -> memref<1x128xf32, #tpu.memory_space<any>>
    %167 = tpu.memref_squeeze %166 : memref<1x128xf32, #tpu.memory_space<any>> -> memref<128xf32, #tpu.memory_space<any>>
    %c0_i32_78 = arith.constant 0 : i32
    %168 = tpu.memref_slice %arg11[%c2_i32_75, %c0_i32_78] : memref<16x128xf32, #tpu.memory_space<vmem>> -> memref<1x128xf32, #tpu.memory_space<vmem>>
    %169 = tpu.memref_squeeze %168 : memref<1x128xf32, #tpu.memory_space<vmem>> -> memref<128xf32, #tpu.memory_space<vmem>>
    %170 = tpu.memref_slice %arg12[%c2_i32_76] : memref<16x!tpu.dma_semaphore, #tpu.memory_space<semaphore_mem>> -> memref<1x!tpu.dma_semaphore, #tpu.memory_space<semaphore_mem>>
    %171 = tpu.memref_squeeze %170 : memref<1x!tpu.dma_semaphore, #tpu.memory_space<semaphore_mem>> -> memref<!tpu.dma_semaphore, #tpu.memory_space<semaphore_mem>>
    tpu.wait_dma2 semaphore(%171 : memref<!tpu.dma_semaphore, #tpu.memory_space<semaphore_mem>>) src(%167 : memref<128xf32, #tpu.memory_space<any>>) dst(%169 : memref<128xf32, #tpu.memory_space<vmem>>)
    %c3_i32_79 = arith.constant 3 : i32
    %172 = arith.addi %0, %c3_i32_79 : i32
    %173 = arith.index_cast %172 : i32 to index
    %174 = memref.load %arg1[%173] : memref<16xi32, #tpu.memory_space<smem>>
    %c3_i32_80 = arith.constant 3 : i32
    %c3_i32_81 = arith.constant 3 : i32
    %c0_i32_82 = arith.constant 0 : i32
    %175 = tpu.memref_slice %arg2[%174, %c0_i32_82] : memref<300x128xf32, #tpu.memory_space<any>> -> memref<1x128xf32, #tpu.memory_space<any>>
    %176 = tpu.memref_squeeze %175 : memref<1x128xf32, #tpu.memory_space<any>> -> memref<128xf32, #tpu.memory_space<any>>
    %c0_i32_83 = arith.constant 0 : i32
    %177 = tpu.memref_slice %arg11[%c3_i32_80, %c0_i32_83] : memref<16x128xf32, #tpu.memory_space<vmem>> -> memref<1x128xf32, #tpu.memory_space<vmem>>
    %178 = tpu.memref_squeeze %177 : memref<1x128xf32, #tpu.memory_space<vmem>> -> memref<128xf32, #tpu.memory_space<vmem>>
    %179 = tpu.memref_slice %arg12[%c3_i32_81] : memref<16x!tpu.dma_semaphore, #tpu.memory_space<semaphore_mem>> -> memref<1x!tpu.dma_semaphore, #tpu.memory_space<semaphore_mem>>
    %180 = tpu.memref_squeeze %179 : memref<1x!tpu.dma_semaphore, #tpu.memory_space<semaphore_mem>> -> memref<!tpu.dma_semaphore, #tpu.memory_space<semaphore_mem>>
    tpu.wait_dma2 semaphore(%180 : memref<!tpu.dma_semaphore, #tpu.memory_space<semaphore_mem>>) src(%176 : memref<128xf32, #tpu.memory_space<any>>) dst(%178 : memref<128xf32, #tpu.memory_space<vmem>>)
    %c4_i32_84 = arith.constant 4 : i32
    %181 = arith.addi %0, %c4_i32_84 : i32
    %182 = arith.index_cast %181 : i32 to index
    %183 = memref.load %arg1[%182] : memref<16xi32, #tpu.memory_space<smem>>
    %c4_i32_85 = arith.constant 4 : i32
    %c4_i32_86 = arith.constant 4 : i32
    %c0_i32_87 = arith.constant 0 : i32
    %184 = tpu.memref_slice %arg2[%183, %c0_i32_87] : memref<300x128xf32, #tpu.memory_space<any>> -> memref<1x128xf32, #tpu.memory_space<any>>
    %185 = tpu.memref_squeeze %184 : memref<1x128xf32, #tpu.memory_space<any>> -> memref<128xf32, #tpu.memory_space<any>>
    %c0_i32_88 = arith.constant 0 : i32
    %186 = tpu.memref_slice %arg11[%c4_i32_85, %c0_i32_88] : memref<16x128xf32, #tpu.memory_space<vmem>> -> memref<1x128xf32, #tpu.memory_space<vmem>>
    %187 = tpu.memref_squeeze %186 : memref<1x128xf32, #tpu.memory_space<vmem>> -> memref<128xf32, #tpu.memory_space<vmem>>
    %188 = tpu.memref_slice %arg12[%c4_i32_86] : memref<16x!tpu.dma_semaphore, #tpu.memory_space<semaphore_mem>> -> memref<1x!tpu.dma_semaphore, #tpu.memory_space<semaphore_mem>>
    %189 = tpu.memref_squeeze %188 : memref<1x!tpu.dma_semaphore, #tpu.memory_space<semaphore_mem>> -> memref<!tpu.dma_semaphore, #tpu.memory_space<semaphore_mem>>
    tpu.wait_dma2 semaphore(%189 : memref<!tpu.dma_semaphore, #tpu.memory_space<semaphore_mem>>) src(%185 : memref<128xf32, #tpu.memory_space<any>>) dst(%187 : memref<128xf32, #tpu.memory_space<vmem>>)
    %c5_i32_89 = arith.constant 5 : i32
    %190 = arith.addi %0, %c5_i32_89 : i32
    %191 = arith.index_cast %190 : i32 to index
    %192 = memref.load %arg1[%191] : memref<16xi32, #tpu.memory_space<smem>>
    %c5_i32_90 = arith.constant 5 : i32
    %c5_i32_91 = arith.constant 5 : i32
    %c0_i32_92 = arith.constant 0 : i32
    %193 = tpu.memref_slice %arg2[%192, %c0_i32_92] : memref<300x128xf32, #tpu.memory_space<any>> -> memref<1x128xf32, #tpu.memory_space<any>>
    %194 = tpu.memref_squeeze %193 : memref<1x128xf32, #tpu.memory_space<any>> -> memref<128xf32, #tpu.memory_space<any>>
    %c0_i32_93 = arith.constant 0 : i32
    %195 = tpu.memref_slice %arg11[%c5_i32_90, %c0_i32_93] : memref<16x128xf32, #tpu.memory_space<vmem>> -> memref<1x128xf32, #tpu.memory_space<vmem>>
    %196 = tpu.memref_squeeze %195 : memref<1x128xf32, #tpu.memory_space<vmem>> -> memref<128xf32, #tpu.memory_space<vmem>>
    %197 = tpu.memref_slice %arg12[%c5_i32_91] : memref<16x!tpu.dma_semaphore, #tpu.memory_space<semaphore_mem>> -> memref<1x!tpu.dma_semaphore, #tpu.memory_space<semaphore_mem>>
    %198 = tpu.memref_squeeze %197 : memref<1x!tpu.dma_semaphore, #tpu.memory_space<semaphore_mem>> -> memref<!tpu.dma_semaphore, #tpu.memory_space<semaphore_mem>>
    tpu.wait_dma2 semaphore(%198 : memref<!tpu.dma_semaphore, #tpu.memory_space<semaphore_mem>>) src(%194 : memref<128xf32, #tpu.memory_space<any>>) dst(%196 : memref<128xf32, #tpu.memory_space<vmem>>)
    %c6_i32_94 = arith.constant 6 : i32
    %199 = arith.addi %0, %c6_i32_94 : i32
    %200 = arith.index_cast %199 : i32 to index
    %201 = memref.load %arg1[%200] : memref<16xi32, #tpu.memory_space<smem>>
    %c6_i32_95 = arith.constant 6 : i32
    %c6_i32_96 = arith.constant 6 : i32
    %c0_i32_97 = arith.constant 0 : i32
    %202 = tpu.memref_slice %arg2[%201, %c0_i32_97] : memref<300x128xf32, #tpu.memory_space<any>> -> memref<1x128xf32, #tpu.memory_space<any>>
    %203 = tpu.memref_squeeze %202 : memref<1x128xf32, #tpu.memory_space<any>> -> memref<128xf32, #tpu.memory_space<any>>
    %c0_i32_98 = arith.constant 0 : i32
    %204 = tpu.memref_slice %arg11[%c6_i32_95, %c0_i32_98] : memref<16x128xf32, #tpu.memory_space<vmem>> -> memref<1x128xf32, #tpu.memory_space<vmem>>
    %205 = tpu.memref_squeeze %204 : memref<1x128xf32, #tpu.memory_space<vmem>> -> memref<128xf32, #tpu.memory_space<vmem>>
    %206 = tpu.memref_slice %arg12[%c6_i32_96] : memref<16x!tpu.dma_semaphore, #tpu.memory_space<semaphore_mem>> -> memref<1x!tpu.dma_semaphore, #tpu.memory_space<semaphore_mem>>
    %207 = tpu.memref_squeeze %206 : memref<1x!tpu.dma_semaphore, #tpu.memory_space<semaphore_mem>> -> memref<!tpu.dma_semaphore, #tpu.memory_space<semaphore_mem>>
    tpu.wait_dma2 semaphore(%207 : memref<!tpu.dma_semaphore, #tpu.memory_space<semaphore_mem>>) src(%203 : memref<128xf32, #tpu.memory_space<any>>) dst(%205 : memref<128xf32, #tpu.memory_space<vmem>>)
    %c7_i32_99 = arith.constant 7 : i32
    %208 = arith.addi %0, %c7_i32_99 : i32
    %209 = arith.index_cast %208 : i32 to index
    %210 = memref.load %arg1[%209] : memref<16xi32, #tpu.memory_space<smem>>
    %c7_i32_100 = arith.constant 7 : i32
    %c7_i32_101 = arith.constant 7 : i32
    %c0_i32_102 = arith.constant 0 : i32
    %211 = tpu.memref_slice %arg2[%210, %c0_i32_102] : memref<300x128xf32, #tpu.memory_space<any>> -> memref<1x128xf32, #tpu.memory_space<any>>
    %212 = tpu.memref_squeeze %211 : memref<1x128xf32, #tpu.memory_space<any>> -> memref<128xf32, #tpu.memory_space<any>>
    %c0_i32_103 = arith.constant 0 : i32
    %213 = tpu.memref_slice %arg11[%c7_i32_100, %c0_i32_103] : memref<16x128xf32, #tpu.memory_space<vmem>> -> memref<1x128xf32, #tpu.memory_space<vmem>>
    %214 = tpu.memref_squeeze %213 : memref<1x128xf32, #tpu.memory_space<vmem>> -> memref<128xf32, #tpu.memory_space<vmem>>
    %215 = tpu.memref_slice %arg12[%c7_i32_101] : memref<16x!tpu.dma_semaphore, #tpu.memory_space<semaphore_mem>> -> memref<1x!tpu.dma_semaphore, #tpu.memory_space<semaphore_mem>>
    %216 = tpu.memref_squeeze %215 : memref<1x!tpu.dma_semaphore, #tpu.memory_space<semaphore_mem>> -> memref<!tpu.dma_semaphore, #tpu.memory_space<semaphore_mem>>
    tpu.wait_dma2 semaphore(%216 : memref<!tpu.dma_semaphore, #tpu.memory_space<semaphore_mem>>) src(%212 : memref<128xf32, #tpu.memory_space<any>>) dst(%214 : memref<128xf32, #tpu.memory_space<vmem>>)
    %c8_i32_104 = arith.constant 8 : i32
    %217 = arith.addi %0, %c8_i32_104 : i32
    %218 = arith.index_cast %217 : i32 to index
    %219 = memref.load %arg1[%218] : memref<16xi32, #tpu.memory_space<smem>>
    %c8_i32_105 = arith.constant 8 : i32
    %c8_i32_106 = arith.constant 8 : i32
    %c0_i32_107 = arith.constant 0 : i32
    %220 = tpu.memref_slice %arg2[%219, %c0_i32_107] : memref<300x128xf32, #tpu.memory_space<any>> -> memref<1x128xf32, #tpu.memory_space<any>>
    %221 = tpu.memref_squeeze %220 : memref<1x128xf32, #tpu.memory_space<any>> -> memref<128xf32, #tpu.memory_space<any>>
    %c0_i32_108 = arith.constant 0 : i32
    %222 = tpu.memref_slice %arg11[%c8_i32_105, %c0_i32_108] : memref<16x128xf32, #tpu.memory_space<vmem>> -> memref<1x128xf32, #tpu.memory_space<vmem>>
    %223 = tpu.memref_squeeze %222 : memref<1x128xf32, #tpu.memory_space<vmem>> -> memref<128xf32, #tpu.memory_space<vmem>>
    %224 = tpu.memref_slice %arg12[%c8_i32_106] : memref<16x!tpu.dma_semaphore, #tpu.memory_space<semaphore_mem>> -> memref<1x!tpu.dma_semaphore, #tpu.memory_space<semaphore_mem>>
    %225 = tpu.memref_squeeze %224 : memref<1x!tpu.dma_semaphore, #tpu.memory_space<semaphore_mem>> -> memref<!tpu.dma_semaphore, #tpu.memory_space<semaphore_mem>>
    tpu.wait_dma2 semaphore(%225 : memref<!tpu.dma_semaphore, #tpu.memory_space<semaphore_mem>>) src(%221 : memref<128xf32, #tpu.memory_space<any>>) dst(%223 : memref<128xf32, #tpu.memory_space<vmem>>)
    %c9_i32_109 = arith.constant 9 : i32
    %226 = arith.addi %0, %c9_i32_109 : i32
    %227 = arith.index_cast %226 : i32 to index
    %228 = memref.load %arg1[%227] : memref<16xi32, #tpu.memory_space<smem>>
    %c9_i32_110 = arith.constant 9 : i32
    %c9_i32_111 = arith.constant 9 : i32
    %c0_i32_112 = arith.constant 0 : i32
    %229 = tpu.memref_slice %arg2[%228, %c0_i32_112] : memref<300x128xf32, #tpu.memory_space<any>> -> memref<1x128xf32, #tpu.memory_space<any>>
    %230 = tpu.memref_squeeze %229 : memref<1x128xf32, #tpu.memory_space<any>> -> memref<128xf32, #tpu.memory_space<any>>
    %c0_i32_113 = arith.constant 0 : i32
    %231 = tpu.memref_slice %arg11[%c9_i32_110, %c0_i32_113] : memref<16x128xf32, #tpu.memory_space<vmem>> -> memref<1x128xf32, #tpu.memory_space<vmem>>
    %232 = tpu.memref_squeeze %231 : memref<1x128xf32, #tpu.memory_space<vmem>> -> memref<128xf32, #tpu.memory_space<vmem>>
    %233 = tpu.memref_slice %arg12[%c9_i32_111] : memref<16x!tpu.dma_semaphore, #tpu.memory_space<semaphore_mem>> -> memref<1x!tpu.dma_semaphore, #tpu.memory_space<semaphore_mem>>
    %234 = tpu.memref_squeeze %233 : memref<1x!tpu.dma_semaphore, #tpu.memory_space<semaphore_mem>> -> memref<!tpu.dma_semaphore, #tpu.memory_space<semaphore_mem>>
    tpu.wait_dma2 semaphore(%234 : memref<!tpu.dma_semaphore, #tpu.memory_space<semaphore_mem>>) src(%230 : memref<128xf32, #tpu.memory_space<any>>) dst(%232 : memref<128xf32, #tpu.memory_space<vmem>>)
    %c10_i32_114 = arith.constant 10 : i32
    %235 = arith.addi %0, %c10_i32_114 : i32
    %236 = arith.index_cast %235 : i32 to index
    %237 = memref.load %arg1[%236] : memref<16xi32, #tpu.memory_space<smem>>
    %c10_i32_115 = arith.constant 10 : i32
    %c10_i32_116 = arith.constant 10 : i32
    %c0_i32_117 = arith.constant 0 : i32
    %238 = tpu.memref_slice %arg2[%237, %c0_i32_117] : memref<300x128xf32, #tpu.memory_space<any>> -> memref<1x128xf32, #tpu.memory_space<any>>
    %239 = tpu.memref_squeeze %238 : memref<1x128xf32, #tpu.memory_space<any>> -> memref<128xf32, #tpu.memory_space<any>>
    %c0_i32_118 = arith.constant 0 : i32
    %240 = tpu.memref_slice %arg11[%c10_i32_115, %c0_i32_118] : memref<16x128xf32, #tpu.memory_space<vmem>> -> memref<1x128xf32, #tpu.memory_space<vmem>>
    %241 = tpu.memref_squeeze %240 : memref<1x128xf32, #tpu.memory_space<vmem>> -> memref<128xf32, #tpu.memory_space<vmem>>
    %242 = tpu.memref_slice %arg12[%c10_i32_116] : memref<16x!tpu.dma_semaphore, #tpu.memory_space<semaphore_mem>> -> memref<1x!tpu.dma_semaphore, #tpu.memory_space<semaphore_mem>>
    %243 = tpu.memref_squeeze %242 : memref<1x!tpu.dma_semaphore, #tpu.memory_space<semaphore_mem>> -> memref<!tpu.dma_semaphore, #tpu.memory_space<semaphore_mem>>
    tpu.wait_dma2 semaphore(%243 : memref<!tpu.dma_semaphore, #tpu.memory_space<semaphore_mem>>) src(%239 : memref<128xf32, #tpu.memory_space<any>>) dst(%241 : memref<128xf32, #tpu.memory_space<vmem>>)
    %c11_i32_119 = arith.constant 11 : i32
    %244 = arith.addi %0, %c11_i32_119 : i32
    %245 = arith.index_cast %244 : i32 to index
    %246 = memref.load %arg1[%245] : memref<16xi32, #tpu.memory_space<smem>>
    %c11_i32_120 = arith.constant 11 : i32
    %c11_i32_121 = arith.constant 11 : i32
    %c0_i32_122 = arith.constant 0 : i32
    %247 = tpu.memref_slice %arg2[%246, %c0_i32_122] : memref<300x128xf32, #tpu.memory_space<any>> -> memref<1x128xf32, #tpu.memory_space<any>>
    %248 = tpu.memref_squeeze %247 : memref<1x128xf32, #tpu.memory_space<any>> -> memref<128xf32, #tpu.memory_space<any>>
    %c0_i32_123 = arith.constant 0 : i32
    %249 = tpu.memref_slice %arg11[%c11_i32_120, %c0_i32_123] : memref<16x128xf32, #tpu.memory_space<vmem>> -> memref<1x128xf32, #tpu.memory_space<vmem>>
    %250 = tpu.memref_squeeze %249 : memref<1x128xf32, #tpu.memory_space<vmem>> -> memref<128xf32, #tpu.memory_space<vmem>>
    %251 = tpu.memref_slice %arg12[%c11_i32_121] : memref<16x!tpu.dma_semaphore, #tpu.memory_space<semaphore_mem>> -> memref<1x!tpu.dma_semaphore, #tpu.memory_space<semaphore_mem>>
    %252 = tpu.memref_squeeze %251 : memref<1x!tpu.dma_semaphore, #tpu.memory_space<semaphore_mem>> -> memref<!tpu.dma_semaphore, #tpu.memory_space<semaphore_mem>>
    tpu.wait_dma2 semaphore(%252 : memref<!tpu.dma_semaphore, #tpu.memory_space<semaphore_mem>>) src(%248 : memref<128xf32, #tpu.memory_space<any>>) dst(%250 : memref<128xf32, #tpu.memory_space<vmem>>)
    %c12_i32_124 = arith.constant 12 : i32
    %253 = arith.addi %0, %c12_i32_124 : i32
    %254 = arith.index_cast %253 : i32 to index
    %255 = memref.load %arg1[%254] : memref<16xi32, #tpu.memory_space<smem>>
    %c12_i32_125 = arith.constant 12 : i32
    %c12_i32_126 = arith.constant 12 : i32
    %c0_i32_127 = arith.constant 0 : i32
    %256 = tpu.memref_slice %arg2[%255, %c0_i32_127] : memref<300x128xf32, #tpu.memory_space<any>> -> memref<1x128xf32, #tpu.memory_space<any>>
    %257 = tpu.memref_squeeze %256 : memref<1x128xf32, #tpu.memory_space<any>> -> memref<128xf32, #tpu.memory_space<any>>
    %c0_i32_128 = arith.constant 0 : i32
    %258 = tpu.memref_slice %arg11[%c12_i32_125, %c0_i32_128] : memref<16x128xf32, #tpu.memory_space<vmem>> -> memref<1x128xf32, #tpu.memory_space<vmem>>
    %259 = tpu.memref_squeeze %258 : memref<1x128xf32, #tpu.memory_space<vmem>> -> memref<128xf32, #tpu.memory_space<vmem>>
    %260 = tpu.memref_slice %arg12[%c12_i32_126] : memref<16x!tpu.dma_semaphore, #tpu.memory_space<semaphore_mem>> -> memref<1x!tpu.dma_semaphore, #tpu.memory_space<semaphore_mem>>
    %261 = tpu.memref_squeeze %260 : memref<1x!tpu.dma_semaphore, #tpu.memory_space<semaphore_mem>> -> memref<!tpu.dma_semaphore, #tpu.memory_space<semaphore_mem>>
    tpu.wait_dma2 semaphore(%261 : memref<!tpu.dma_semaphore, #tpu.memory_space<semaphore_mem>>) src(%257 : memref<128xf32, #tpu.memory_space<any>>) dst(%259 : memref<128xf32, #tpu.memory_space<vmem>>)
    %c13_i32_129 = arith.constant 13 : i32
    %262 = arith.addi %0, %c13_i32_129 : i32
    %263 = arith.index_cast %262 : i32 to index
    %264 = memref.load %arg1[%263] : memref<16xi32, #tpu.memory_space<smem>>
    %c13_i32_130 = arith.constant 13 : i32
    %c13_i32_131 = arith.constant 13 : i32
    %c0_i32_132 = arith.constant 0 : i32
    %265 = tpu.memref_slice %arg2[%264, %c0_i32_132] : memref<300x128xf32, #tpu.memory_space<any>> -> memref<1x128xf32, #tpu.memory_space<any>>
    %266 = tpu.memref_squeeze %265 : memref<1x128xf32, #tpu.memory_space<any>> -> memref<128xf32, #tpu.memory_space<any>>
    %c0_i32_133 = arith.constant 0 : i32
    %267 = tpu.memref_slice %arg11[%c13_i32_130, %c0_i32_133] : memref<16x128xf32, #tpu.memory_space<vmem>> -> memref<1x128xf32, #tpu.memory_space<vmem>>
    %268 = tpu.memref_squeeze %267 : memref<1x128xf32, #tpu.memory_space<vmem>> -> memref<128xf32, #tpu.memory_space<vmem>>
    %269 = tpu.memref_slice %arg12[%c13_i32_131] : memref<16x!tpu.dma_semaphore, #tpu.memory_space<semaphore_mem>> -> memref<1x!tpu.dma_semaphore, #tpu.memory_space<semaphore_mem>>
    %270 = tpu.memref_squeeze %269 : memref<1x!tpu.dma_semaphore, #tpu.memory_space<semaphore_mem>> -> memref<!tpu.dma_semaphore, #tpu.memory_space<semaphore_mem>>
    tpu.wait_dma2 semaphore(%270 : memref<!tpu.dma_semaphore, #tpu.memory_space<semaphore_mem>>) src(%266 : memref<128xf32, #tpu.memory_space<any>>) dst(%268 : memref<128xf32, #tpu.memory_space<vmem>>)
    %c14_i32_134 = arith.constant 14 : i32
    %271 = arith.addi %0, %c14_i32_134 : i32
    %272 = arith.index_cast %271 : i32 to index
    %273 = memref.load %arg1[%272] : memref<16xi32, #tpu.memory_space<smem>>
    %c14_i32_135 = arith.constant 14 : i32
    %c14_i32_136 = arith.constant 14 : i32
    %c0_i32_137 = arith.constant 0 : i32
    %274 = tpu.memref_slice %arg2[%273, %c0_i32_137] : memref<300x128xf32, #tpu.memory_space<any>> -> memref<1x128xf32, #tpu.memory_space<any>>
    %275 = tpu.memref_squeeze %274 : memref<1x128xf32, #tpu.memory_space<any>> -> memref<128xf32, #tpu.memory_space<any>>
    %c0_i32_138 = arith.constant 0 : i32
    %276 = tpu.memref_slice %arg11[%c14_i32_135, %c0_i32_138] : memref<16x128xf32, #tpu.memory_space<vmem>> -> memref<1x128xf32, #tpu.memory_space<vmem>>
    %277 = tpu.memref_squeeze %276 : memref<1x128xf32, #tpu.memory_space<vmem>> -> memref<128xf32, #tpu.memory_space<vmem>>
    %278 = tpu.memref_slice %arg12[%c14_i32_136] : memref<16x!tpu.dma_semaphore, #tpu.memory_space<semaphore_mem>> -> memref<1x!tpu.dma_semaphore, #tpu.memory_space<semaphore_mem>>
    %279 = tpu.memref_squeeze %278 : memref<1x!tpu.dma_semaphore, #tpu.memory_space<semaphore_mem>> -> memref<!tpu.dma_semaphore, #tpu.memory_space<semaphore_mem>>
    tpu.wait_dma2 semaphore(%279 : memref<!tpu.dma_semaphore, #tpu.memory_space<semaphore_mem>>) src(%275 : memref<128xf32, #tpu.memory_space<any>>) dst(%277 : memref<128xf32, #tpu.memory_space<vmem>>)
    %c15_i32_139 = arith.constant 15 : i32
    %280 = arith.addi %0, %c15_i32_139 : i32
    %281 = arith.index_cast %280 : i32 to index
    %282 = memref.load %arg1[%281] : memref<16xi32, #tpu.memory_space<smem>>
    %c15_i32_140 = arith.constant 15 : i32
    %c15_i32_141 = arith.constant 15 : i32
    %c0_i32_142 = arith.constant 0 : i32
    %283 = tpu.memref_slice %arg2[%282, %c0_i32_142] : memref<300x128xf32, #tpu.memory_space<any>> -> memref<1x128xf32, #tpu.memory_space<any>>
    %284 = tpu.memref_squeeze %283 : memref<1x128xf32, #tpu.memory_space<any>> -> memref<128xf32, #tpu.memory_space<any>>
    %c0_i32_143 = arith.constant 0 : i32
    %285 = tpu.memref_slice %arg11[%c15_i32_140, %c0_i32_143] : memref<16x128xf32, #tpu.memory_space<vmem>> -> memref<1x128xf32, #tpu.memory_space<vmem>>
    %286 = tpu.memref_squeeze %285 : memref<1x128xf32, #tpu.memory_space<vmem>> -> memref<128xf32, #tpu.memory_space<vmem>>
    %287 = tpu.memref_slice %arg12[%c15_i32_141] : memref<16x!tpu.dma_semaphore, #tpu.memory_space<semaphore_mem>> -> memref<1x!tpu.dma_semaphore, #tpu.memory_space<semaphore_mem>>
    %288 = tpu.memref_squeeze %287 : memref<1x!tpu.dma_semaphore, #tpu.memory_space<semaphore_mem>> -> memref<!tpu.dma_semaphore, #tpu.memory_space<semaphore_mem>>
    tpu.wait_dma2 semaphore(%288 : memref<!tpu.dma_semaphore, #tpu.memory_space<semaphore_mem>>) src(%284 : memref<128xf32, #tpu.memory_space<any>>) dst(%286 : memref<128xf32, #tpu.memory_space<vmem>>)
    %c0 = arith.constant 0 : index
    %c0_144 = arith.constant 0 : index
    %289 = vector.load %arg11[%c0, %c0_144] : memref<16x128xf32, #tpu.memory_space<vmem>>, vector<16x128xf32>
    %290 = arith.truncf %289 : vector<16x128xf32> to vector<16x128xbf16>
    %c0_145 = arith.constant 0 : index
    %c0_146 = arith.constant 0 : index
    %c0_147 = arith.constant 0 : index
    %291 = vector.load %arg3[%c0_145, %c0_146, %c0_147] : memref<2x128x512xbf16, #tpu.memory_space<vmem>>, vector<1x128x512xbf16>
    %292 = vector.shape_cast %291 : vector<1x128x512xbf16> to vector<128x512xbf16>
    %cst = arith.constant dense<0.000000e+00> : vector<16x512xf32>
    %293 = tpu.matmul %290, %292, %cst {dimension_numbers = #tpu.dot_dimension_numbers<[1], [0], [0], [1], [0, 0, 1, 1], [], []>} : vector<16x128xbf16>, vector<128x512xbf16>, vector<16x512xf32> -> vector<16x512xf32>
    %c0_148 = arith.constant 0 : index
    %c0_149 = arith.constant 0 : index
    %c0_150 = arith.constant 0 : index
    %294 = vector.load %arg4[%c0_148, %c0_149, %c0_150] : memref<2x1x512xf32, #tpu.memory_space<vmem>>, vector<1x1x512xf32>
    %295 = vector.shape_cast %294 : vector<1x1x512xf32> to vector<1x512xf32>
    %296 = vector.broadcast %295 : vector<1x512xf32> to vector<16x512xf32>
    %297 = arith.addf %293, %296 : vector<16x512xf32>
    %298 = arith.negf %297 : vector<16x512xf32>
    %299 = math.exp %298 : vector<16x512xf32>
    %cst_151 = arith.constant 1.000000e+00 : f32
    %300 = vector.broadcast %cst_151 : f32 to vector<16x512xf32>
    %301 = arith.addf %300, %299 : vector<16x512xf32>
    %302 = arith.divf %300, %301 : vector<16x512xf32>
    %303 = arith.mulf %297, %302 : vector<16x512xf32>
    %304 = arith.truncf %303 : vector<16x512xf32> to vector<16x512xbf16>
    %c0_152 = arith.constant 0 : index
    %c0_153 = arith.constant 0 : index
    %c0_154 = arith.constant 0 : index
    %305 = vector.load %arg5[%c0_152, %c0_153, %c0_154] : memref<2x512x128xbf16, #tpu.memory_space<vmem>>, vector<1x512x128xbf16>
    %306 = vector.shape_cast %305 : vector<1x512x128xbf16> to vector<512x128xbf16>
    %cst_155 = arith.constant dense<0.000000e+00> : vector<16x128xf32>
    %307 = tpu.matmul %304, %306, %cst_155 {dimension_numbers = #tpu.dot_dimension_numbers<[1], [0], [0], [1], [0, 0, 1, 1], [], []>} : vector<16x512xbf16>, vector<512x128xbf16>, vector<16x128xf32> -> vector<16x128xf32>
    %c0_156 = arith.constant 0 : index
    %c0_157 = arith.constant 0 : index
    %c0_158 = arith.constant 0 : index
    %308 = vector.load %arg6[%c0_156, %c0_157, %c0_158] : memref<2x1x128xf32, #tpu.memory_space<vmem>>, vector<1x1x128xf32>
    %309 = vector.shape_cast %308 : vector<1x1x128xf32> to vector<1x128xf32>
    %310 = vector.broadcast %309 : vector<1x128xf32> to vector<16x128xf32>
    %311 = arith.addf %307, %310 : vector<16x128xf32>
    %312 = arith.addf %311, %289 : vector<16x128xf32>
    %313 = arith.mulf %312, %312 : vector<16x128xf32>
    %cst_159 = arith.constant dense<0.000000e+00> : vector<16xf32>
    %314 = vector.multi_reduction <add>, %313, %cst_159 [1] : vector<16x128xf32> to vector<16xf32>
    %315 = vector.shape_cast %314 : vector<16xf32> to vector<16x1xf32>
    %cst_160 = arith.constant 1.280000e+02 : f32
    %316 = vector.broadcast %cst_160 : f32 to vector<16x1xf32>
    %317 = arith.divf %315, %316 : vector<16x1xf32>
    %c0_161 = arith.constant 0 : index
    %c0_162 = arith.constant 0 : index
    %c0_163 = arith.constant 0 : index
    %318 = vector.load %arg7[%c0_161, %c0_162, %c0_163] : memref<2x1x128xf32, #tpu.memory_space<vmem>>, vector<1x1x128xf32>
    %319 = vector.shape_cast %318 : vector<1x1x128xf32> to vector<1x128xf32>
    %cst_164 = arith.constant 9.99999997E-7 : f32
    %320 = vector.broadcast %cst_164 : f32 to vector<16x1xf32>
    %321 = arith.addf %317, %320 : vector<16x1xf32>
    %322 = math.rsqrt %321 : vector<16x1xf32>
    %323 = vector.broadcast %322 : vector<16x1xf32> to vector<16x128xf32>
    %324 = arith.mulf %312, %323 : vector<16x128xf32>
    %325 = vector.broadcast %319 : vector<1x128xf32> to vector<16x128xf32>
    %326 = arith.mulf %325, %324 : vector<16x128xf32>
    %327 = arith.truncf %326 : vector<16x128xf32> to vector<16x128xbf16>
    %c1 = arith.constant 1 : index
    %c0_165 = arith.constant 0 : index
    %c0_166 = arith.constant 0 : index
    %328 = vector.load %arg3[%c1, %c0_165, %c0_166] : memref<2x128x512xbf16, #tpu.memory_space<vmem>>, vector<1x128x512xbf16>
    %329 = vector.shape_cast %328 : vector<1x128x512xbf16> to vector<128x512xbf16>
    %cst_167 = arith.constant dense<0.000000e+00> : vector<16x512xf32>
    %330 = tpu.matmul %327, %329, %cst_167 {dimension_numbers = #tpu.dot_dimension_numbers<[1], [0], [0], [1], [0, 0, 1, 1], [], []>} : vector<16x128xbf16>, vector<128x512xbf16>, vector<16x512xf32> -> vector<16x512xf32>
    %c1_168 = arith.constant 1 : index
    %c0_169 = arith.constant 0 : index
    %c0_170 = arith.constant 0 : index
    %331 = vector.load %arg4[%c1_168, %c0_169, %c0_170] : memref<2x1x512xf32, #tpu.memory_space<vmem>>, vector<1x1x512xf32>
    %332 = vector.shape_cast %331 : vector<1x1x512xf32> to vector<1x512xf32>
    %333 = vector.broadcast %332 : vector<1x512xf32> to vector<16x512xf32>
    %334 = arith.addf %330, %333 : vector<16x512xf32>
    %335 = arith.negf %334 : vector<16x512xf32>
    %336 = math.exp %335 : vector<16x512xf32>
    %cst_171 = arith.constant 1.000000e+00 : f32
    %337 = vector.broadcast %cst_171 : f32 to vector<16x512xf32>
    %338 = arith.addf %337, %336 : vector<16x512xf32>
    %339 = arith.divf %337, %338 : vector<16x512xf32>
    %340 = arith.mulf %334, %339 : vector<16x512xf32>
    %341 = arith.truncf %340 : vector<16x512xf32> to vector<16x512xbf16>
    %c1_172 = arith.constant 1 : index
    %c0_173 = arith.constant 0 : index
    %c0_174 = arith.constant 0 : index
    %342 = vector.load %arg5[%c1_172, %c0_173, %c0_174] : memref<2x512x128xbf16, #tpu.memory_space<vmem>>, vector<1x512x128xbf16>
    %343 = vector.shape_cast %342 : vector<1x512x128xbf16> to vector<512x128xbf16>
    %cst_175 = arith.constant dense<0.000000e+00> : vector<16x128xf32>
    %344 = tpu.matmul %341, %343, %cst_175 {dimension_numbers = #tpu.dot_dimension_numbers<[1], [0], [0], [1], [0, 0, 1, 1], [], []>} : vector<16x512xbf16>, vector<512x128xbf16>, vector<16x128xf32> -> vector<16x128xf32>
    %c1_176 = arith.constant 1 : index
    %c0_177 = arith.constant 0 : index
    %c0_178 = arith.constant 0 : index
    %345 = vector.load %arg6[%c1_176, %c0_177, %c0_178] : memref<2x1x128xf32, #tpu.memory_space<vmem>>, vector<1x1x128xf32>
    %346 = vector.shape_cast %345 : vector<1x1x128xf32> to vector<1x128xf32>
    %347 = vector.broadcast %346 : vector<1x128xf32> to vector<16x128xf32>
    %348 = arith.addf %344, %347 : vector<16x128xf32>
    %349 = arith.addf %348, %326 : vector<16x128xf32>
    %350 = arith.mulf %349, %349 : vector<16x128xf32>
    %cst_179 = arith.constant dense<0.000000e+00> : vector<16xf32>
    %351 = vector.multi_reduction <add>, %350, %cst_179 [1] : vector<16x128xf32> to vector<16xf32>
    %352 = vector.shape_cast %351 : vector<16xf32> to vector<16x1xf32>
    %cst_180 = arith.constant 1.280000e+02 : f32
    %353 = vector.broadcast %cst_180 : f32 to vector<16x1xf32>
    %354 = arith.divf %352, %353 : vector<16x1xf32>
    %c1_181 = arith.constant 1 : index
    %c0_182 = arith.constant 0 : index
    %c0_183 = arith.constant 0 : index
    %355 = vector.load %arg7[%c1_181, %c0_182, %c0_183] : memref<2x1x128xf32, #tpu.memory_space<vmem>>, vector<1x1x128xf32>
    %356 = vector.shape_cast %355 : vector<1x1x128xf32> to vector<1x128xf32>
    %cst_184 = arith.constant 9.99999997E-7 : f32
    %357 = vector.broadcast %cst_184 : f32 to vector<16x1xf32>
    %358 = arith.addf %354, %357 : vector<16x1xf32>
    %359 = math.rsqrt %358 : vector<16x1xf32>
    %360 = vector.broadcast %359 : vector<16x1xf32> to vector<16x128xf32>
    %361 = arith.mulf %349, %360 : vector<16x128xf32>
    %362 = vector.broadcast %356 : vector<1x128xf32> to vector<16x128xf32>
    %363 = arith.mulf %362, %361 : vector<16x128xf32>
    %364 = arith.truncf %363 : vector<16x128xf32> to vector<16x128xbf16>
    %c0_185 = arith.constant 0 : index
    %c0_186 = arith.constant 0 : index
    %365 = vector.load %arg8[%c0_185, %c0_186] : memref<128x384xbf16, #tpu.memory_space<vmem>>, vector<128x384xbf16>
    %cst_187 = arith.constant dense<0.000000e+00> : vector<16x384xf32>
    %366 = tpu.matmul %364, %365, %cst_187 {dimension_numbers = #tpu.dot_dimension_numbers<[1], [0], [0], [1], [0, 0, 1, 1], [], []>} : vector<16x128xbf16>, vector<128x384xbf16>, vector<16x384xf32> -> vector<16x384xf32>
    %c0_188 = arith.constant 0 : index
    %c0_189 = arith.constant 0 : index
    %367 = vector.load %arg9[%c0_188, %c0_189] : memref<1x384xf32, #tpu.memory_space<vmem>>, vector<1x384xf32>
    %368 = vector.broadcast %367 : vector<1x384xf32> to vector<16x384xf32>
    %369 = arith.addf %366, %368 : vector<16x384xf32>
    %c0_190 = arith.constant 0 : index
    %c0_191 = arith.constant 0 : index
    %370 = vector.load %arg10[%c0_190, %c0_191] : memref<16x384xf32, #tpu.memory_space<vmem>>, vector<16x384xf32>
    tpu.vector_store %arg10[%c0_190, %c0_191], %369 {strides = array<i32>} : memref<16x384xf32, #tpu.memory_space<vmem>>, vector<16x384xf32>,
    return
  }
  func.func @transform_1(%arg0: i32, %arg1: memref<16xi32, #tpu.memory_space<smem>>) -> (i32, i32, i32) {
    %c0_i32 = arith.constant 0 : i32
    %c0_i32_0 = arith.constant 0 : i32
    %c0_i32_1 = arith.constant 0 : i32
    %c0_i32_2 = arith.constant 0 : i32
    return %c0_i32, %c0_i32_0, %c0_i32_1 : i32, i32, i32
  }
  func.func @transform_2(%arg0: i32, %arg1: memref<16xi32, #tpu.memory_space<smem>>) -> (i32, i32, i32) {
    %c0_i32 = arith.constant 0 : i32
    %c0_i32_0 = arith.constant 0 : i32
    %c0_i32_1 = arith.constant 0 : i32
    %c0_i32_2 = arith.constant 0 : i32
    return %c0_i32, %c0_i32_0, %c0_i32_1 : i32, i32, i32
  }
  func.func @transform_3(%arg0: i32, %arg1: memref<16xi32, #tpu.memory_space<smem>>) -> (i32, i32, i32) {
    %c0_i32 = arith.constant 0 : i32
    %c0_i32_0 = arith.constant 0 : i32
    %c0_i32_1 = arith.constant 0 : i32
    %c0_i32_2 = arith.constant 0 : i32
    return %c0_i32, %c0_i32_0, %c0_i32_1 : i32, i32, i32
  }
  func.func @transform_4(%arg0: i32, %arg1: memref<16xi32, #tpu.memory_space<smem>>) -> (i32, i32, i32) {
    %c0_i32 = arith.constant 0 : i32
    %c0_i32_0 = arith.constant 0 : i32
    %c0_i32_1 = arith.constant 0 : i32
    %c0_i32_2 = arith.constant 0 : i32
    return %c0_i32, %c0_i32_0, %c0_i32_1 : i32, i32, i32
  }
  func.func @transform_5(%arg0: i32, %arg1: memref<16xi32, #tpu.memory_space<smem>>) -> (i32, i32, i32) {
    %c0_i32 = arith.constant 0 : i32
    %c0_i32_0 = arith.constant 0 : i32
    %c0_i32_1 = arith.constant 0 : i32
    %c0_i32_2 = arith.constant 0 : i32
    return %c0_i32, %c0_i32_0, %c0_i32_1 : i32, i32, i32
  }
  func.func @transform_6(%arg0: i32, %arg1: memref<16xi32, #tpu.memory_space<smem>>) -> (i32, i32) {
    %c0_i32 = arith.constant 0 : i32
    %c0_i32_0 = arith.constant 0 : i32
    %c0_i32_1 = arith.constant 0 : i32
    return %c0_i32, %c0_i32_0 : i32, i32
  }
  func.func @transform_7(%arg0: i32, %arg1: memref<16xi32, #tpu.memory_space<smem>>) -> (i32, i32) {
    %c0_i32 = arith.constant 0 : i32
    %c0_i32_0 = arith.constant 0 : i32
    %c0_i32_1 = arith.constant 0 : i32
    return %c0_i32, %c0_i32_0 : i32, i32
  }
  func.func @transform_8(%arg0: i32, %arg1: memref<16xi32, #tpu.memory_space<smem>>) -> (i32, i32) {
    %c0_i32 = arith.constant 0 : i32
    %c0_i32_0 = arith.constant 0 : i32
    return %arg0, %c0_i32 : i32, i32
  }
}

</mosaic_0001>

<llo_original>
// kernel: causal_lm_forward.1
$region0: #{causal_lm_forward.1}
  #allocation0 [shape = 'u32[]', space=smem, size = 0x4, offset = 0x4, fixed_abs, tag = 'smem constant byte address 0x4 - core index']
  #allocation1 [shape = 'u32[144,128]{1,0:T(1,128)}', space=vmem, size = 0x12000, scoped, tag = 'internal scratch']
  #allocation2 [shape = 'f32[16,128]{1,0:T(8,128)}', space=vmem, size = 0x2000, scoped, tag = 'scratch operand']
  #allocation3 [shape = 's32[16]{0}', space=sflag, size = 0x40, scoped, tag = 'scratch operand']
  #allocation4 [shape = 's32[1]{0}', space=sflag, size = 0x4, scoped, tag = 'scoped memory for causal_lm_forward.1']
  #allocation5 [shape = 'u8[512]{0}', space=smem, size = 0x200, scoped, tag = 'prefetched SMEM operand 0']
  #allocation15 [shape = 's32[]', space=sflag, size = 0x4, offset = 0, fixed_abs, tag = 'sflag constant byte address 0x0 - dummy sync flag']
  #allocation16 [shape = 's32[]', space=sflag, size = 0x4, offset = 0, fixed_abs, tag = 'sflag constant byte address 0x0 - dummy sync flag']
  #allocation17 [shape = 'u32[]', space=smem, size = 0x4, offset = 0x44, fixed_abs, tag = 'smem constant byte address 0x44 - assertion arg 0']
  #allocation18 [shape = 'u32[]', space=smem, size = 0x4, offset = 0x48, fixed_abs, tag = 'smem constant byte address 0x48 - assertion arg 1']
  #allocation19 [shape = 's32[]', space=sflag, size = 0x4, offset = 0, fixed_abs, tag = 'sflag constant byte address 0x0 - dummy sync flag']
  #allocation20 [shape = 's32[]', space=sflag, size = 0x4, offset = 0, fixed_abs, tag = 'sflag constant byte address 0x0 - dummy sync flag']
  #allocation21 [shape = 's32[]', space=sflag, size = 0x4, offset = 0, fixed_abs, tag = 'sflag constant byte address 0x0 - dummy sync flag']
  #allocation22 [shape = 's32[]', space=sflag, size = 0x4, offset = 0, fixed_abs, tag = 'sflag constant byte address 0x0 - dummy sync flag']
  #allocation23 [shape = 's32[]', space=sflag, size = 0x4, offset = 0, fixed_abs, tag = 'sflag constant byte address 0x0 - dummy sync flag']
  #allocation24 [shape = 's32[]', space=sflag, size = 0x4, offset = 0, fixed_abs, tag = 'sflag constant byte address 0x0 - dummy sync flag']
  #allocation25 [shape = 's32[]', space=sflag, size = 0x4, offset = 0, fixed_abs, tag = 'sflag constant byte address 0x0 - dummy sync flag']
  #allocation26 [shape = 's32[]', space=sflag, size = 0x4, offset = 0, fixed_abs, tag = 'sflag constant byte address 0x0 - dummy sync flag']
  #allocation27 [shape = 's32[]', space=sflag, size = 0x4, offset = 0, fixed_abs, tag = 'sflag constant byte address 0x0 - dummy sync flag']
  #allocation28 [shape = 's32[]', space=sflag, size = 0x4, offset = 0, fixed_abs, tag = 'sflag constant byte address 0x0 - dummy sync flag']
  #allocation29 [shape = 's32[]', space=sflag, size = 0x4, offset = 0, fixed_abs, tag = 'sflag constant byte address 0x0 - dummy sync flag']
  #allocation30 [shape = 's32[]', space=sflag, size = 0x4, offset = 0, fixed_abs, tag = 'sflag constant byte address 0x0 - dummy sync flag']
  #allocation31 [shape = 's32[]', space=sflag, size = 0x4, offset = 0, fixed_abs, tag = 'sflag constant byte address 0x0 - dummy sync flag']
  #allocation32 [shape = 's32[]', space=sflag, size = 0x4, offset = 0, fixed_abs, tag = 'sflag constant byte address 0x0 - dummy sync flag']
  #allocation33 [shape = 's32[]', space=sflag, size = 0x4, offset = 0, fixed_abs, tag = 'sflag constant byte address 0x0 - dummy sync flag']
  #allocation34 [shape = 's32[]', space=sflag, size = 0x4, offset = 0, fixed_abs, tag = 'sflag constant byte address 0x0 - dummy sync flag']
  #allocation35 [shape = 's32[]', space=sflag, size = 0x4, offset = 0, fixed_abs, tag = 'sflag constant byte address 0x0 - dummy sync flag']
  #allocation36 [shape = 's32[]', space=sflag, size = 0x4, offset = 0, fixed_abs, tag = 'sflag constant byte address 0x0 - dummy sync flag']
  #allocation37 [shape = 's32[]', space=sflag, size = 0x4, offset = 0, fixed_abs, tag = 'sflag constant byte address 0x0 - dummy sync flag']
  #allocation38 [shape = 's32[]', space=sflag, size = 0x4, offset = 0, fixed_abs, tag = 'sflag constant byte address 0x0 - dummy sync flag']
  #allocation39 [shape = 's32[]', space=sflag, size = 0x4, offset = 0, fixed_abs, tag = 'sflag constant byte address 0x0 - dummy sync flag']
  #allocation40 [shape = 's32[]', space=sflag, size = 0x4, offset = 0, fixed_abs, tag = 'sflag constant byte address 0x0 - dummy sync flag']
  #allocation41 [shape = 's32[]', space=sflag, size = 0x4, offset = 0, fixed_abs, tag = 'sflag constant byte address 0x0 - dummy sync flag']
  #allocation42 [shape = 's32[]', space=sflag, size = 0x4, offset = 0, fixed_abs, tag = 'sflag constant byte address 0x0 - dummy sync flag']
  #allocation43 [shape = 's32[]', space=sflag, size = 0x4, offset = 0, fixed_abs, tag = 'sflag constant byte address 0x0 - dummy sync flag']
  #allocation44 [shape = 's32[]', space=sflag, size = 0x4, offset = 0, fixed_abs, tag = 'sflag constant byte address 0x0 - dummy sync flag']
  #allocation45 [shape = 's32[]', space=sflag, size = 0x4, offset = 0, fixed_abs, tag = 'sflag constant byte address 0x0 - dummy sync flag']
  #allocation46 [shape = 's32[]', space=sflag, size = 0x4, offset = 0, fixed_abs, tag = 'sflag constant byte address 0x0 - dummy sync flag']
  #allocation47 [shape = 's32[]', space=sflag, size = 0x4, offset = 0, fixed_abs, tag = 'sflag constant byte address 0x0 - dummy sync flag']
  #allocation48 [shape = 's32[]', space=sflag, size = 0x4, offset = 0, fixed_abs, tag = 'sflag constant byte address 0x0 - dummy sync flag']
  %s0 = inlined_call_operand.vmem [shape: s32[16], index: 0, kind: input, shape index: {}]
  %s1 = inlined_call_operand.hbm [shape: f32[300,128], index: 1, kind: input, shape index: {}]
  %s2 = inlined_call_operand.hbm [shape: bf16[2,128,512], index: 2, kind: input, shape index: {}]
  %s3 = inlined_call_operand.vmem [shape: f32[2,1,512], index: 3, kind: input, shape index: {}]
  %s4 = inlined_call_operand.hbm [shape: bf16[2,512,128], index: 4, kind: input, shape index: {}]
  %s5 = inlined_call_operand.hbm [shape: f32[2,1,128], index: 5, kind: input, shape index: {}]
  %s6 = inlined_call_operand.vmem [shape: f32[2,1,128], index: 6, kind: input, shape index: {}]
  %s7 = inlined_call_operand.hbm [shape: bf16[128,384], index: 7, kind: input, shape index: {}]
  %s8 = inlined_call_operand.vmem [shape: f32[1,384], index: 8, kind: input, shape index: {}]
  %s9 = inlined_call_operand.hbm [shape: f32[16,384], index: 9, kind: output, shape index: {}]
  %s10 = sld [smem:[#allocation0]]
  $region118: #{causal_lm_forward.1} parent=0
    _
  %s12 = ssub.s32 1, %s10
  %s13 = scalar_select 0, %s12, %s10
  %s14 = sshll.u32 %s0, 4
  %s15 = int_to_ptr.vmem [resolvable:$true] %s14
  %17 = dma.vmem_to_smem %s15, 16, [#allocation5], [#allocation4]
  %18 = dma.done [#allocation4], 16
  %19 = sfence
  $region1: #{causal_lm_forward.1} parent=0
    #allocation6 [shape = 'u8[262144]{0}', space=vmem, size = 0x40000, scoped, tag = 'input window, operand 2, single buffered']
    #allocation7 [shape = 's32[1]{0}', space=sflag, size = 0x4, scoped, tag = 'scoped memory for causal_lm_forward.1']
    #allocation8 [shape = 's32[1]{0}', space=sflag, size = 0x4, scoped, tag = 'scoped memory for causal_lm_forward.1']
    #allocation9 [shape = 'u8[262144]{0}', space=vmem, size = 0x40000, scoped, tag = 'input window, operand 4, single buffered']
    #allocation10 [shape = 's32[1]{0}', space=sflag, size = 0x4, scoped, tag = 'scoped memory for causal_lm_forward.1']
    #allocation11 [shape = 'u8[1024]{0}', space=vmem, size = 0x400, scoped, tag = 'input window, operand 5, single buffered']
    #allocation12 [shape = 'u8[98304]{0}', space=vmem, size = 0x18000, scoped, tag = 'input window, operand 7, single buffered']
    #allocation13 [shape = 's32[1]{0}', space=sflag, size = 0x4, scoped, tag = 'scoped memory for causal_lm_forward.1']
    #allocation14 [shape = 'u8[24576]{0}', space=vmem, size = 0x6000, scoped, tag = 'output window, operand 0, single buffered']
    %20 = vsyncpa [#allocation7], 0
    %21 = vsyncpa [#allocation10], 0
    %22 = vsyncpa [#allocation13], 0
    %23 = vsyncpa [#allocation8], 0
    // Predicated region
    $region2: #{causal_lm_forward.1} parent=1 // pred_check
      _
    $region3: #{causal_lm_forward.1} parent=1 // pred_check_branch
      %25 = sbr.rel (0) target = $region5
    $region4: #{causal_lm_forward.1} parent=1 // pred_region
      %s27 = ssub.s32 8192, 8192
      %28 = vsyncadd [#allocation7], %s27
      %s29 = sshll.u32 [#allocation6], 4
      %s30 = int_to_ptr.vmem [resolvable:$true] %s29
      %35 = dma.hbm_to_vmem [thread:$0]  %s2, 8192, %s30, [#allocation7], 256, 256, 16
    $region5: #{causal_lm_forward.1} parent=1 // pred_fallthru
      _
    // Predicated region
    $region6: #{causal_lm_forward.1} parent=1 // pred_check
      _
    $region7: #{causal_lm_forward.1} parent=1 // pred_check_branch
      %37 = sbr.rel (0) target = $region9
    $region8: #{causal_lm_forward.1} parent=1 // pred_region
      _
    $region9: #{causal_lm_forward.1} parent=1 // pred_fallthru
      _
    // Predicated region
    $region10: #{causal_lm_forward.1} parent=1 // pred_check
      _
    $region11: #{causal_lm_forward.1} parent=1 // pred_check_branch
      %39 = sbr.rel (0) target = $region13
    $region12: #{causal_lm_forward.1} parent=1 // pred_region
      %s41 = ssub.s32 8192, 8192
      %42 = vsyncadd [#allocation10], %s41
      %s43 = sshll.u32 [#allocation9], 4
      %s44 = int_to_ptr.vmem [resolvable:$true] %s43
      %49 = dma.hbm_to_vmem [thread:$0]  %s4, 8192, %s44, [#allocation10], 64, 64, 4
    $region13: #{causal_lm_forward.1} parent=1 // pred_fallthru
      _
    // Predicated region
    $region14: #{causal_lm_forward.1} parent=1 // pred_check
      _
    $region15: #{causal_lm_forward.1} parent=1 // pred_check_branch
      %51 = sbr.rel (0) target = $region17
    $region16: #{causal_lm_forward.1} parent=1 // pred_region
      %s53 = ssub.s32 32, 32
      %54 = vsyncadd [#allocation10], %s53
      %s55 = sshll.u32 [#allocation11], 4
      %s56 = int_to_ptr.vmem [resolvable:$true] %s55
      %61 = dma.hbm_to_vmem [thread:$0]  %s5, 32, %s56, [#allocation10], 16, 16, 1
    $region17: #{causal_lm_forward.1} parent=1 // pred_fallthru
      _
    // Predicated region
    $region18: #{causal_lm_forward.1} parent=1 // pred_check
      _
    $region19: #{causal_lm_forward.1} parent=1 // pred_check_branch
      %63 = sbr.rel (0) target = $region21
    $region20: #{causal_lm_forward.1} parent=1 // pred_region
      _
    $region21: #{causal_lm_forward.1} parent=1 // pred_fallthru
      _
    // Predicated region
    $region22: #{causal_lm_forward.1} parent=1 // pred_check
      _
    $region23: #{causal_lm_forward.1} parent=1 // pred_check_branch
      %65 = sbr.rel (0) target = $region25
    $region24: #{causal_lm_forward.1} parent=1 // pred_region
      %s67 = ssub.s32 3072, 3072
      %68 = vsyncadd [#allocation13], %s67
      %s69 = sshll.u32 [#allocation12], 4
      %s70 = int_to_ptr.vmem [resolvable:$true] %s69
      %75 = dma.hbm_to_vmem [thread:$0]  %s7, 3072, %s70, [#allocation13], 192, 192, 12
    $region25: #{causal_lm_forward.1} parent=1 // pred_fallthru
      _
    // Predicated region
    $region26: #{causal_lm_forward.1} parent=1 // pred_check
      _
    $region27: #{causal_lm_forward.1} parent=1 // pred_check_branch
      %77 = sbr.rel (0) target = $region29
    $region28: #{causal_lm_forward.1} parent=1 // pred_region
      _
    $region29: #{causal_lm_forward.1} parent=1 // pred_fallthru
      _
    // Predicated region
    $region30: #{causal_lm_forward.1} parent=1 // pred_check
      _
    $region31: #{causal_lm_forward.1} parent=1 // pred_check_branch
      %79 = sbr.rel (0) target = $region33
    $region32: #{causal_lm_forward.1} parent=1 // pred_region
      %80 = dma.done [#allocation7], 8192
    $region33: #{causal_lm_forward.1} parent=1 // pred_fallthru
      _
    // Predicated region
    $region34: #{causal_lm_forward.1} parent=1 // pred_check
      _
    $region35: #{causal_lm_forward.1} parent=1 // pred_check_branch
      %82 = sbr.rel (0) target = $region37
    $region36: #{causal_lm_forward.1} parent=1 // pred_region
      %83 = dma.done [#allocation10], 8192
    $region37: #{causal_lm_forward.1} parent=1 // pred_fallthru
      _
    // Predicated region
    $region38: #{causal_lm_forward.1} parent=1 // pred_check
      _
    $region39: #{causal_lm_forward.1} parent=1 // pred_check_branch
      %85 = sbr.rel (0) target = $region41
    $region40: #{causal_lm_forward.1} parent=1 // pred_region
      %86 = dma.done [#allocation10], 32
    $region41: #{causal_lm_forward.1} parent=1 // pred_fallthru
      _
    // Predicated region
    $region42: #{causal_lm_forward.1} parent=1 // pred_check
      _
    $region43: #{causal_lm_forward.1} parent=1 // pred_check_branch
      %88 = sbr.rel (0) target = $region45
    $region44: #{causal_lm_forward.1} parent=1 // pred_region
      %89 = dma.done [#allocation13], 3072
    $region45: #{causal_lm_forward.1} parent=1 // pred_fallthru
      _
    %s91 = smul.u32 0, 16
    %s92 = sld [smem:[#allocation5 + %s91]]
    %s93 = smul.addr %s92, 16
    %s94 = scalar_lea.hbm %s1, %s93
    // Predicated region
    $region46: #{causal_lm_forward.1} parent=1 // pred_check
      _
    $region47: #{causal_lm_forward.1} parent=1 // pred_check_branch
      %96 = sbr.rel target = $region49
    $region48: #{causal_lm_forward.1} parent=1 // pred_region
      %97 = sst [smem:[#allocation17]] [#allocation16]
      %98 = sst [smem:[#allocation18]] [#allocation15]
    $region49: #{causal_lm_forward.1} parent=1 // pred_fallthru
      _
    %100 = shalt.err (0)
    %s102 = sshll.u32 [#allocation2], 4
    %s103 = int_to_ptr.vmem [resolvable:$true] %s102
    %105 = dma.hbm_to_vmem [thread:$0]  %s94, 16, %s103, [#allocation3]
    %s106 = sadd.s32 %s91, 1
    %s107 = sld [smem:[#allocation5 + %s106]]
    %s108 = smul.addr %s107, 16
    %s109 = scalar_lea.hbm %s1, %s108
    %s110 = scalar_lea.vmem [#allocation2], 1
    %s111 = scalar_lea.sflag [#allocation3], 1
    // Predicated region
    $region50: #{causal_lm_forward.1} parent=1 // pred_check
      _
    $region51: #{causal_lm_forward.1} parent=1 // pred_check_branch
      %113 = sbr.rel target = $region53
    $region52: #{causal_lm_forward.1} parent=1 // pred_region
      %114 = sst [smem:[#allocation17]] [#allocation20]
      %115 = sst [smem:[#allocation18]] [#allocation19]
    $region53: #{causal_lm_forward.1} parent=1 // pred_fallthru
      _
    %117 = shalt.err (0)
    %s119 = sshll.u32 %s110, 4
    %s120 = int_to_ptr.vmem [resolvable:$true] %s119
    %122 = dma.hbm_to_vmem [thread:$0]  %s109, 16, %s120, %s111
    %s123 = sadd.s32 %s91, 2
    %s124 = sld [smem:[#allocation5 + %s123]]
    %s125 = smul.addr %s124, 16
    %s126 = scalar_lea.hbm %s1, %s125
    %s127 = scalar_lea.vmem [#allocation2], 2
    %s128 = scalar_lea.sflag [#allocation3], 2
    // Predicated region
    $region54: #{causal_lm_forward.1} parent=1 // pred_check
      _
    $region55: #{causal_lm_forward.1} parent=1 // pred_check_branch
      %130 = sbr.rel target = $region57
    $region56: #{causal_lm_forward.1} parent=1 // pred_region
      %131 = sst [smem:[#allocation17]] [#allocation22]
      %132 = sst [smem:[#allocation18]] [#allocation21]
    $region57: #{causal_lm_forward.1} parent=1 // pred_fallthru
      _
    %134 = shalt.err (0)
    %s136 = sshll.u32 %s127, 4
    %s137 = int_to_ptr.vmem [resolvable:$true] %s136
    %139 = dma.hbm_to_vmem [thread:$0]  %s126, 16, %s137, %s128
    %s140 = sadd.s32 %s91, 3
    %s141 = sld [smem:[#allocation5 + %s140]]
    %s142 = smul.addr %s141, 16
    %s143 = scalar_lea.hbm %s1, %s142
    %s144 = scalar_lea.vmem [#allocation2], 3
    %s145 = scalar_lea.sflag [#allocation3], 3
    // Predicated region
    $region58: #{causal_lm_forward.1} parent=1 // pred_check
      _
    $region59: #{causal_lm_forward.1} parent=1 // pred_check_branch
      %147 = sbr.rel target = $region61
    $region60: #{causal_lm_forward.1} parent=1 // pred_region
      %148 = sst [smem:[#allocation17]] [#allocation24]
      %149 = sst [smem:[#allocation18]] [#allocation23]
    $region61: #{causal_lm_forward.1} parent=1 // pred_fallthru
      _
    %151 = shalt.err (0)
    %s153 = sshll.u32 %s144, 4
    %s154 = int_to_ptr.vmem [resolvable:$true] %s153
    %156 = dma.hbm_to_vmem [thread:$0]  %s143, 16, %s154, %s145
    %s157 = sadd.s32 %s91, 4
    %s158 = sld [smem:[#allocation5 + %s157]]
    %s159 = smul.addr %s158, 16
    %s160 = scalar_lea.hbm %s1, %s159
    %s161 = scalar_lea.vmem [#allocation2], 4
    %s162 = scalar_lea.sflag [#allocation3], 4
    // Predicated region
    $region62: #{causal_lm_forward.1} parent=1 // pred_check
      _
    $region63: #{causal_lm_forward.1} parent=1 // pred_check_branch
      %164 = sbr.rel target = $region65
    $region64: #{causal_lm_forward.1} parent=1 // pred_region
      %165 = sst [smem:[#allocation17]] [#allocation26]
      %166 = sst [smem:[#allocation18]] [#allocation25]
    $region65: #{causal_lm_forward.1} parent=1 // pred_fallthru
      _
    %168 = shalt.err (0)
    %s170 = sshll.u32 %s161, 4
    %s171 = int_to_ptr.vmem [resolvable:$true] %s170
    %173 = dma.hbm_to_vmem [thread:$0]  %s160, 16, %s171, %s162
    %s174 = sadd.s32 %s91, 5
    %s175 = sld [smem:[#allocation5 + %s174]]
    %s176 = smul.addr %s175, 16
    %s177 = scalar_lea.hbm %s1, %s176
    %s178 = scalar_lea.vmem [#allocation2], 5
    %s179 = scalar_lea.sflag [#allocation3], 5
    // Predicated region
    $region66: #{causal_lm_forward.1} parent=1 // pred_check
      _
    $region67: #{causal_lm_forward.1} parent=1 // pred_check_branch
      %181 = sbr.rel target = $region69
    $region68: #{causal_lm_forward.1} parent=1 // pred_region
      %182 = sst [smem:[#allocation17]] [#allocation28]
      %183 = sst [smem:[#allocation18]] [#allocation27]
    $region69: #{causal_lm_forward.1} parent=1 // pred_fallthru
      _
    %185 = shalt.err (0)
    %s187 = sshll.u32 %s178, 4
    %s188 = int_to_ptr.vmem [resolvable:$true] %s187
    %190 = dma.hbm_to_vmem [thread:$0]  %s177, 16, %s188, %s179
    %s191 = sadd.s32 %s91, 6
    %s192 = sld [smem:[#allocation5 + %s191]]
    %s193 = smul.addr %s192, 16
    %s194 = scalar_lea.hbm %s1, %s193
    %s195 = scalar_lea.vmem [#allocation2], 6
    %s196 = scalar_lea.sflag [#allocation3], 6
    // Predicated region
    $region70: #{causal_lm_forward.1} parent=1 // pred_check
      _
    $region71: #{causal_lm_forward.1} parent=1 // pred_check_branch
      %198 = sbr.rel target = $region73
    $region72: #{causal_lm_forward.1} parent=1 // pred_region
      %199 = sst [smem:[#allocation17]] [#allocation30]
      %200 = sst [smem:[#allocation18]] [#allocation29]
    $region73: #{causal_lm_forward.1} parent=1 // pred_fallthru
      _
    %202 = shalt.err (0)
    %s204 = sshll.u32 %s195, 4
    %s205 = int_to_ptr.vmem [resolvable:$true] %s204
    %207 = dma.hbm_to_vmem [thread:$0]  %s194, 16, %s205, %s196
    %s208 = sadd.s32 %s91, 7
    %s209 = sld [smem:[#allocation5 + %s208]]
    %s210 = smul.addr %s209, 16
    %s211 = scalar_lea.hbm %s1, %s210
    %s212 = scalar_lea.vmem [#allocation2], 7
    %s213 = scalar_lea.sflag [#allocation3], 7
    // Predicated region
    $region74: #{causal_lm_forward.1} parent=1 // pred_check
      _
    $region75: #{causal_lm_forward.1} parent=1 // pred_check_branch
      %215 = sbr.rel target = $region77
    $region76: #{causal_lm_forward.1} parent=1 // pred_region
      %216 = sst [smem:[#allocation17]] [#allocation32]
      %217 = sst [smem:[#allocation18]] [#allocation31]
    $region77: #{causal_lm_forward.1} parent=1 // pred_fallthru
      _
    %219 = shalt.err (0)
    %s221 = sshll.u32 %s212, 4
    %s222 = int_to_ptr.vmem [resolvable:$true] %s221
    %224 = dma.hbm_to_vmem [thread:$0]  %s211, 16, %s222, %s213
    %s225 = sadd.s32 %s91, 8
    %s226 = sld [smem:[#allocation5 + %s225]]
    %s227 = smul.addr %s226, 16
    %s228 = scalar_lea.hbm %s1, %s227
    %s229 = scalar_lea.vmem [#allocation2], 8
    %s230 = scalar_lea.sflag [#allocation3], 8
    // Predicated region
    $region78: #{causal_lm_forward.1} parent=1 // pred_check
      _
    $region79: #{causal_lm_forward.1} parent=1 // pred_check_branch
      %232 = sbr.rel target = $region81
    $region80: #{causal_lm_forward.1} parent=1 // pred_region
      %233 = sst [smem:[#allocation17]] [#allocation34]
      %234 = sst [smem:[#allocation18]] [#allocation33]
    $region81: #{causal_lm_forward.1} parent=1 // pred_fallthru
      _
    %236 = shalt.err (0)
    %s238 = sshll.u32 %s229, 4
    %s239 = int_to_ptr.vmem [resolvable:$true] %s238
    %241 = dma.hbm_to_vmem [thread:$0]  %s228, 16, %s239, %s230
    %s242 = sadd.s32 %s91, 9
    %s243 = sld [smem:[#allocation5 + %s242]]
    %s244 = smul.addr %s243, 16
    %s245 = scalar_lea.hbm %s1, %s244
    %s246 = scalar_lea.vmem [#allocation2], 9
    %s247 = scalar_lea.sflag [#allocation3], 9
    // Predicated region
    $region82: #{causal_lm_forward.1} parent=1 // pred_check
      _
    $region83: #{causal_lm_forward.1} parent=1 // pred_check_branch
      %249 = sbr.rel target = $region85
    $region84: #{causal_lm_forward.1} parent=1 // pred_region
      %250 = sst [smem:[#allocation17]] [#allocation36]
      %251 = sst [smem:[#allocation18]] [#allocation35]
    $region85: #{causal_lm_forward.1} parent=1 // pred_fallthru
      _
    %253 = shalt.err (0)
    %s255 = sshll.u32 %s246, 4
    %s256 = int_to_ptr.vmem [resolvable:$true] %s255
    %258 = dma.hbm_to_vmem [thread:$0]  %s245, 16, %s256, %s247
    %s259 = sadd.s32 %s91, 10
    %s260 = sld [smem:[#allocation5 + %s259]]
    %s261 = smul.addr %s260, 16
    %s262 = scalar_lea.hbm %s1, %s261
    %s263 = scalar_lea.vmem [#allocation2], 10
    %s264 = scalar_lea.sflag [#allocation3], 10
    // Predicated region
    $region86: #{causal_lm_forward.1} parent=1 // pred_check
      _
    $region87: #{causal_lm_forward.1} parent=1 // pred_check_branch
      %266 = sbr.rel target = $region89
    $region88: #{causal_lm_forward.1} parent=1 // pred_region
      %267 = sst [smem:[#allocation17]] [#allocation38]
      %268 = sst [smem:[#allocation18]] [#allocation37]
    $region89: #{causal_lm_forward.1} parent=1 // pred_fallthru
      _
    %270 = shalt.err (0)
    %s272 = sshll.u32 %s263, 4
    %s273 = int_to_ptr.vmem [resolvable:$true] %s272
    %275 = dma.hbm_to_vmem [thread:$0]  %s262, 16, %s273, %s264
    %s276 = sadd.s32 %s91, 11
    %s277 = sld [smem:[#allocation5 + %s276]]
    %s278 = smul.addr %s277, 16
    %s279 = scalar_lea.hbm %s1, %s278
    %s280 = scalar_lea.vmem [#allocation2], 11
    %s281 = scalar_lea.sflag [#allocation3], 11
    // Predicated region
    $region90: #{causal_lm_forward.1} parent=1 // pred_check
      _
    $region91: #{causal_lm_forward.1} parent=1 // pred_check_branch
      %283 = sbr.rel target = $region93
    $region92: #{causal_lm_forward.1} parent=1 // pred_region
      %284 = sst [smem:[#allocation17]] [#allocation40]
      %285 = sst [smem:[#allocation18]] [#allocation39]
    $region93: #{causal_lm_forward.1} parent=1 // pred_fallthru
      _
    %287 = shalt.err (0)
    %s289 = sshll.u32 %s280, 4
    %s290 = int_to_ptr.vmem [resolvable:$true] %s289
    %292 = dma.hbm_to_vmem [thread:$0]  %s279, 16, %s290, %s281
    %s293 = sadd.s32 %s91, 12
    %s294 = sld [smem:[#allocation5 + %s293]]
    %s295 = smul.addr %s294, 16
    %s296 = scalar_lea.hbm %s1, %s295
    %s297 = scalar_lea.vmem [#allocation2], 12
    %s298 = scalar_lea.sflag [#allocation3], 12
    // Predicated region
    $region94: #{causal_lm_forward.1} parent=1 // pred_check
      _
    $region95: #{causal_lm_forward.1} parent=1 // pred_check_branch
      %300 = sbr.rel target = $region97
    $region96: #{causal_lm_forward.1} parent=1 // pred_region
      %301 = sst [smem:[#allocation17]] [#allocation42]
      %302 = sst [smem:[#allocation18]] [#allocation41]
    $region97: #{causal_lm_forward.1} parent=1 // pred_fallthru
      _
    %304 = shalt.err (0)
    %s306 = sshll.u32 %s297, 4
    %s307 = int_to_ptr.vmem [resolvable:$true] %s306
    %309 = dma.hbm_to_vmem [thread:$0]  %s296, 16, %s307, %s298
    %s310 = sadd.s32 %s91, 13
    %s311 = sld [smem:[#allocation5 + %s310]]
    %s312 = smul.addr %s311, 16
    %s313 = scalar_lea.hbm %s1, %s312
    %s314 = scalar_lea.vmem [#allocation2], 13
    %s315 = scalar_lea.sflag [#allocation3], 13
    // Predicated region
    $region98: #{causal_lm_forward.1} parent=1 // pred_check
      _
    $region99: #{causal_lm_forward.1} parent=1 // pred_check_branch
      %317 = sbr.rel target = $region101
    $region100: #{causal_lm_forward.1} parent=1 // pred_region
      %318 = sst [smem:[#allocation17]] [#allocation44]
      %319 = sst [smem:[#allocation18]] [#allocation43]
    $region101: #{causal_lm_forward.1} parent=1 // pred_fallthru
      _
    %321 = shalt.err (0)
    %s323 = sshll.u32 %s314, 4
    %s324 = int_to_ptr.vmem [resolvable:$true] %s323
    %326 = dma.hbm_to_vmem [thread:$0]  %s313, 16, %s324, %s315
    %s327 = sadd.s32 %s91, 14
    %s328 = sld [smem:[#allocation5 + %s327]]
    %s329 = smul.addr %s328, 16
    %s330 = scalar_lea.hbm %s1, %s329
    %s331 = scalar_lea.vmem [#allocation2], 14
    %s332 = scalar_lea.sflag [#allocation3], 14
    // Predicated region
    $region102: #{causal_lm_forward.1} parent=1 // pred_check
      _
    $region103: #{causal_lm_forward.1} parent=1 // pred_check_branch
      %334 = sbr.rel target = $region105
    $region104: #{causal_lm_forward.1} parent=1 // pred_region
      %335 = sst [smem:[#allocation17]] [#allocation46]
      %336 = sst [smem:[#allocation18]] [#allocation45]
    $region105: #{causal_lm_forward.1} parent=1 // pred_fallthru
      _
    %338 = shalt.err (0)
    %s340 = sshll.u32 %s331, 4
    %s341 = int_to_ptr.vmem [resolvable:$true] %s340
    %343 = dma.hbm_to_vmem [thread:$0]  %s330, 16, %s341, %s332
    %s344 = sadd.s32 %s91, 15
    %s345 = sld [smem:[#allocation5 + %s344]]
    %s346 = smul.addr %s345, 16
    %s347 = scalar_lea.hbm %s1, %s346
    %s348 = scalar_lea.vmem [#allocation2], 15
    %s349 = scalar_lea.sflag [#allocation3], 15
    // Predicated region
    $region106: #{causal_lm_forward.1} parent=1 // pred_check
      _
    $region107: #{causal_lm_forward.1} parent=1 // pred_check_branch
      %351 = sbr.rel target = $region109
    $region108: #{causal_lm_forward.1} parent=1 // pred_region
      %352 = sst [smem:[#allocation17]] [#allocation48]
      %353 = sst [smem:[#allocation18]] [#allocation47]
    $region109: #{causal_lm_forward.1} parent=1 // pred_fallthru
      _
    %355 = shalt.err (0)
    %s357 = sshll.u32 %s348, 4
    %s358 = int_to_ptr.vmem [resolvable:$true] %s357
    %360 = dma.hbm_to_vmem [thread:$0]  %s347, 16, %s358, %s349
    %s361 = sld [smem:[#allocation5 + %s91]]
    %363 = dma.done [#allocation3], 16
    %s364 = sld [smem:[#allocation5 + %s106]]
    %366 = dma.done %s111, 16
    %s367 = sld [smem:[#allocation5 + %s123]]
    %369 = dma.done %s128, 16
    %s370 = sld [smem:[#allocation5 + %s140]]
    %372 = dma.done %s145, 16
    %s373 = sld [smem:[#allocation5 + %s157]]
    %375 = dma.done %s162, 16
    %s376 = sld [smem:[#allocation5 + %s174]]
    %378 = dma.done %s179, 16
    %s379 = sld [smem:[#allocation5 + %s191]]
    %381 = dma.done %s196, 16
    %s382 = sld [smem:[#allocation5 + %s208]]
    %384 = dma.done %s213, 16
    %s385 = sld [smem:[#allocation5 + %s225]]
    %387 = dma.done %s230, 16
    %s388 = sld [smem:[#allocation5 + %s242]]
    %390 = dma.done %s247, 16
    %s391 = sld [smem:[#allocation5 + %s259]]
    %393 = dma.done %s264, 16
    %s394 = sld [smem:[#allocation5 + %s276]]
    %396 = dma.done %s281, 16
    %s397 = sld [smem:[#allocation5 + %s293]]
    %399 = dma.done %s298, 16
    %s400 = sld [smem:[#allocation5 + %s310]]
    %402 = dma.done %s315, 16
    %s403 = sld [smem:[#allocation5 + %s327]]
    %405 = dma.done %s332, 16
    %s406 = sld [smem:[#allocation5 + %s344]]
    %408 = dma.done %s349, 16
    %v409 = vld [vmem:[#allocation2] sm:$0xff]
    %v410 = vld [vmem:[#allocation2 + $0x8] sm:$0xff]
    %v411 = vpack.c.bf16 %v410, %v409
    %v412 = vld [vmem:[#allocation6] sm:$0xff]
    %v413 = vld [vmem:[#allocation6 + $0x8] sm:$0xff]
    %v414 = vld [vmem:[#allocation6 + $0x10] sm:$0xff]
    %v415 = vld [vmem:[#allocation6 + $0x18] sm:$0xff]
    %v416 = vld [vmem:[#allocation6 + $0x20] sm:$0xff]
    %v417 = vld [vmem:[#allocation6 + $0x28] sm:$0xff]
    %v418 = vld [vmem:[#allocation6 + $0x30] sm:$0xff]
    %v419 = vld [vmem:[#allocation6 + $0x38] sm:$0xff]
    %v420 = vld [vmem:[#allocation6 + $0x40] sm:$0xff]
    %v421 = vld [vmem:[#allocation6 + $0x48] sm:$0xff]
    %v422 = vld [vmem:[#allocation6 + $0x50] sm:$0xff]
    %v423 = vld [vmem:[#allocation6 + $0x58] sm:$0xff]
    %v424 = vld [vmem:[#allocation6 + $0x60] sm:$0xff]
    %v425 = vld [vmem:[#allocation6 + $0x68] sm:$0xff]
    %v426 = vld [vmem:[#allocation6 + $0x70] sm:$0xff]
    %v427 = vld [vmem:[#allocation6 + $0x78] sm:$0xff]
    %v428 = vld [vmem:[#allocation6 + $0x80] sm:$0xff]
    %v429 = vld [vmem:[#allocation6 + $0x88] sm:$0xff]
    %v430 = vld [vmem:[#allocation6 + $0x90] sm:$0xff]
    %v431 = vld [vmem:[#allocation6 + $0x98] sm:$0xff]
    %v432 = vld [vmem:[#allocation6 + $0xa0] sm:$0xff]
    %v433 = vld [vmem:[#allocation6 + $0xa8] sm:$0xff]
    %v434 = vld [vmem:[#allocation6 + $0xb0] sm:$0xff]
    %v435 = vld [vmem:[#allocation6 + $0xb8] sm:$0xff]
    %v436 = vld [vmem:[#allocation6 + $0xc0] sm:$0xff]
    %v437 = vld [vmem:[#allocation6 + $0xc8] sm:$0xff]
    %v438 = vld [vmem:[#allocation6 + $0xd0] sm:$0xff]
    %v439 = vld [vmem:[#allocation6 + $0xd8] sm:$0xff]
    %v440 = vld [vmem:[#allocation6 + $0xe0] sm:$0xff]
    %v441 = vld [vmem:[#allocation6 + $0xe8] sm:$0xff]
    %v442 = vld [vmem:[#allocation6 + $0xf0] sm:$0xff]
    %v443 = vld [vmem:[#allocation6 + $0xf8] sm:$0xff]
    %v444 = vld [vmem:[%s3] sm:$0xf]
    %v446 = vlaneseq
    %v447 = vshrl.u32 %v446, 7
    %v448 = vsub.s32 0, %v447
    %v449 = vrot.slane %v444, %v448
    %v450 = vlaneseq
    %v451 = vshrl.u32 %v450, 7
    %v452 = vsub.s32 1, %v451
    %v453 = vrot.slane %v444, %v452
    %v454 = vlaneseq
    %v455 = vshrl.u32 %v454, 7
    %v456 = vsub.s32 2, %v455
    %v457 = vrot.slane %v444, %v456
    %v458 = vlaneseq
    %v459 = vshrl.u32 %v458, 7
    %v460 = vsub.s32 3, %v459
    %v461 = vrot.slane %v444, %v460
    %v498 = vunpack.c.l.b16 %v412
    %v499 = vunpack.c.h.b16 %v412
    %v500 = vunpack.c.l.b16 %v413
    %v501 = vunpack.c.h.b16 %v413
    %v502 = vunpack.c.l.b16 %v414
    %v503 = vunpack.c.h.b16 %v414
    %v504 = vunpack.c.l.b16 %v415
    %v505 = vunpack.c.h.b16 %v415
    %v506 = vunpack.c.l.b16 %v416
    %v507 = vunpack.c.h.b16 %v416
    %v508 = vunpack.c.l.b16 %v417
    %v509 = vunpack.c.h.b16 %v417
    %v510 = vunpack.c.l.b16 %v418
    %v511 = vunpack.c.h.b16 %v418
    %v512 = vunpack.c.l.b16 %v419
    %v513 = vunpack.c.h.b16 %v419
    %v514 = vunpack.c.l.b16 %v420
    %v515 = vunpack.c.h.b16 %v420
    %v516 = vunpack.c.l.b16 %v421
    %v517 = vunpack.c.h.b16 %v421
    %v518 = vunpack.c.l.b16 %v422
    %v519 = vunpack.c.h.b16 %v422
    %v520 = vunpack.c.l.b16 %v423
    %v521 = vunpack.c.h.b16 %v423
    %v522 = vunpack.c.l.b16 %v424
    %v523 = vunpack.c.h.b16 %v424
    %v524 = vunpack.c.l.b16 %v425
    %v525 = vunpack.c.h.b16 %v425
    %v526 = vunpack.c.l.b16 %v426
    %v527 = vunpack.c.h.b16 %v426
    %v528 = vunpack.c.l.b16 %v427
    %v529 = vunpack.c.h.b16 %v427
    %v530 = vunpack.c.l.b16 %v428
    %v531 = vunpack.c.h.b16 %v428
    %v532 = vunpack.c.l.b16 %v429
    %v533 = vunpack.c.h.b16 %v429
    %v534 = vunpack.c.l.b16 %v430
    %v535 = vunpack.c.h.b16 %v430
    %v536 = vunpack.c.l.b16 %v431
    %v537 = vunpack.c.h.b16 %v431
    %v538 = vunpack.c.l.b16 %v432
    %v539 = vunpack.c.h.b16 %v432
    %v540 = vunpack.c.l.b16 %v433
    %v541 = vunpack.c.h.b16 %v433
    %v542 = vunpack.c.l.b16 %v434
    %v543 = vunpack.c.h.b16 %v434
    %v544 = vunpack.c.l.b16 %v435
    %v545 = vunpack.c.h.b16 %v435
    %v546 = vunpack.c.l.b16 %v436
    %v547 = vunpack.c.h.b16 %v436
    %v548 = vunpack.c.l.b16 %v437
    %v549 = vunpack.c.h.b16 %v437
    %v550 = vunpack.c.l.b16 %v438
    %v551 = vunpack.c.h.b16 %v438
    %v552 = vunpack.c.l.b16 %v439
    %v553 = vunpack.c.h.b16 %v439
    %v554 = vunpack.c.l.b16 %v440
    %v555 = vunpack.c.h.b16 %v440
    %v556 = vunpack.c.l.b16 %v441
    %v557 = vunpack.c.h.b16 %v441
    %v558 = vunpack.c.l.b16 %v442
    %v559 = vunpack.c.h.b16 %v442
    %v560 = vunpack.c.l.b16 %v443
    %v561 = vunpack.c.h.b16 %v443
    %v562 = vpack.c.b16 %v502, %v498
    %v563 = vpack.c.b16 %v503, %v499
    %v564 = vpack.c.b16 %v504, %v500
    %v565 = vpack.c.b16 %v505, %v501
    %v566 = vpack.c.b16 %v510, %v506
    %v567 = vpack.c.b16 %v511, %v507
    %v568 = vpack.c.b16 %v512, %v508
    %v569 = vpack.c.b16 %v513, %v509
    %v570 = vpack.c.b16 %v518, %v514
    %v571 = vpack.c.b16 %v519, %v515
    %v572 = vpack.c.b16 %v520, %v516
    %v573 = vpack.c.b16 %v521, %v517
    %v574 = vpack.c.b16 %v526, %v522
    %v575 = vpack.c.b16 %v527, %v523
    %v576 = vpack.c.b16 %v528, %v524
    %v577 = vpack.c.b16 %v529, %v525
    %v578 = vpack.c.b16 %v534, %v530
    %v579 = vpack.c.b16 %v535, %v531
    %v580 = vpack.c.b16 %v536, %v532
    %v581 = vpack.c.b16 %v537, %v533
    %v582 = vpack.c.b16 %v542, %v538
    %v583 = vpack.c.b16 %v543, %v539
    %v584 = vpack.c.b16 %v544, %v540
    %v585 = vpack.c.b16 %v545, %v541
    %v586 = vpack.c.b16 %v550, %v546
    %v587 = vpack.c.b16 %v551, %v547
    %v588 = vpack.c.b16 %v552, %v548
    %v589 = vpack.c.b16 %v553, %v549
    %v590 = vpack.c.b16 %v558, %v554
    %v591 = vpack.c.b16 %v559, %v555
    %v592 = vpack.c.b16 %v560, %v556
    %v593 = vpack.c.b16 %v561, %v557
    %626 = vmatprep.subr.bf16.mxu0 %v591
    %627 = vmatpush1.bf16.msra.mxu0 %v590
    %628 = vmatprep.subr.bf16.mxu0 %v587
    %629 = vmatpush1.bf16.msra.mxu0 %v586
    %630 = vmatprep.subr.bf16.mxu0 %v583
    %631 = vmatpush1.bf16.msra.mxu0 %v582
    %632 = vmatprep.subr.bf16.mxu0 %v579
    %633 = vmatpush1.bf16.msra.mxu0 %v578
    %634 = vmatprep.subr.bf16.mxu0 %v575
    %635 = vmatpush1.bf16.msra.mxu0 %v574
    %636 = vmatprep.subr.bf16.mxu0 %v571
    %637 = vmatpush1.bf16.msra.mxu0 %v570
    %638 = vmatprep.subr.bf16.mxu0 %v567
    %639 = vmatpush1.bf16.msra.mxu0 %v566
    %640 = vmatprep.subr.bf16.mxu0 %v563
    %641 = vmatpush1.bf16.msra.mxu0 %v562
    %642 = vmatprep.subr.bf16.mxu0 0
    %643 = vmatpush2.bf16.msra.mxu0 0
    %644 = vmatprep.subr.bf16.mxu0 0
    %645 = vmatpush2.bf16.msra.mxu0 0
    %646 = vmatprep.subr.bf16.mxu0 0
    %647 = vmatpush2.bf16.msra.mxu0 0
    %648 = vmatprep.subr.bf16.mxu0 0
    %649 = vmatpush2.bf16.msra.mxu0 0
    %650 = vmatprep.subr.bf16.mxu0 0
    %651 = vmatpush2.bf16.msra.mxu0 0
    %652 = vmatprep.subr.bf16.mxu0 0
    %653 = vmatpush2.bf16.msra.mxu0 0
    %654 = vmatprep.subr.bf16.mxu0 0
    %655 = vmatpush2.bf16.msra.mxu0 0
    %656 = vmatprep.subr.bf16.mxu0 0
    %657 = vmatpush2.bf16.msra.mxu0 0
    %658 = vmatprep.mubr.bf16.mxu0 0
    %659 = vmatmul.mubr.bf16.gmra.mxu0 %v411
    %v660 = vpop.f32.mrf.mxu0
    %v661 = vadd.f32 %v449, %v660
    %v662 = vpop.f32.mrf.mxu0
    %v663 = vadd.f32 %v453, %v662
    %v664 = vpop.f32.mrf.mxu0
    %v665 = vadd.f32 %v449, %v664
    %v666 = vpop.f32.mrf.mxu0
    %v667 = vadd.f32 %v453, %v666
    %668 = vdwg.mxu0
    %669 = vmatprep.subr.bf16.mxu0 %v593
    %670 = vmatpush1.bf16.msra.mxu0 %v592
    %671 = vmatprep.subr.bf16.mxu0 %v589
    %672 = vmatpush1.bf16.msra.mxu0 %v588
    %673 = vmatprep.subr.bf16.mxu0 %v585
    %674 = vmatpush1.bf16.msra.mxu0 %v584
    %675 = vmatprep.subr.bf16.mxu0 %v581
    %676 = vmatpush1.bf16.msra.mxu0 %v580
    %677 = vmatprep.subr.bf16.mxu0 %v577
    %678 = vmatpush1.bf16.msra.mxu0 %v576
    %679 = vmatprep.subr.bf16.mxu0 %v573
    %680 = vmatpush1.bf16.msra.mxu0 %v572
    %681 = vmatprep.subr.bf16.mxu0 %v569
    %682 = vmatpush1.bf16.msra.mxu0 %v568
    %683 = vmatprep.subr.bf16.mxu0 %v565
    %684 = vmatpush1.bf16.msra.mxu0 %v564
    %685 = vmatprep.subr.bf16.mxu0 0
    %686 = vmatpush2.bf16.msra.mxu0 0
    %687 = vmatprep.subr.bf16.mxu0 0
    %688 = vmatpush2.bf16.msra.mxu0 0
    %689 = vmatprep.subr.bf16.mxu0 0
    %690 = vmatpush2.bf16.msra.mxu0 0
    %691 = vmatprep.subr.bf16.mxu0 0
    %692 = vmatpush2.bf16.msra.mxu0 0
    %693 = vmatprep.subr.bf16.mxu0 0
    %694 = vmatpush2.bf16.msra.mxu0 0
    %695 = vmatprep.subr.bf16.mxu0 0
    %696 = vmatpush2.bf16.msra.mxu0 0
    %697 = vmatprep.subr.bf16.mxu0 0
    %698 = vmatpush2.bf16.msra.mxu0 0
    %699 = vmatprep.subr.bf16.mxu0 0
    %700 = vmatpush2.bf16.msra.mxu0 0
    %701 = vmatprep.mubr.bf16.mxu0 0
    %702 = vmatmul.mubr.bf16.gmra.mxu0 %v411
    %v703 = vpop.f32.mrf.mxu0
    %v704 = vadd.f32 %v457, %v703
    %v705 = vpop.f32.mrf.mxu0
    %v706 = vadd.f32 %v461, %v705
    %v707 = vpop.f32.mrf.mxu0
    %v708 = vadd.f32 %v457, %v707
    %v709 = vpop.f32.mrf.mxu0
    %v710 = vadd.f32 %v461, %v709
    %711 = vdwg.mxu0
    %v712 = vxor.u32 %v661, 2147483648
    %v713 = vxor.u32 %v663, 2147483648
    %v714 = vxor.u32 %v704, 2147483648
    %v715 = vxor.u32 %v706, 2147483648
    %v716 = vxor.u32 %v665, 2147483648
    %v717 = vxor.u32 %v667, 2147483648
    %v718 = vxor.u32 %v708, 2147483648
    %v719 = vxor.u32 %v710, 2147483648
    %v720 = vmul.f32 %v712, 1.442695
    %v721 = vpow.pop %v720
    %v722 = vmul.f32 %v713, 1.442695
    %v723 = vpow.pop %v722
    %v724 = vmul.f32 %v714, 1.442695
    %v725 = vpow.pop %v724
    %v726 = vmul.f32 %v715, 1.442695
    %v727 = vpow.pop %v726
    %v728 = vmul.f32 %v716, 1.442695
    %v729 = vpow.pop %v728
    %v730 = vmul.f32 %v717, 1.442695
    %v731 = vpow.pop %v730
    %v732 = vmul.f32 %v718, 1.442695
    %v733 = vpow.pop %v732
    %v734 = vmul.f32 %v719, 1.442695
    %v735 = vpow.pop %v734
    %v736 = vadd.f32 %v721, 1.0
    %v737 = vadd.f32 %v723, 1.0
    %v738 = vadd.f32 %v725, 1.0
    %v739 = vadd.f32 %v727, 1.0
    %v740 = vadd.f32 %v729, 1.0
    %v741 = vadd.f32 %v731, 1.0
    %v742 = vadd.f32 %v733, 1.0
    %v743 = vadd.f32 %v735, 1.0
    %v744 = vrcp.pop %v736
    %v745 = vmul.f32 1.0, %v744
    %v746 = vrcp.pop %v737
    %v747 = vmul.f32 1.0, %v746
    %v748 = vrcp.pop %v738
    %v749 = vmul.f32 1.0, %v748
    %v750 = vrcp.pop %v739
    %v751 = vmul.f32 1.0, %v750
    %v752 = vrcp.pop %v740
    %v753 = vmul.f32 1.0, %v752
    %v754 = vrcp.pop %v741
    %v755 = vmul.f32 1.0, %v754
    %v756 = vrcp.pop %v742
    %v757 = vmul.f32 1.0, %v756
    %v758 = vrcp.pop %v743
    %v759 = vmul.f32 1.0, %v758
    %v760 = vmul.f32 %v661, %v745
    %v761 = vmul.f32 %v663, %v747
    %v762 = vmul.f32 %v704, %v749
    %v763 = vmul.f32 %v706, %v751
    %v764 = vmul.f32 %v665, %v753
    %v765 = vmul.f32 %v667, %v755
    %v766 = vmul.f32 %v708, %v757
    %v767 = vmul.f32 %v710, %v759
    %v768 = vpack.c.bf16 %v764, %v760
    %v769 = vpack.c.bf16 %v765, %v761
    %v770 = vpack.c.bf16 %v766, %v762
    %v771 = vpack.c.bf16 %v767, %v763
    %v772 = vld [vmem:[#allocation9] sm:$0xf]
    %v773 = vld [vmem:[#allocation9 + $0x4] sm:$0xf]
    %v774 = vld [vmem:[#allocation9 + $0x8] sm:$0xf]
    %v775 = vld [vmem:[#allocation9 + $0xc] sm:$0xf]
    %v776 = vld [vmem:[#allocation9 + $0x10] sm:$0xf]
    %v777 = vld [vmem:[#allocation9 + $0x14] sm:$0xf]
    %v778 = vld [vmem:[#allocation9 + $0x18] sm:$0xf]
    %v779 = vld [vmem:[#allocation9 + $0x1c] sm:$0xf]
    %v780 = vld [vmem:[#allocation9 + $0x20] sm:$0xf]
    %v781 = vld [vmem:[#allocation9 + $0x24] sm:$0xf]
    %v782 = vld [vmem:[#allocation9 + $0x28] sm:$0xf]
    %v783 = vld [vmem:[#allocation9 + $0x2c] sm:$0xf]
    %v784 = vld [vmem:[#allocation9 + $0x30] sm:$0xf]
    %v785 = vld [vmem:[#allocation9 + $0x34] sm:$0xf]
    %v786 = vld [vmem:[#allocation9 + $0x38] sm:$0xf]
    %v787 = vld [vmem:[#allocation9 + $0x3c] sm:$0xf]
    %v788 = vld [vmem:[#allocation9 + $0x40] sm:$0xf]
    %v789 = vld [vmem:[#allocation9 + $0x44] sm:$0xf]
    %v790 = vld [vmem:[#allocation9 + $0x48] sm:$0xf]
    %v791 = vld [vmem:[#allocation9 + $0x4c] sm:$0xf]
    %v792 = vld [vmem:[#allocation9 + $0x50] sm:$0xf]
    %v793 = vld [vmem:[#allocation9 + $0x54] sm:$0xf]
    %v794 = vld [vmem:[#allocation9 + $0x58] sm:$0xf]
    %v795 = vld [vmem:[#allocation9 + $0x5c] sm:$0xf]
    %v796 = vld [vmem:[#allocation9 + $0x60] sm:$0xf]
    %v797 = vld [vmem:[#allocation9 + $0x64] sm:$0xf]
    %v798 = vld [vmem:[#allocation9 + $0x68] sm:$0xf]
    %v799 = vld [vmem:[#allocation9 + $0x6c] sm:$0xf]
    %v800 = vld [vmem:[#allocation9 + $0x70] sm:$0xf]
    %v801 = vld [vmem:[#allocation9 + $0x74] sm:$0xf]
    %v802 = vld [vmem:[#allocation9 + $0x78] sm:$0xf]
    %v803 = vld [vmem:[#allocation9 + $0x7c] sm:$0xf]
    %v804 = vld [vmem:[#allocation9 + $0x80] sm:$0xf]
    %v805 = vld [vmem:[#allocation9 + $0x84] sm:$0xf]
    %v806 = vld [vmem:[#allocation9 + $0x88] sm:$0xf]
    %v807 = vld [vmem:[#allocation9 + $0x8c] sm:$0xf]
    %v808 = vld [vmem:[#allocation9 + $0x90] sm:$0xf]
    %v809 = vld [vmem:[#allocation9 + $0x94] sm:$0xf]
    %v810 = vld [vmem:[#allocation9 + $0x98] sm:$0xf]
    %v811 = vld [vmem:[#allocation9 + $0x9c] sm:$0xf]
    %v812 = vld [vmem:[#allocation9 + $0xa0] sm:$0xf]
    %v813 = vld [vmem:[#allocation9 + $0xa4] sm:$0xf]
    %v814 = vld [vmem:[#allocation9 + $0xa8] sm:$0xf]
    %v815 = vld [vmem:[#allocation9 + $0xac] sm:$0xf]
    %v816 = vld [vmem:[#allocation9 + $0xb0] sm:$0xf]
    %v817 = vld [vmem:[#allocation9 + $0xb4] sm:$0xf]
    %v818 = vld [vmem:[#allocation9 + $0xb8] sm:$0xf]
    %v819 = vld [vmem:[#allocation9 + $0xbc] sm:$0xf]
    %v820 = vld [vmem:[#allocation9 + $0xc0] sm:$0xf]
    %v821 = vld [vmem:[#allocation9 + $0xc4] sm:$0xf]
    %v822 = vld [vmem:[#allocation9 + $0xc8] sm:$0xf]
    %v823 = vld [vmem:[#allocation9 + $0xcc] sm:$0xf]
    %v824 = vld [vmem:[#allocation9 + $0xd0] sm:$0xf]
    %v825 = vld [vmem:[#allocation9 + $0xd4] sm:$0xf]
    %v826 = vld [vmem:[#allocation9 + $0xd8] sm:$0xf]
    %v827 = vld [vmem:[#allocation9 + $0xdc] sm:$0xf]
    %v828 = vld [vmem:[#allocation9 + $0xe0] sm:$0xf]
    %v829 = vld [vmem:[#allocation9 + $0xe4] sm:$0xf]
    %v830 = vld [vmem:[#allocation9 + $0xe8] sm:$0xf]
    %v831 = vld [vmem:[#allocation9 + $0xec] sm:$0xf]
    %v832 = vld [vmem:[#allocation9 + $0xf0] sm:$0xf]
    %v833 = vld [vmem:[#allocation9 + $0xf4] sm:$0xf]
    %v834 = vld [vmem:[#allocation9 + $0xf8] sm:$0xf]
    %v835 = vld [vmem:[#allocation9 + $0xfc] sm:$0xf]
    %v836 = vld [vmem:[#allocation11] sm:$0x1]
    %v838 = vlaneseq
    %v839 = vshrl.u32 %v838, 7
    %v840 = vsub.s32 0, %v839
    %v841 = vrot.slane %v836, %v840
    %v907 = vunpack.c.l.b16 %v772
    %v908 = vunpack.c.l.b16 %v773
    %v909 = vunpack.c.l.b16 %v774
    %v910 = vunpack.c.l.b16 %v775
    %v911 = vunpack.c.l.b16 %v776
    %v912 = vunpack.c.l.b16 %v777
    %v913 = vunpack.c.l.b16 %v778
    %v914 = vunpack.c.l.b16 %v779
    %v915 = vunpack.c.l.b16 %v780
    %v916 = vunpack.c.l.b16 %v781
    %v917 = vunpack.c.l.b16 %v782
    %v918 = vunpack.c.l.b16 %v783
    %v919 = vunpack.c.l.b16 %v784
    %v920 = vunpack.c.l.b16 %v785
    %v921 = vunpack.c.l.b16 %v786
    %v922 = vunpack.c.l.b16 %v787
    %v923 = vunpack.c.l.b16 %v788
    %v924 = vunpack.c.l.b16 %v789
    %v925 = vunpack.c.l.b16 %v790
    %v926 = vunpack.c.l.b16 %v791
    %v927 = vunpack.c.l.b16 %v792
    %v928 = vunpack.c.l.b16 %v793
    %v929 = vunpack.c.l.b16 %v794
    %v930 = vunpack.c.l.b16 %v795
    %v931 = vunpack.c.l.b16 %v796
    %v932 = vunpack.c.l.b16 %v797
    %v933 = vunpack.c.l.b16 %v798
    %v934 = vunpack.c.l.b16 %v799
    %v935 = vunpack.c.l.b16 %v800
    %v936 = vunpack.c.l.b16 %v801
    %v937 = vunpack.c.l.b16 %v802
    %v938 = vunpack.c.l.b16 %v803
    %v939 = vunpack.c.l.b16 %v804
    %v940 = vunpack.c.l.b16 %v805
    %v941 = vunpack.c.l.b16 %v806
    %v942 = vunpack.c.l.b16 %v807
    %v943 = vunpack.c.l.b16 %v808
    %v944 = vunpack.c.l.b16 %v809
    %v945 = vunpack.c.l.b16 %v810
    %v946 = vunpack.c.l.b16 %v811
    %v947 = vunpack.c.l.b16 %v812
    %v948 = vunpack.c.l.b16 %v813
    %v949 = vunpack.c.l.b16 %v814
    %v950 = vunpack.c.l.b16 %v815
    %v951 = vunpack.c.l.b16 %v816
    %v952 = vunpack.c.l.b16 %v817
    %v953 = vunpack.c.l.b16 %v818
    %v954 = vunpack.c.l.b16 %v819
    %v955 = vunpack.c.l.b16 %v820
    %v956 = vunpack.c.l.b16 %v821
    %v957 = vunpack.c.l.b16 %v822
    %v958 = vunpack.c.l.b16 %v823
    %v959 = vunpack.c.l.b16 %v824
    %v960 = vunpack.c.l.b16 %v825
    %v961 = vunpack.c.l.b16 %v826
    %v962 = vunpack.c.l.b16 %v827
    %v963 = vunpack.c.l.b16 %v828
    %v964 = vunpack.c.l.b16 %v829
    %v965 = vunpack.c.l.b16 %v830
    %v966 = vunpack.c.l.b16 %v831
    %v967 = vunpack.c.l.b16 %v832
    %v968 = vunpack.c.l.b16 %v833
    %v969 = vunpack.c.l.b16 %v834
    %v970 = vunpack.c.l.b16 %v835
    %v971 = vpack.c.b16 %v908, %v907
    %v972 = vpack.c.b16 %v910, %v909
    %v973 = vpack.c.b16 %v912, %v911
    %v974 = vpack.c.b16 %v914, %v913
    %v975 = vpack.c.b16 %v916, %v915
    %v976 = vpack.c.b16 %v918, %v917
    %v977 = vpack.c.b16 %v920, %v919
    %v978 = vpack.c.b16 %v922, %v921
    %v979 = vpack.c.b16 %v924, %v923
    %v980 = vpack.c.b16 %v926, %v925
    %v981 = vpack.c.b16 %v928, %v927
    %v982 = vpack.c.b16 %v930, %v929
    %v983 = vpack.c.b16 %v932, %v931
    %v984 = vpack.c.b16 %v934, %v933
    %v985 = vpack.c.b16 %v936, %v935
    %v986 = vpack.c.b16 %v938, %v937
    %v987 = vpack.c.b16 %v940, %v939
    %v988 = vpack.c.b16 %v942, %v941
    %v989 = vpack.c.b16 %v944, %v943
    %v990 = vpack.c.b16 %v946, %v945
    %v991 = vpack.c.b16 %v948, %v947
    %v992 = vpack.c.b16 %v950, %v949
    %v993 = vpack.c.b16 %v952, %v951
    %v994 = vpack.c.b16 %v954, %v953
    %v995 = vpack.c.b16 %v956, %v955
    %v996 = vpack.c.b16 %v958, %v957
    %v997 = vpack.c.b16 %v960, %v959
    %v998 = vpack.c.b16 %v962, %v961
    %v999 = vpack.c.b16 %v964, %v963
    %v1000 = vpack.c.b16 %v966, %v965
    %v1001 = vpack.c.b16 %v968, %v967
    %v1002 = vpack.c.b16 %v970, %v969
    %1035 = vmatprep.subr.bf16.mxu0 0
    %1036 = vmatpush1.bf16.msra.mxu0 %v978
    %1037 = vmatprep.subr.bf16.mxu0 0
    %1038 = vmatpush1.bf16.msra.mxu0 %v977
    %1039 = vmatprep.subr.bf16.mxu0 0
    %1040 = vmatpush1.bf16.msra.mxu0 %v976
    %1041 = vmatprep.subr.bf16.mxu0 0
    %1042 = vmatpush1.bf16.msra.mxu0 %v975
    %1043 = vmatprep.subr.bf16.mxu0 0
    %1044 = vmatpush1.bf16.msra.mxu0 %v974
    %1045 = vmatprep.subr.bf16.mxu0 0
    %1046 = vmatpush1.bf16.msra.mxu0 %v973
    %1047 = vmatprep.subr.bf16.mxu0 0
    %1048 = vmatpush1.bf16.msra.mxu0 %v972
    %1049 = vmatprep.subr.bf16.mxu0 0
    %1050 = vmatpush1.bf16.msra.mxu0 %v971
    %1051 = vmatprep.subr.bf16.mxu0 0
    %1052 = vmatpush2.bf16.msra.mxu0 %v986
    %1053 = vmatprep.subr.bf16.mxu0 0
    %1054 = vmatpush2.bf16.msra.mxu0 %v985
    %1055 = vmatprep.subr.bf16.mxu0 0
    %1056 = vmatpush2.bf16.msra.mxu0 %v984
    %1057 = vmatprep.subr.bf16.mxu0 0
    %1058 = vmatpush2.bf16.msra.mxu0 %v983
    %1059 = vmatprep.subr.bf16.mxu0 0
    %1060 = vmatpush2.bf16.msra.mxu0 %v982
    %1061 = vmatprep.subr.bf16.mxu0 0
    %1062 = vmatpush2.bf16.msra.mxu0 %v981
    %1063 = vmatprep.subr.bf16.mxu0 0
    %1064 = vmatpush2.bf16.msra.mxu0 %v980
    %1065 = vmatprep.subr.bf16.mxu0 0
    %1066 = vmatpush2.bf16.msra.mxu0 %v979
    %1067 = vmatprep.mubr.bf16.mxu0 %v769
    %1068 = vmatmul.mubr.bf16.gmra.mxu0 %v768
    %v1069 = vpop.f32.mrf.mxu0
    %v1070 = vadd.f32 %v841, %v1069
    %v1071 = vpop.f32.mrf.mxu0
    %v1072 = vpop.f32.mrf.mxu0
    %v1073 = vadd.f32 %v841, %v1072
    %v1074 = vpop.f32.mrf.mxu0
    %1075 = vdwg.mxu0
    %1076 = vmatprep.subr.bf16.mxu0 0
    %1077 = vmatpush1.bf16.msra.mxu0 %v994
    %1078 = vmatprep.subr.bf16.mxu0 0
    %1079 = vmatpush1.bf16.msra.mxu0 %v993
    %1080 = vmatprep.subr.bf16.mxu0 0
    %1081 = vmatpush1.bf16.msra.mxu0 %v992
    %1082 = vmatprep.subr.bf16.mxu0 0
    %1083 = vmatpush1.bf16.msra.mxu0 %v991
    %1084 = vmatprep.subr.bf16.mxu0 0
    %1085 = vmatpush1.bf16.msra.mxu0 %v990
    %1086 = vmatprep.subr.bf16.mxu0 0
    %1087 = vmatpush1.bf16.msra.mxu0 %v989
    %1088 = vmatprep.subr.bf16.mxu0 0
    %1089 = vmatpush1.bf16.msra.mxu0 %v988
    %1090 = vmatprep.subr.bf16.mxu0 0
    %1091 = vmatpush1.bf16.msra.mxu0 %v987
    %1092 = vmatprep.subr.bf16.mxu0 0
    %1093 = vmatpush2.bf16.msra.mxu0 %v1002
    %1094 = vmatprep.subr.bf16.mxu0 0
    %1095 = vmatpush2.bf16.msra.mxu0 %v1001
    %1096 = vmatprep.subr.bf16.mxu0 0
    %1097 = vmatpush2.bf16.msra.mxu0 %v1000
    %1098 = vmatprep.subr.bf16.mxu0 0
    %1099 = vmatpush2.bf16.msra.mxu0 %v999
    %1100 = vmatprep.subr.bf16.mxu0 0
    %1101 = vmatpush2.bf16.msra.mxu0 %v998
    %1102 = vmatprep.subr.bf16.mxu0 0
    %1103 = vmatpush2.bf16.msra.mxu0 %v997
    %1104 = vmatprep.subr.bf16.mxu0 0
    %1105 = vmatpush2.bf16.msra.mxu0 %v996
    %1106 = vmatprep.subr.bf16.mxu0 0
    %1107 = vmatpush2.bf16.msra.mxu0 %v995
    %1108 = vmatprep.mubr.bf16.mxu0 %v771
    %1109 = vmatmul.mubr.bf16.gmra.mxu0 %v770
    %v1110 = vpop.f32.mrf.mxu0
    %v1111 = vadd.f32 %v1070, %v1110
    %v1112 = vpop.f32.mrf.mxu0
    %v1113 = vpop.f32.mrf.mxu0
    %v1114 = vadd.f32 %v1073, %v1113
    %v1115 = vpop.f32.mrf.mxu0
    %1116 = vdwg.mxu0
    %v1117 = vadd.f32 %v1111, %v409
    %v1118 = vadd.f32 %v1114, %v410
    %v1119 = vmul.f32 %v1117, %v1117
    %v1120 = vmul.f32 %v1118, %v1118
    %1121 = vadd.xlane.f32.xlu0 %v1119
    %v1122 = vpop.xlane.xlu0 %1121
    %1123 = vadd.xlane.f32.xlu0 %v1120
    %v1124 = vpop.xlane.xlu0 %1123
    %v1125 = vrcp.pop 128.0
    %v1126 = vmul.f32 %v1122, %v1125
    %v1127 = vmul.f32 %v1124, %v1125
    %v1128 = vld [vmem:[%s6] sm:$0x1]
    %v1129 = vadd.f32 %v1126, 1e-06
    %v1130 = vadd.f32 %v1127, 1e-06
    %v1131 = vrsqrt.pop %v1129
    %v1132 = vrsqrt.pop %v1130
    %v1133 = vmul.f32 %v1117, %v1131
    %v1134 = vmul.f32 %v1118, %v1132
    %v1136 = vlaneseq
    %v1137 = vshrl.u32 %v1136, 7
    %v1138 = vsub.s32 0, %v1137
    %v1139 = vrot.slane %v1128, %v1138
    %v1141 = vmul.f32 %v1139, %v1133
    %v1142 = vmul.f32 %v1139, %v1134
    %v1143 = vpack.c.bf16 %v1142, %v1141
    %s1144 = scalar_lea.vmem [#allocation6], 256
    %v1145 = vld [vmem:[%s1144] sm:$0xff]
    %v1146 = vld [vmem:[%s1144 + $0x8] sm:$0xff]
    %v1147 = vld [vmem:[%s1144 + $0x10] sm:$0xff]
    %v1148 = vld [vmem:[%s1144 + $0x18] sm:$0xff]
    %v1149 = vld [vmem:[%s1144 + $0x20] sm:$0xff]
    %v1150 = vld [vmem:[%s1144 + $0x28] sm:$0xff]
    %v1151 = vld [vmem:[%s1144 + $0x30] sm:$0xff]
    %v1152 = vld [vmem:[%s1144 + $0x38] sm:$0xff]
    %v1153 = vld [vmem:[%s1144 + $0x40] sm:$0xff]
    %v1154 = vld [vmem:[%s1144 + $0x48] sm:$0xff]
    %v1155 = vld [vmem:[%s1144 + $0x50] sm:$0xff]
    %v1156 = vld [vmem:[%s1144 + $0x58] sm:$0xff]
    %v1157 = vld [vmem:[%s1144 + $0x60] sm:$0xff]
    %v1158 = vld [vmem:[%s1144 + $0x68] sm:$0xff]
    %v1159 = vld [vmem:[%s1144 + $0x70] sm:$0xff]
    %v1160 = vld [vmem:[%s1144 + $0x78] sm:$0xff]
    %v1161 = vld [vmem:[%s1144 + $0x80] sm:$0xff]
    %v1162 = vld [vmem:[%s1144 + $0x88] sm:$0xff]
    %v1163 = vld [vmem:[%s1144 + $0x90] sm:$0xff]
    %v1164 = vld [vmem:[%s1144 + $0x98] sm:$0xff]
    %v1165 = vld [vmem:[%s1144 + $0xa0] sm:$0xff]
    %v1166 = vld [vmem:[%s1144 + $0xa8] sm:$0xff]
    %v1167 = vld [vmem:[%s1144 + $0xb0] sm:$0xff]
    %v1168 = vld [vmem:[%s1144 + $0xb8] sm:$0xff]
    %v1169 = vld [vmem:[%s1144 + $0xc0] sm:$0xff]
    %v1170 = vld [vmem:[%s1144 + $0xc8] sm:$0xff]
    %v1171 = vld [vmem:[%s1144 + $0xd0] sm:$0xff]
    %v1172 = vld [vmem:[%s1144 + $0xd8] sm:$0xff]
    %v1173 = vld [vmem:[%s1144 + $0xe0] sm:$0xff]
    %v1174 = vld [vmem:[%s1144 + $0xe8] sm:$0xff]
    %v1175 = vld [vmem:[%s1144 + $0xf0] sm:$0xff]
    %v1176 = vld [vmem:[%s1144 + $0xf8] sm:$0xff]
    %s1177 = scalar_lea.vmem %s3, 4
    %v1178 = vld [vmem:[%s1177] sm:$0xf]
    %v1180 = vlaneseq
    %v1181 = vshrl.u32 %v1180, 7
    %v1182 = vsub.s32 0, %v1181
    %v1183 = vrot.slane %v1178, %v1182
    %v1184 = vlaneseq
    %v1185 = vshrl.u32 %v1184, 7
    %v1186 = vsub.s32 1, %v1185
    %v1187 = vrot.slane %v1178, %v1186
    %v1188 = vlaneseq
    %v1189 = vshrl.u32 %v1188, 7
    %v1190 = vsub.s32 2, %v1189
    %v1191 = vrot.slane %v1178, %v1190
    %v1192 = vlaneseq
    %v1193 = vshrl.u32 %v1192, 7
    %v1194 = vsub.s32 3, %v1193
    %v1195 = vrot.slane %v1178, %v1194
    %v1232 = vunpack.c.l.b16 %v1145
    %v1233 = vunpack.c.h.b16 %v1145
    %v1234 = vunpack.c.l.b16 %v1146
    %v1235 = vunpack.c.h.b16 %v1146
    %v1236 = vunpack.c.l.b16 %v1147
    %v1237 = vunpack.c.h.b16 %v1147
    %v1238 = vunpack.c.l.b16 %v1148
    %v1239 = vunpack.c.h.b16 %v1148
    %v1240 = vunpack.c.l.b16 %v1149
    %v1241 = vunpack.c.h.b16 %v1149
    %v1242 = vunpack.c.l.b16 %v1150
    %v1243 = vunpack.c.h.b16 %v1150
    %v1244 = vunpack.c.l.b16 %v1151
    %v1245 = vunpack.c.h.b16 %v1151
    %v1246 = vunpack.c.l.b16 %v1152
    %v1247 = vunpack.c.h.b16 %v1152
    %v1248 = vunpack.c.l.b16 %v1153
    %v1249 = vunpack.c.h.b16 %v1153
    %v1250 = vunpack.c.l.b16 %v1154
    %v1251 = vunpack.c.h.b16 %v1154
    %v1252 = vunpack.c.l.b16 %v1155
    %v1253 = vunpack.c.h.b16 %v1155
    %v1254 = vunpack.c.l.b16 %v1156
    %v1255 = vunpack.c.h.b16 %v1156
    %v1256 = vunpack.c.l.b16 %v1157
    %v1257 = vunpack.c.h.b16 %v1157
    %v1258 = vunpack.c.l.b16 %v1158
    %v1259 = vunpack.c.h.b16 %v1158
    %v1260 = vunpack.c.l.b16 %v1159
    %v1261 = vunpack.c.h.b16 %v1159
    %v1262 = vunpack.c.l.b16 %v1160
    %v1263 = vunpack.c.h.b16 %v1160
    %v1264 = vunpack.c.l.b16 %v1161
    %v1265 = vunpack.c.h.b16 %v1161
    %v1266 = vunpack.c.l.b16 %v1162
    %v1267 = vunpack.c.h.b16 %v1162
    %v1268 = vunpack.c.l.b16 %v1163
    %v1269 = vunpack.c.h.b16 %v1163
    %v1270 = vunpack.c.l.b16 %v1164
    %v1271 = vunpack.c.h.b16 %v1164
    %v1272 = vunpack.c.l.b16 %v1165
    %v1273 = vunpack.c.h.b16 %v1165
    %v1274 = vunpack.c.l.b16 %v1166
    %v1275 = vunpack.c.h.b16 %v1166
    %v1276 = vunpack.c.l.b16 %v1167
    %v1277 = vunpack.c.h.b16 %v1167
    %v1278 = vunpack.c.l.b16 %v1168
    %v1279 = vunpack.c.h.b16 %v1168
    %v1280 = vunpack.c.l.b16 %v1169
    %v1281 = vunpack.c.h.b16 %v1169
    %v1282 = vunpack.c.l.b16 %v1170
    %v1283 = vunpack.c.h.b16 %v1170
    %v1284 = vunpack.c.l.b16 %v1171
    %v1285 = vunpack.c.h.b16 %v1171
    %v1286 = vunpack.c.l.b16 %v1172
    %v1287 = vunpack.c.h.b16 %v1172
    %v1288 = vunpack.c.l.b16 %v1173
    %v1289 = vunpack.c.h.b16 %v1173
    %v1290 = vunpack.c.l.b16 %v1174
    %v1291 = vunpack.c.h.b16 %v1174
    %v1292 = vunpack.c.l.b16 %v1175
    %v1293 = vunpack.c.h.b16 %v1175
    %v1294 = vunpack.c.l.b16 %v1176
    %v1295 = vunpack.c.h.b16 %v1176
    %v1296 = vpack.c.b16 %v1236, %v1232
    %v1297 = vpack.c.b16 %v1237, %v1233
    %v1298 = vpack.c.b16 %v1238, %v1234
    %v1299 = vpack.c.b16 %v1239, %v1235
    %v1300 = vpack.c.b16 %v1244, %v1240
    %v1301 = vpack.c.b16 %v1245, %v1241
    %v1302 = vpack.c.b16 %v1246, %v1242
    %v1303 = vpack.c.b16 %v1247, %v1243
    %v1304 = vpack.c.b16 %v1252, %v1248
    %v1305 = vpack.c.b16 %v1253, %v1249
    %v1306 = vpack.c.b16 %v1254, %v1250
    %v1307 = vpack.c.b16 %v1255, %v1251
    %v1308 = vpack.c.b16 %v1260, %v1256
    %v1309 = vpack.c.b16 %v1261, %v1257
    %v1310 = vpack.c.b16 %v1262, %v1258
    %v1311 = vpack.c.b16 %v1263, %v1259
    %v1312 = vpack.c.b16 %v1268, %v1264
    %v1313 = vpack.c.b16 %v1269, %v1265
    %v1314 = vpack.c.b16 %v1270, %v1266
    %v1315 = vpack.c.b16 %v1271, %v1267
    %v1316 = vpack.c.b16 %v1276, %v1272
    %v1317 = vpack.c.b16 %v1277, %v1273
    %v1318 = vpack.c.b16 %v1278, %v1274
    %v1319 = vpack.c.b16 %v1279, %v1275
    %v1320 = vpack.c.b16 %v1284, %v1280
    %v1321 = vpack.c.b16 %v1285, %v1281
    %v1322 = vpack.c.b16 %v1286, %v1282
    %v1323 = vpack.c.b16 %v1287, %v1283
    %v1324 = vpack.c.b16 %v1292, %v1288
    %v1325 = vpack.c.b16 %v1293, %v1289
    %v1326 = vpack.c.b16 %v1294, %v1290
    %v1327 = vpack.c.b16 %v1295, %v1291
    %1360 = vmatprep.subr.bf16.mxu0 %v1325
    %1361 = vmatpush1.bf16.msra.mxu0 %v1324
    %1362 = vmatprep.subr.bf16.mxu0 %v1321
    %1363 = vmatpush1.bf16.msra.mxu0 %v1320
    %1364 = vmatprep.subr.bf16.mxu0 %v1317
    %1365 = vmatpush1.bf16.msra.mxu0 %v1316
    %1366 = vmatprep.subr.bf16.mxu0 %v1313
    %1367 = vmatpush1.bf16.msra.mxu0 %v1312
    %1368 = vmatprep.subr.bf16.mxu0 %v1309
    %1369 = vmatpush1.bf16.msra.mxu0 %v1308
    %1370 = vmatprep.subr.bf16.mxu0 %v1305
    %1371 = vmatpush1.bf16.msra.mxu0 %v1304
    %1372 = vmatprep.subr.bf16.mxu0 %v1301
    %1373 = vmatpush1.bf16.msra.mxu0 %v1300
    %1374 = vmatprep.subr.bf16.mxu0 %v1297
    %1375 = vmatpush1.bf16.msra.mxu0 %v1296
    %1376 = vmatprep.subr.bf16.mxu0 0
    %1377 = vmatpush2.bf16.msra.mxu0 0
    %1378 = vmatprep.subr.bf16.mxu0 0
    %1379 = vmatpush2.bf16.msra.mxu0 0
    %1380 = vmatprep.subr.bf16.mxu0 0
    %1381 = vmatpush2.bf16.msra.mxu0 0
    %1382 = vmatprep.subr.bf16.mxu0 0
    %1383 = vmatpush2.bf16.msra.mxu0 0
    %1384 = vmatprep.subr.bf16.mxu0 0
    %1385 = vmatpush2.bf16.msra.mxu0 0
    %1386 = vmatprep.subr.bf16.mxu0 0
    %1387 = vmatpush2.bf16.msra.mxu0 0
    %1388 = vmatprep.subr.bf16.mxu0 0
    %1389 = vmatpush2.bf16.msra.mxu0 0
    %1390 = vmatprep.subr.bf16.mxu0 0
    %1391 = vmatpush2.bf16.msra.mxu0 0
    %1392 = vmatprep.mubr.bf16.mxu0 0
    %1393 = vmatmul.mubr.bf16.gmra.mxu0 %v1143
    %v1394 = vpop.f32.mrf.mxu0
    %v1395 = vadd.f32 %v1183, %v1394
    %v1396 = vpop.f32.mrf.mxu0
    %v1397 = vadd.f32 %v1187, %v1396
    %v1398 = vpop.f32.mrf.mxu0
    %v1399 = vadd.f32 %v1183, %v1398
    %v1400 = vpop.f32.mrf.mxu0
    %v1401 = vadd.f32 %v1187, %v1400
    %1402 = vdwg.mxu0
    %1403 = vmatprep.subr.bf16.mxu0 %v1327
    %1404 = vmatpush1.bf16.msra.mxu0 %v1326
    %1405 = vmatprep.subr.bf16.mxu0 %v1323
    %1406 = vmatpush1.bf16.msra.mxu0 %v1322
    %1407 = vmatprep.subr.bf16.mxu0 %v1319
    %1408 = vmatpush1.bf16.msra.mxu0 %v1318
    %1409 = vmatprep.subr.bf16.mxu0 %v1315
    %1410 = vmatpush1.bf16.msra.mxu0 %v1314
    %1411 = vmatprep.subr.bf16.mxu0 %v1311
    %1412 = vmatpush1.bf16.msra.mxu0 %v1310
    %1413 = vmatprep.subr.bf16.mxu0 %v1307
    %1414 = vmatpush1.bf16.msra.mxu0 %v1306
    %1415 = vmatprep.subr.bf16.mxu0 %v1303
    %1416 = vmatpush1.bf16.msra.mxu0 %v1302
    %1417 = vmatprep.subr.bf16.mxu0 %v1299
    %1418 = vmatpush1.bf16.msra.mxu0 %v1298
    %1419 = vmatprep.subr.bf16.mxu0 0
    %1420 = vmatpush2.bf16.msra.mxu0 0
    %1421 = vmatprep.subr.bf16.mxu0 0
    %1422 = vmatpush2.bf16.msra.mxu0 0
    %1423 = vmatprep.subr.bf16.mxu0 0
    %1424 = vmatpush2.bf16.msra.mxu0 0
    %1425 = vmatprep.subr.bf16.mxu0 0
    %1426 = vmatpush2.bf16.msra.mxu0 0
    %1427 = vmatprep.subr.bf16.mxu0 0
    %1428 = vmatpush2.bf16.msra.mxu0 0
    %1429 = vmatprep.subr.bf16.mxu0 0
    %1430 = vmatpush2.bf16.msra.mxu0 0
    %1431 = vmatprep.subr.bf16.mxu0 0
    %1432 = vmatpush2.bf16.msra.mxu0 0
    %1433 = vmatprep.subr.bf16.mxu0 0
    %1434 = vmatpush2.bf16.msra.mxu0 0
    %1435 = vmatprep.mubr.bf16.mxu0 0
    %1436 = vmatmul.mubr.bf16.gmra.mxu0 %v1143
    %v1437 = vpop.f32.mrf.mxu0
    %v1438 = vadd.f32 %v1191, %v1437
    %v1439 = vpop.f32.mrf.mxu0
    %v1440 = vadd.f32 %v1195, %v1439
    %v1441 = vpop.f32.mrf.mxu0
    %v1442 = vadd.f32 %v1191, %v1441
    %v1443 = vpop.f32.mrf.mxu0
    %v1444 = vadd.f32 %v1195, %v1443
    %1445 = vdwg.mxu0
    %v1446 = vxor.u32 %v1395, 2147483648
    %v1447 = vxor.u32 %v1397, 2147483648
    %v1448 = vxor.u32 %v1438, 2147483648
    %v1449 = vxor.u32 %v1440, 2147483648
    %v1450 = vxor.u32 %v1399, 2147483648
    %v1451 = vxor.u32 %v1401, 2147483648
    %v1452 = vxor.u32 %v1442, 2147483648
    %v1453 = vxor.u32 %v1444, 2147483648
    %v1454 = vmul.f32 %v1446, 1.442695
    %v1455 = vpow.pop %v1454
    %v1456 = vmul.f32 %v1447, 1.442695
    %v1457 = vpow.pop %v1456
    %v1458 = vmul.f32 %v1448, 1.442695
    %v1459 = vpow.pop %v1458
    %v1460 = vmul.f32 %v1449, 1.442695
    %v1461 = vpow.pop %v1460
    %v1462 = vmul.f32 %v1450, 1.442695
    %v1463 = vpow.pop %v1462
    %v1464 = vmul.f32 %v1451, 1.442695
    %v1465 = vpow.pop %v1464
    %v1466 = vmul.f32 %v1452, 1.442695
    %v1467 = vpow.pop %v1466
    %v1468 = vmul.f32 %v1453, 1.442695
    %v1469 = vpow.pop %v1468
    %v1470 = vadd.f32 %v1455, 1.0
    %v1471 = vadd.f32 %v1457, 1.0
    %v1472 = vadd.f32 %v1459, 1.0
    %v1473 = vadd.f32 %v1461, 1.0
    %v1474 = vadd.f32 %v1463, 1.0
    %v1475 = vadd.f32 %v1465, 1.0
    %v1476 = vadd.f32 %v1467, 1.0
    %v1477 = vadd.f32 %v1469, 1.0
    %v1478 = vrcp.pop %v1470
    %v1479 = vmul.f32 1.0, %v1478
    %v1480 = vrcp.pop %v1471
    %v1481 = vmul.f32 1.0, %v1480
    %v1482 = vrcp.pop %v1472
    %v1483 = vmul.f32 1.0, %v1482
    %v1484 = vrcp.pop %v1473
    %v1485 = vmul.f32 1.0, %v1484
    %v1486 = vrcp.pop %v1474
    %v1487 = vmul.f32 1.0, %v1486
    %v1488 = vrcp.pop %v1475
    %v1489 = vmul.f32 1.0, %v1488
    %v1490 = vrcp.pop %v1476
    %v1491 = vmul.f32 1.0, %v1490
    %v1492 = vrcp.pop %v1477
    %v1493 = vmul.f32 1.0, %v1492
    %v1494 = vmul.f32 %v1395, %v1479
    %v1495 = vmul.f32 %v1397, %v1481
    %v1496 = vmul.f32 %v1438, %v1483
    %v1497 = vmul.f32 %v1440, %v1485
    %v1498 = vmul.f32 %v1399, %v1487
    %v1499 = vmul.f32 %v1401, %v1489
    %v1500 = vmul.f32 %v1442, %v1491
    %v1501 = vmul.f32 %v1444, %v1493
    %v1502 = vpack.c.bf16 %v1498, %v1494
    %v1503 = vpack.c.bf16 %v1499, %v1495
    %v1504 = vpack.c.bf16 %v1500, %v1496
    %v1505 = vpack.c.bf16 %v1501, %v1497
    %s1506 = scalar_lea.vmem [#allocation9], 256
    %v1507 = vld [vmem:[%s1506] sm:$0xf]
    %v1508 = vld [vmem:[%s1506 + $0x4] sm:$0xf]
    %v1509 = vld [vmem:[%s1506 + $0x8] sm:$0xf]
    %v1510 = vld [vmem:[%s1506 + $0xc] sm:$0xf]
    %v1511 = vld [vmem:[%s1506 + $0x10] sm:$0xf]
    %v1512 = vld [vmem:[%s1506 + $0x14] sm:$0xf]
    %v1513 = vld [vmem:[%s1506 + $0x18] sm:$0xf]
    %v1514 = vld [vmem:[%s1506 + $0x1c] sm:$0xf]
    %v1515 = vld [vmem:[%s1506 + $0x20] sm:$0xf]
    %v1516 = vld [vmem:[%s1506 + $0x24] sm:$0xf]
    %v1517 = vld [vmem:[%s1506 + $0x28] sm:$0xf]
    %v1518 = vld [vmem:[%s1506 + $0x2c] sm:$0xf]
    %v1519 = vld [vmem:[%s1506 + $0x30] sm:$0xf]
    %v1520 = vld [vmem:[%s1506 + $0x34] sm:$0xf]
    %v1521 = vld [vmem:[%s1506 + $0x38] sm:$0xf]
    %v1522 = vld [vmem:[%s1506 + $0x3c] sm:$0xf]
    %v1523 = vld [vmem:[%s1506 + $0x40] sm:$0xf]
    %v1524 = vld [vmem:[%s1506 + $0x44] sm:$0xf]
    %v1525 = vld [vmem:[%s1506 + $0x48] sm:$0xf]
    %v1526 = vld [vmem:[%s1506 + $0x4c] sm:$0xf]
    %v1527 = vld [vmem:[%s1506 + $0x50] sm:$0xf]
    %v1528 = vld [vmem:[%s1506 + $0x54] sm:$0xf]
    %v1529 = vld [vmem:[%s1506 + $0x58] sm:$0xf]
    %v1530 = vld [vmem:[%s1506 + $0x5c] sm:$0xf]
    %v1531 = vld [vmem:[%s1506 + $0x60] sm:$0xf]
    %v1532 = vld [vmem:[%s1506 + $0x64] sm:$0xf]
    %v1533 = vld [vmem:[%s1506 + $0x68] sm:$0xf]
    %v1534 = vld [vmem:[%s1506 + $0x6c] sm:$0xf]
    %v1535 = vld [vmem:[%s1506 + $0x70] sm:$0xf]
    %v1536 = vld [vmem:[%s1506 + $0x74] sm:$0xf]
    %v1537 = vld [vmem:[%s1506 + $0x78] sm:$0xf]
    %v1538 = vld [vmem:[%s1506 + $0x7c] sm:$0xf]
    %v1539 = vld [vmem:[%s1506 + $0x80] sm:$0xf]
    %v1540 = vld [vmem:[%s1506 + $0x84] sm:$0xf]
    %v1541 = vld [vmem:[%s1506 + $0x88] sm:$0xf]
    %v1542 = vld [vmem:[%s1506 + $0x8c] sm:$0xf]
    %v1543 = vld [vmem:[%s1506 + $0x90] sm:$0xf]
    %v1544 = vld [vmem:[%s1506 + $0x94] sm:$0xf]
    %v1545 = vld [vmem:[%s1506 + $0x98] sm:$0xf]
    %v1546 = vld [vmem:[%s1506 + $0x9c] sm:$0xf]
    %v1547 = vld [vmem:[%s1506 + $0xa0] sm:$0xf]
    %v1548 = vld [vmem:[%s1506 + $0xa4] sm:$0xf]
    %v1549 = vld [vmem:[%s1506 + $0xa8] sm:$0xf]
    %v1550 = vld [vmem:[%s1506 + $0xac] sm:$0xf]
    %v1551 = vld [vmem:[%s1506 + $0xb0] sm:$0xf]
    %v1552 = vld [vmem:[%s1506 + $0xb4] sm:$0xf]
    %v1553 = vld [vmem:[%s1506 + $0xb8] sm:$0xf]
    %v1554 = vld [vmem:[%s1506 + $0xbc] sm:$0xf]
    %v1555 = vld [vmem:[%s1506 + $0xc0] sm:$0xf]
    %v1556 = vld [vmem:[%s1506 + $0xc4] sm:$0xf]
    %v1557 = vld [vmem:[%s1506 + $0xc8] sm:$0xf]
    %v1558 = vld [vmem:[%s1506 + $0xcc] sm:$0xf]
    %v1559 = vld [vmem:[%s1506 + $0xd0] sm:$0xf]
    %v1560 = vld [vmem:[%s1506 + $0xd4] sm:$0xf]
    %v1561 = vld [vmem:[%s1506 + $0xd8] sm:$0xf]
    %v1562 = vld [vmem:[%s1506 + $0xdc] sm:$0xf]
    %v1563 = vld [vmem:[%s1506 + $0xe0] sm:$0xf]
    %v1564 = vld [vmem:[%s1506 + $0xe4] sm:$0xf]
    %v1565 = vld [vmem:[%s1506 + $0xe8] sm:$0xf]
    %v1566 = vld [vmem:[%s1506 + $0xec] sm:$0xf]
    %v1567 = vld [vmem:[%s1506 + $0xf0] sm:$0xf]
    %v1568 = vld [vmem:[%s1506 + $0xf4] sm:$0xf]
    %v1569 = vld [vmem:[%s1506 + $0xf8] sm:$0xf]
    %v1570 = vld [vmem:[%s1506 + $0xfc] sm:$0xf]
    %s1571 = scalar_lea.vmem [#allocation11], 1
    %v1572 = vld [vmem:[%s1571] sm:$0x1]
    %v1574 = vlaneseq
    %v1575 = vshrl.u32 %v1574, 7
    %v1576 = vsub.s32 0, %v1575
    %v1577 = vrot.slane %v1572, %v1576
    %v1643 = vunpack.c.l.b16 %v1507
    %v1644 = vunpack.c.l.b16 %v1508
    %v1645 = vunpack.c.l.b16 %v1509
    %v1646 = vunpack.c.l.b16 %v1510
    %v1647 = vunpack.c.l.b16 %v1511
    %v1648 = vunpack.c.l.b16 %v1512
    %v1649 = vunpack.c.l.b16 %v1513
    %v1650 = vunpack.c.l.b16 %v1514
    %v1651 = vunpack.c.l.b16 %v1515
    %v1652 = vunpack.c.l.b16 %v1516
    %v1653 = vunpack.c.l.b16 %v1517
    %v1654 = vunpack.c.l.b16 %v1518
    %v1655 = vunpack.c.l.b16 %v1519
    %v1656 = vunpack.c.l.b16 %v1520
    %v1657 = vunpack.c.l.b16 %v1521
    %v1658 = vunpack.c.l.b16 %v1522
    %v1659 = vunpack.c.l.b16 %v1523
    %v1660 = vunpack.c.l.b16 %v1524
    %v1661 = vunpack.c.l.b16 %v1525
    %v1662 = vunpack.c.l.b16 %v1526
    %v1663 = vunpack.c.l.b16 %v1527
    %v1664 = vunpack.c.l.b16 %v1528
    %v1665 = vunpack.c.l.b16 %v1529
    %v1666 = vunpack.c.l.b16 %v1530
    %v1667 = vunpack.c.l.b16 %v1531
    %v1668 = vunpack.c.l.b16 %v1532
    %v1669 = vunpack.c.l.b16 %v1533
    %v1670 = vunpack.c.l.b16 %v1534
    %v1671 = vunpack.c.l.b16 %v1535
    %v1672 = vunpack.c.l.b16 %v1536
    %v1673 = vunpack.c.l.b16 %v1537
    %v1674 = vunpack.c.l.b16 %v1538
    %v1675 = vunpack.c.l.b16 %v1539
    %v1676 = vunpack.c.l.b16 %v1540
    %v1677 = vunpack.c.l.b16 %v1541
    %v1678 = vunpack.c.l.b16 %v1542
    %v1679 = vunpack.c.l.b16 %v1543
    %v1680 = vunpack.c.l.b16 %v1544
    %v1681 = vunpack.c.l.b16 %v1545
    %v1682 = vunpack.c.l.b16 %v1546
    %v1683 = vunpack.c.l.b16 %v1547
    %v1684 = vunpack.c.l.b16 %v1548
    %v1685 = vunpack.c.l.b16 %v1549
    %v1686 = vunpack.c.l.b16 %v1550
    %v1687 = vunpack.c.l.b16 %v1551
    %v1688 = vunpack.c.l.b16 %v1552
    %v1689 = vunpack.c.l.b16 %v1553
    %v1690 = vunpack.c.l.b16 %v1554
    %v1691 = vunpack.c.l.b16 %v1555
    %v1692 = vunpack.c.l.b16 %v1556
    %v1693 = vunpack.c.l.b16 %v1557
    %v1694 = vunpack.c.l.b16 %v1558
    %v1695 = vunpack.c.l.b16 %v1559
    %v1696 = vunpack.c.l.b16 %v1560
    %v1697 = vunpack.c.l.b16 %v1561
    %v1698 = vunpack.c.l.b16 %v1562
    %v1699 = vunpack.c.l.b16 %v1563
    %v1700 = vunpack.c.l.b16 %v1564
    %v1701 = vunpack.c.l.b16 %v1565
    %v1702 = vunpack.c.l.b16 %v1566
    %v1703 = vunpack.c.l.b16 %v1567
    %v1704 = vunpack.c.l.b16 %v1568
    %v1705 = vunpack.c.l.b16 %v1569
    %v1706 = vunpack.c.l.b16 %v1570
    %v1707 = vpack.c.b16 %v1644, %v1643
    %v1708 = vpack.c.b16 %v1646, %v1645
    %v1709 = vpack.c.b16 %v1648, %v1647
    %v1710 = vpack.c.b16 %v1650, %v1649
    %v1711 = vpack.c.b16 %v1652, %v1651
    %v1712 = vpack.c.b16 %v1654, %v1653
    %v1713 = vpack.c.b16 %v1656, %v1655
    %v1714 = vpack.c.b16 %v1658, %v1657
    %v1715 = vpack.c.b16 %v1660, %v1659
    %v1716 = vpack.c.b16 %v1662, %v1661
    %v1717 = vpack.c.b16 %v1664, %v1663
    %v1718 = vpack.c.b16 %v1666, %v1665
    %v1719 = vpack.c.b16 %v1668, %v1667
    %v1720 = vpack.c.b16 %v1670, %v1669
    %v1721 = vpack.c.b16 %v1672, %v1671
    %v1722 = vpack.c.b16 %v1674, %v1673
    %v1723 = vpack.c.b16 %v1676, %v1675
    %v1724 = vpack.c.b16 %v1678, %v1677
    %v1725 = vpack.c.b16 %v1680, %v1679
    %v1726 = vpack.c.b16 %v1682, %v1681
    %v1727 = vpack.c.b16 %v1684, %v1683
    %v1728 = vpack.c.b16 %v1686, %v1685
    %v1729 = vpack.c.b16 %v1688, %v1687
    %v1730 = vpack.c.b16 %v1690, %v1689
    %v1731 = vpack.c.b16 %v1692, %v1691
    %v1732 = vpack.c.b16 %v1694, %v1693
    %v1733 = vpack.c.b16 %v1696, %v1695
    %v1734 = vpack.c.b16 %v1698, %v1697
    %v1735 = vpack.c.b16 %v1700, %v1699
    %v1736 = vpack.c.b16 %v1702, %v1701
    %v1737 = vpack.c.b16 %v1704, %v1703
    %v1738 = vpack.c.b16 %v1706, %v1705
    %1771 = vmatprep.subr.bf16.mxu0 0
    %1772 = vmatpush1.bf16.msra.mxu0 %v1714
    %1773 = vmatprep.subr.bf16.mxu0 0
    %1774 = vmatpush1.bf16.msra.mxu0 %v1713
    %1775 = vmatprep.subr.bf16.mxu0 0
    %1776 = vmatpush1.bf16.msra.mxu0 %v1712
    %1777 = vmatprep.subr.bf16.mxu0 0
    %1778 = vmatpush1.bf16.msra.mxu0 %v1711
    %1779 = vmatprep.subr.bf16.mxu0 0
    %1780 = vmatpush1.bf16.msra.mxu0 %v1710
    %1781 = vmatprep.subr.bf16.mxu0 0
    %1782 = vmatpush1.bf16.msra.mxu0 %v1709
    %1783 = vmatprep.subr.bf16.mxu0 0
    %1784 = vmatpush1.bf16.msra.mxu0 %v1708
    %1785 = vmatprep.subr.bf16.mxu0 0
    %1786 = vmatpush1.bf16.msra.mxu0 %v1707
    %1787 = vmatprep.subr.bf16.mxu0 0
    %1788 = vmatpush2.bf16.msra.mxu0 %v1722
    %1789 = vmatprep.subr.bf16.mxu0 0
    %1790 = vmatpush2.bf16.msra.mxu0 %v1721
    %1791 = vmatprep.subr.bf16.mxu0 0
    %1792 = vmatpush2.bf16.msra.mxu0 %v1720
    %1793 = vmatprep.subr.bf16.mxu0 0
    %1794 = vmatpush2.bf16.msra.mxu0 %v1719
    %1795 = vmatprep.subr.bf16.mxu0 0
    %1796 = vmatpush2.bf16.msra.mxu0 %v1718
    %1797 = vmatprep.subr.bf16.mxu0 0
    %1798 = vmatpush2.bf16.msra.mxu0 %v1717
    %1799 = vmatprep.subr.bf16.mxu0 0
    %1800 = vmatpush2.bf16.msra.mxu0 %v1716
    %1801 = vmatprep.subr.bf16.mxu0 0
    %1802 = vmatpush2.bf16.msra.mxu0 %v1715
    %1803 = vmatprep.mubr.bf16.mxu0 %v1503
    %1804 = vmatmul.mubr.bf16.gmra.mxu0 %v1502
    %v1805 = vpop.f32.mrf.mxu0
    %v1806 = vadd.f32 %v1577, %v1805
    %v1807 = vpop.f32.mrf.mxu0
    %v1808 = vpop.f32.mrf.mxu0
    %v1809 = vadd.f32 %v1577, %v1808
    %v1810 = vpop.f32.mrf.mxu0
    %1811 = vdwg.mxu0
    %1812 = vmatprep.subr.bf16.mxu0 0
    %1813 = vmatpush1.bf16.msra.mxu0 %v1730
    %1814 = vmatprep.subr.bf16.mxu0 0
    %1815 = vmatpush1.bf16.msra.mxu0 %v1729
    %1816 = vmatprep.subr.bf16.mxu0 0
    %1817 = vmatpush1.bf16.msra.mxu0 %v1728
    %1818 = vmatprep.subr.bf16.mxu0 0
    %1819 = vmatpush1.bf16.msra.mxu0 %v1727
    %1820 = vmatprep.subr.bf16.mxu0 0
    %1821 = vmatpush1.bf16.msra.mxu0 %v1726
    %1822 = vmatprep.subr.bf16.mxu0 0
    %1823 = vmatpush1.bf16.msra.mxu0 %v1725
    %1824 = vmatprep.subr.bf16.mxu0 0
    %1825 = vmatpush1.bf16.msra.mxu0 %v1724
    %1826 = vmatprep.subr.bf16.mxu0 0
    %1827 = vmatpush1.bf16.msra.mxu0 %v1723
    %1828 = vmatprep.subr.bf16.mxu0 0
    %1829 = vmatpush2.bf16.msra.mxu0 %v1738
    %1830 = vmatprep.subr.bf16.mxu0 0
    %1831 = vmatpush2.bf16.msra.mxu0 %v1737
    %1832 = vmatprep.subr.bf16.mxu0 0
    %1833 = vmatpush2.bf16.msra.mxu0 %v1736
    %1834 = vmatprep.subr.bf16.mxu0 0
    %1835 = vmatpush2.bf16.msra.mxu0 %v1735
    %1836 = vmatprep.subr.bf16.mxu0 0
    %1837 = vmatpush2.bf16.msra.mxu0 %v1734
    %1838 = vmatprep.subr.bf16.mxu0 0
    %1839 = vmatpush2.bf16.msra.mxu0 %v1733
    %1840 = vmatprep.subr.bf16.mxu0 0
    %1841 = vmatpush2.bf16.msra.mxu0 %v1732
    %1842 = vmatprep.subr.bf16.mxu0 0
    %1843 = vmatpush2.bf16.msra.mxu0 %v1731
    %1844 = vmatprep.mubr.bf16.mxu0 %v1505
    %1845 = vmatmul.mubr.bf16.gmra.mxu0 %v1504
    %v1846 = vpop.f32.mrf.mxu0
    %v1847 = vadd.f32 %v1806, %v1846
    %v1848 = vpop.f32.mrf.mxu0
    %v1849 = vpop.f32.mrf.mxu0
    %v1850 = vadd.f32 %v1809, %v1849
    %v1851 = vpop.f32.mrf.mxu0
    %1852 = vdwg.mxu0
    %v1853 = vadd.f32 %v1847, %v1141
    %v1854 = vadd.f32 %v1850, %v1142
    %v1855 = vmul.f32 %v1853, %v1853
    %v1856 = vmul.f32 %v1854, %v1854
    %1857 = vadd.xlane.f32.xlu0 %v1855
    %v1858 = vpop.xlane.xlu0 %1857
    %1859 = vadd.xlane.f32.xlu0 %v1856
    %v1860 = vpop.xlane.xlu0 %1859
    %v1861 = vmul.f32 %v1858, %v1125
    %v1862 = vmul.f32 %v1860, %v1125
    %s1863 = scalar_lea.vmem %s6, 1
    %v1864 = vld [vmem:[%s1863] sm:$0x1]
    %v1865 = vadd.f32 %v1861, 1e-06
    %v1866 = vadd.f32 %v1862, 1e-06
    %v1867 = vrsqrt.pop %v1865
    %v1868 = vrsqrt.pop %v1866
    %v1869 = vmul.f32 %v1853, %v1867
    %v1870 = vmul.f32 %v1854, %v1868
    %v1872 = vlaneseq
    %v1873 = vshrl.u32 %v1872, 7
    %v1874 = vsub.s32 0, %v1873
    %v1875 = vrot.slane %v1864, %v1874
    %v1877 = vmul.f32 %v1875, %v1869
    %v1878 = vmul.f32 %v1875, %v1870
    %v1879 = vpack.c.bf16 %v1878, %v1877
    %v1880 = vld [vmem:[#allocation12] sm:$0xff]
    %v1881 = vld [vmem:[#allocation12 + $0x8] sm:$0xf]
    %v1882 = vld [vmem:[#allocation12 + $0xc] sm:$0xff]
    %v1883 = vld [vmem:[#allocation12 + $0x14] sm:$0xf]
    %v1884 = vld [vmem:[#allocation12 + $0x18] sm:$0xff]
    %v1885 = vld [vmem:[#allocation12 + $0x20] sm:$0xf]
    %v1886 = vld [vmem:[#allocation12 + $0x24] sm:$0xff]
    %v1887 = vld [vmem:[#allocation12 + $0x2c] sm:$0xf]
    %v1888 = vld [vmem:[#allocation12 + $0x30] sm:$0xff]
    %v1889 = vld [vmem:[#allocation12 + $0x38] sm:$0xf]
    %v1890 = vld [vmem:[#allocation12 + $0x3c] sm:$0xff]
    %v1891 = vld [vmem:[#allocation12 + $0x44] sm:$0xf]
    %v1892 = vld [vmem:[#allocation12 + $0x48] sm:$0xff]
    %v1893 = vld [vmem:[#allocation12 + $0x50] sm:$0xf]
    %v1894 = vld [vmem:[#allocation12 + $0x54] sm:$0xff]
    %v1895 = vld [vmem:[#allocation12 + $0x5c] sm:$0xf]
    %v1896 = vld [vmem:[#allocation12 + $0x60] sm:$0xff]
    %v1897 = vld [vmem:[#allocation12 + $0x68] sm:$0xf]
    %v1898 = vld [vmem:[#allocation12 + $0x6c] sm:$0xff]
    %v1899 = vld [vmem:[#allocation12 + $0x74] sm:$0xf]
    %v1900 = vld [vmem:[#allocation12 + $0x78] sm:$0xff]
    %v1901 = vld [vmem:[#allocation12 + $0x80] sm:$0xf]
    %v1902 = vld [vmem:[#allocation12 + $0x84] sm:$0xff]
    %v1903 = vld [vmem:[#allocation12 + $0x8c] sm:$0xf]
    %v1904 = vld [vmem:[#allocation12 + $0x90] sm:$0xff]
    %v1905 = vld [vmem:[#allocation12 + $0x98] sm:$0xf]
    %v1906 = vld [vmem:[#allocation12 + $0x9c] sm:$0xff]
    %v1907 = vld [vmem:[#allocation12 + $0xa4] sm:$0xf]
    %v1908 = vld [vmem:[#allocation12 + $0xa8] sm:$0xff]
    %v1909 = vld [vmem:[#allocation12 + $0xb0] sm:$0xf]
    %v1910 = vld [vmem:[#allocation12 + $0xb4] sm:$0xff]
    %v1911 = vld [vmem:[#allocation12 + $0xbc] sm:$0xf]
    %v1912 = vld [vmem:[%s8] sm:$0x7]
    %v1914 = vlaneseq
    %v1915 = vshrl.u32 %v1914, 7
    %v1916 = vsub.s32 0, %v1915
    %v1917 = vrot.slane %v1912, %v1916
    %v1918 = vlaneseq
    %v1919 = vshrl.u32 %v1918, 7
    %v1920 = vsub.s32 1, %v1919
    %v1921 = vrot.slane %v1912, %v1920
    %v1922 = vlaneseq
    %v1923 = vshrl.u32 %v1922, 7
    %v1924 = vsub.s32 2, %v1923
    %v1925 = vrot.slane %v1912, %v1924
    %v1961 = vunpack.c.l.b16 %v1880
    %v1962 = vunpack.c.h.b16 %v1880
    %v1963 = vunpack.c.l.b16 %v1881
    %v1964 = vunpack.c.l.b16 %v1882
    %v1965 = vunpack.c.h.b16 %v1882
    %v1966 = vunpack.c.l.b16 %v1883
    %v1967 = vunpack.c.l.b16 %v1884
    %v1968 = vunpack.c.h.b16 %v1884
    %v1969 = vunpack.c.l.b16 %v1885
    %v1970 = vunpack.c.l.b16 %v1886
    %v1971 = vunpack.c.h.b16 %v1886
    %v1972 = vunpack.c.l.b16 %v1887
    %v1973 = vunpack.c.l.b16 %v1888
    %v1974 = vunpack.c.h.b16 %v1888
    %v1975 = vunpack.c.l.b16 %v1889
    %v1976 = vunpack.c.l.b16 %v1890
    %v1977 = vunpack.c.h.b16 %v1890
    %v1978 = vunpack.c.l.b16 %v1891
    %v1979 = vunpack.c.l.b16 %v1892
    %v1980 = vunpack.c.h.b16 %v1892
    %v1981 = vunpack.c.l.b16 %v1893
    %v1982 = vunpack.c.l.b16 %v1894
    %v1983 = vunpack.c.h.b16 %v1894
    %v1984 = vunpack.c.l.b16 %v1895
    %v1985 = vunpack.c.l.b16 %v1896
    %v1986 = vunpack.c.h.b16 %v1896
    %v1987 = vunpack.c.l.b16 %v1897
    %v1988 = vunpack.c.l.b16 %v1898
    %v1989 = vunpack.c.h.b16 %v1898
    %v1990 = vunpack.c.l.b16 %v1899
    %v1991 = vunpack.c.l.b16 %v1900
    %v1992 = vunpack.c.h.b16 %v1900
    %v1993 = vunpack.c.l.b16 %v1901
    %v1994 = vunpack.c.l.b16 %v1902
    %v1995 = vunpack.c.h.b16 %v1902
    %v1996 = vunpack.c.l.b16 %v1903
    %v1997 = vunpack.c.l.b16 %v1904
    %v1998 = vunpack.c.h.b16 %v1904
    %v1999 = vunpack.c.l.b16 %v1905
    %v2000 = vunpack.c.l.b16 %v1906
    %v2001 = vunpack.c.h.b16 %v1906
    %v2002 = vunpack.c.l.b16 %v1907
    %v2003 = vunpack.c.l.b16 %v1908
    %v2004 = vunpack.c.h.b16 %v1908
    %v2005 = vunpack.c.l.b16 %v1909
    %v2006 = vunpack.c.l.b16 %v1910
    %v2007 = vunpack.c.h.b16 %v1910
    %v2008 = vunpack.c.l.b16 %v1911
    %v2009 = vpack.c.b16 %v1964, %v1961
    %v2010 = vpack.c.b16 %v1965, %v1962
    %v2011 = vpack.c.b16 %v1966, %v1963
    %v2012 = vpack.c.b16 %v1970, %v1967
    %v2013 = vpack.c.b16 %v1971, %v1968
    %v2014 = vpack.c.b16 %v1972, %v1969
    %v2015 = vpack.c.b16 %v1976, %v1973
    %v2016 = vpack.c.b16 %v1977, %v1974
    %v2017 = vpack.c.b16 %v1978, %v1975
    %v2018 = vpack.c.b16 %v1982, %v1979
    %v2019 = vpack.c.b16 %v1983, %v1980
    %v2020 = vpack.c.b16 %v1984, %v1981
    %v2021 = vpack.c.b16 %v1988, %v1985
    %v2022 = vpack.c.b16 %v1989, %v1986
    %v2023 = vpack.c.b16 %v1990, %v1987
    %v2024 = vpack.c.b16 %v1994, %v1991
    %v2025 = vpack.c.b16 %v1995, %v1992
    %v2026 = vpack.c.b16 %v1996, %v1993
    %v2027 = vpack.c.b16 %v2000, %v1997
    %v2028 = vpack.c.b16 %v2001, %v1998
    %v2029 = vpack.c.b16 %v2002, %v1999
    %v2030 = vpack.c.b16 %v2006, %v2003
    %v2031 = vpack.c.b16 %v2007, %v2004
    %v2032 = vpack.c.b16 %v2008, %v2005
    %2057 = vmatprep.subr.bf16.mxu0 %v2031
    %2058 = vmatpush1.bf16.msra.mxu0 %v2030
    %2059 = vmatprep.subr.bf16.mxu0 %v2028
    %2060 = vmatpush1.bf16.msra.mxu0 %v2027
    %2061 = vmatprep.subr.bf16.mxu0 %v2025
    %2062 = vmatpush1.bf16.msra.mxu0 %v2024
    %2063 = vmatprep.subr.bf16.mxu0 %v2022
    %2064 = vmatpush1.bf16.msra.mxu0 %v2021
    %2065 = vmatprep.subr.bf16.mxu0 %v2019
    %2066 = vmatpush1.bf16.msra.mxu0 %v2018
    %2067 = vmatprep.subr.bf16.mxu0 %v2016
    %2068 = vmatpush1.bf16.msra.mxu0 %v2015
    %2069 = vmatprep.subr.bf16.mxu0 %v2013
    %2070 = vmatpush1.bf16.msra.mxu0 %v2012
    %2071 = vmatprep.subr.bf16.mxu0 %v2010
    %2072 = vmatpush1.bf16.msra.mxu0 %v2009
    %2073 = vmatprep.subr.bf16.mxu0 0
    %2074 = vmatpush2.bf16.msra.mxu0 0
    %2075 = vmatprep.subr.bf16.mxu0 0
    %2076 = vmatpush2.bf16.msra.mxu0 0
    %2077 = vmatprep.subr.bf16.mxu0 0
    %2078 = vmatpush2.bf16.msra.mxu0 0
    %2079 = vmatprep.subr.bf16.mxu0 0
    %2080 = vmatpush2.bf16.msra.mxu0 0
    %2081 = vmatprep.subr.bf16.mxu0 0
    %2082 = vmatpush2.bf16.msra.mxu0 0
    %2083 = vmatprep.subr.bf16.mxu0 0
    %2084 = vmatpush2.bf16.msra.mxu0 0
    %2085 = vmatprep.subr.bf16.mxu0 0
    %2086 = vmatpush2.bf16.msra.mxu0 0
    %2087 = vmatprep.subr.bf16.mxu0 0
    %2088 = vmatpush2.bf16.msra.mxu0 0
    %2089 = vmatprep.mubr.bf16.mxu0 0
    %2090 = vmatmul.mubr.bf16.gmra.mxu0 %v1879
    %v2091 = vpop.f32.mrf.mxu0
    %v2092 = vadd.f32 %v1917, %v2091
    %v2093 = vpop.f32.mrf.mxu0
    %v2094 = vadd.f32 %v1921, %v2093
    %v2095 = vpop.f32.mrf.mxu0
    %v2096 = vadd.f32 %v1917, %v2095
    %v2097 = vpop.f32.mrf.mxu0
    %v2098 = vadd.f32 %v1921, %v2097
    %2099 = vdwg.mxu0
    %2100 = vmatprep.subr.bf16.mxu0 0
    %2101 = vmatpush1.bf16.msra.mxu0 %v2032
    %2102 = vmatprep.subr.bf16.mxu0 0
    %2103 = vmatpush1.bf16.msra.mxu0 %v2029
    %2104 = vmatprep.subr.bf16.mxu0 0
    %2105 = vmatpush1.bf16.msra.mxu0 %v2026
    %2106 = vmatprep.subr.bf16.mxu0 0
    %2107 = vmatpush1.bf16.msra.mxu0 %v2023
    %2108 = vmatprep.subr.bf16.mxu0 0
    %2109 = vmatpush1.bf16.msra.mxu0 %v2020
    %2110 = vmatprep.subr.bf16.mxu0 0
    %2111 = vmatpush1.bf16.msra.mxu0 %v2017
    %2112 = vmatprep.subr.bf16.mxu0 0
    %2113 = vmatpush1.bf16.msra.mxu0 %v2014
    %2114 = vmatprep.subr.bf16.mxu0 0
    %2115 = vmatpush1.bf16.msra.mxu0 %v2011
    %2116 = vmatprep.subr.bf16.mxu0 0
    %2117 = vmatpush2.bf16.msra.mxu0 0
    %2118 = vmatprep.subr.bf16.mxu0 0
    %2119 = vmatpush2.bf16.msra.mxu0 0
    %2120 = vmatprep.subr.bf16.mxu0 0
    %2121 = vmatpush2.bf16.msra.mxu0 0
    %2122 = vmatprep.subr.bf16.mxu0 0
    %2123 = vmatpush2.bf16.msra.mxu0 0
    %2124 = vmatprep.subr.bf16.mxu0 0
    %2125 = vmatpush2.bf16.msra.mxu0 0
    %2126 = vmatprep.subr.bf16.mxu0 0
    %2127 = vmatpush2.bf16.msra.mxu0 0
    %2128 = vmatprep.subr.bf16.mxu0 0
    %2129 = vmatpush2.bf16.msra.mxu0 0
    %2130 = vmatprep.subr.bf16.mxu0 0
    %2131 = vmatpush2.bf16.msra.mxu0 0
    %2132 = vmatprep.mubr.bf16.mxu0 0
    %2133 = vmatmul.mubr.bf16.gmra.mxu0 %v1879
    %v2134 = vpop.f32.mrf.mxu0
    %v2135 = vadd.f32 %v1925, %v2134
    %v2136 = vpop.f32.mrf.mxu0
    %v2137 = vpop.f32.mrf.mxu0
    %v2138 = vadd.f32 %v1925, %v2137
    %v2139 = vpop.f32.mrf.mxu0
    %2140 = vdwg.mxu0
    %2141 = vst [vmem:[#allocation14] sm:$0xff] %v2092
    %2142 = vst [vmem:[#allocation14 + $0x8] sm:$0xff] %v2094
    %2143 = vst [vmem:[#allocation14 + $0x10] sm:$0xff] %v2135
    %2144 = vst [vmem:[#allocation14 + $0x18] sm:$0xff] %v2096
    %2145 = vst [vmem:[#allocation14 + $0x20] sm:$0xff] %v2098
    %2146 = vst [vmem:[#allocation14 + $0x28] sm:$0xff] %v2138
    // Predicated region
    $region110: #{causal_lm_forward.1} parent=1 // pred_check
      _
    $region111: #{causal_lm_forward.1} parent=1 // pred_check_branch
      %2148 = sbr.rel (0) target = $region113
    $region112: #{causal_lm_forward.1} parent=1 // pred_region
      %s2150 = ssub.s32 768, 768
      %2151 = vsyncadd [#allocation8], %s2150
      %s2152 = sshll.u32 [#allocation14], 4
      %s2153 = int_to_ptr.vmem [resolvable:$true] %s2152
      %2158 = dma.vmem_to_hbm [thread:$0]  %s2153, 768, %s9, [#allocation8], 384, 384, 24
    $region113: #{causal_lm_forward.1} parent=1 // pred_fallthru
      _
    // Predicated region
    $region114: #{causal_lm_forward.1} parent=1 // pred_check
      _
    $region115: #{causal_lm_forward.1} parent=1 // pred_check_branch
      %2160 = sbr.rel (0) target = $region117
    $region116: #{causal_lm_forward.1} parent=1 // pred_region
      %2161 = dma.done [#allocation8], 768
    $region117: #{causal_lm_forward.1} parent=1 // pred_fallthru
      _
    %2162 = vsyncpa [#allocation7], 1
    %2163 = vsyncpa [#allocation10], 1
    %2164 = vsyncpa [#allocation13], 1
    %2165 = vsyncpa [#allocation8], 1
  %2166 = vsyncmov [#allocation3]
  %s2167 = vpop.sfrf %2166
  %p2168 = scmp.eq.s32.totalorder %s2167, 0
  %p2169 = pneg %p2168
  %2171 = shalt.err (%p2169)
  %s2172 = scalar_lea.sflag [#allocation3], 1
  %2173 = vsyncmov %s2172
  %s2174 = vpop.sfrf %2173
  %p2175 = scmp.eq.s32.totalorder %s2174, 0
  %p2176 = pneg %p2175
  %2178 = shalt.err (%p2176)
  %s2179 = scalar_lea.sflag [#allocation3], 2
  %2180 = vsyncmov %s2179
  %s2181 = vpop.sfrf %2180
  %p2182 = scmp.eq.s32.totalorder %s2181, 0
  %p2183 = pneg %p2182
  %2185 = shalt.err (%p2183)
  %s2186 = scalar_lea.sflag [#allocation3], 3
  %2187 = vsyncmov %s2186
  %s2188 = vpop.sfrf %2187
  %p2189 = scmp.eq.s32.totalorder %s2188, 0
  %p2190 = pneg %p2189
  %2192 = shalt.err (%p2190)
  %s2193 = scalar_lea.sflag [#allocation3], 4
  %2194 = vsyncmov %s2193
  %s2195 = vpop.sfrf %2194
  %p2196 = scmp.eq.s32.totalorder %s2195, 0
  %p2197 = pneg %p2196
  %2199 = shalt.err (%p2197)
  %s2200 = scalar_lea.sflag [#allocation3], 5
  %2201 = vsyncmov %s2200
  %s2202 = vpop.sfrf %2201
  %p2203 = scmp.eq.s32.totalorder %s2202, 0
  %p2204 = pneg %p2203
  %2206 = shalt.err (%p2204)
  %s2207 = scalar_lea.sflag [#allocation3], 6
  %2208 = vsyncmov %s2207
  %s2209 = vpop.sfrf %2208
  %p2210 = scmp.eq.s32.totalorder %s2209, 0
  %p2211 = pneg %p2210
  %2213 = shalt.err (%p2211)
  %s2214 = scalar_lea.sflag [#allocation3], 7
  %2215 = vsyncmov %s2214
  %s2216 = vpop.sfrf %2215
  %p2217 = scmp.eq.s32.totalorder %s2216, 0
  %p2218 = pneg %p2217
  %2220 = shalt.err (%p2218)
  %s2221 = scalar_lea.sflag [#allocation3], 8
  %2222 = vsyncmov %s2221
  %s2223 = vpop.sfrf %2222
  %p2224 = scmp.eq.s32.totalorder %s2223, 0
  %p2225 = pneg %p2224
  %2227 = shalt.err (%p2225)
  %s2228 = scalar_lea.sflag [#allocation3], 9
  %2229 = vsyncmov %s2228
  %s2230 = vpop.sfrf %2229
  %p2231 = scmp.eq.s32.totalorder %s2230, 0
  %p2232 = pneg %p2231
  %2234 = shalt.err (%p2232)
  %s2235 = scalar_lea.sflag [#allocation3], 10
  %2236 = vsyncmov %s2235
  %s2237 = vpop.sfrf %2236
  %p2238 = scmp.eq.s32.totalorder %s2237, 0
  %p2239 = pneg %p2238
  %2241 = shalt.err (%p2239)
  %s2242 = scalar_lea.sflag [#allocation3], 11
  %2243 = vsyncmov %s2242
  %s2244 = vpop.sfrf %2243
  %p2245 = scmp.eq.s32.totalorder %s2244, 0
  %p2246 = pneg %p2245
  %2248 = shalt.err (%p2246)
  %s2249 = scalar_lea.sflag [#allocation3], 12
  %2250 = vsyncmov %s2249
  %s2251 = vpop.sfrf %2250
  %p2252 = scmp.eq.s32.totalorder %s2251, 0
  %p2253 = pneg %p2252
  %2255 = shalt.err (%p2253)
  %s2256 = scalar_lea.sflag [#allocation3], 13
  %2257 = vsyncmov %s2256
  %s2258 = vpop.sfrf %2257
  %p2259 = scmp.eq.s32.totalorder %s2258, 0
  %p2260 = pneg %p2259
  %2262 = shalt.err (%p2260)
  %s2263 = scalar_lea.sflag [#allocation3], 14
  %2264 = vsyncmov %s2263
  %s2265 = vpop.sfrf %2264
  %p2266 = scmp.eq.s32.totalorder %s2265, 0
  %p2267 = pneg %p2266
  %2269 = shalt.err (%p2267)
  %s2270 = scalar_lea.sflag [#allocation3], 15
  %2271 = vsyncmov %s2270
  %s2272 = vpop.sfrf %2271
  %p2273 = scmp.eq.s32.totalorder %s2272, 0
  %p2274 = pneg %p2273
  %2276 = shalt.err (%p2274)

</llo_original>
